<compile_context>
chip_gen: v7x
topology: tpu7x:2x2x1
jax: 0.10.0
libtpu: 0.0.40
codegen_flags: <defaults>
</compile_context>

<pallas_src>
import jax
import jax.numpy as jnp
from jax.experimental import pallas as pl
from jax.experimental.pallas import tpu as pltpu

LEAKY_SLOPE = 0.2
_TAPS = tuple((di, dj) for di in range(3) for dj in range(3))


def _leaky(v):
    # maximum(v, 0.2*v) == LeakyReLU(0.2) for all finite v (single VPU select).
    return jnp.maximum(v, LEAKY_SLOPE * v)


# ----------------------------------------------------------------------------
# Fused conv stack: all 3x3 valid-conv + LeakyReLU layers in one pallas_call.
# Grid = (batch,). Intermediate activations / im2col matrices stay in VMEM.
# ----------------------------------------------------------------------------
def conv_stack(x, conv_kparams):
    """x: (N, H, W) f32.  conv_kparams: [(wmat (Cout, 9*Cin), bias (Cout, 1)), ...]
    Returns (N, C_last, (H-2L)*(W-2L)) with positions in NCHW-flatten order."""
    n, H, W = x.shape
    nl = len(conv_kparams)
    cin = [wm.shape[1] // 9 for wm, _ in conv_kparams]      # [1, 8, 16, 32]
    cout = [wm.shape[0] for wm, _ in conv_kparams]           # [8, 16, 32, 64]
    hout = [H - 2 * (l + 1) for l in range(nl)]
    wout = [W - 2 * (l + 1) for l in range(nl)]
    # Width of the W-strided activation / im2col buffers per layer:
    # position p = h*W + w, valid lanes are p in [0, (hout-1)*W + wout).
    lw = [(hout[l] - 1) * W + wout[l] for l in range(nl)]

    def kernel(*refs):
        x_ref = refs[0]
        w_refs = [refs[1 + 2 * l] for l in range(nl)]
        b_refs = [refs[2 + 2 * l] for l in range(nl)]
        o_ref = refs[1 + 2 * nl]
        scratch = refs[2 + 2 * nl:]
        col_refs = [scratch[2 * l] for l in range(nl)]
        act_refs = [scratch[2 * l + 1] for l in range(nl - 1)]

        src = x_ref[0]                                        # (1, H*W)
        for l in range(nl):
            c, L = cin[l], lw[l]
            col = col_refs[l]
            # im2col: each of the 9 taps is ONE contiguous lane slice.
            for t, (di, dj) in enumerate(_TAPS):
                off = di * W + dj
                col[t * c:(t + 1) * c, :] = src[:, off:off + L]
            out = _leaky(
                jnp.dot(w_refs[l][...], col[...],
                        preferred_element_type=jnp.float32) + b_refs[l][...])
            if l + 1 < nl:
                act_refs[l][...] = out
                src = act_refs[l]
            else:
                # Emit valid window in PyTorch NCHW flatten order (c, h, w).
                for hh in range(hout[l]):
                    o_ref[0, :, hh * wout[l]:(hh + 1) * wout[l]] = \
                        out[:, hh * W:hh * W + wout[l]]

    in_specs = [pl.BlockSpec((1, 1, H * W), lambda b: (b, 0, 0))]
    inputs = [x.reshape(n, 1, H * W)]
    for wm, bb in conv_kparams:
        in_specs.append(pl.BlockSpec(wm.shape, lambda b: (0, 0)))
        in_specs.append(pl.BlockSpec(bb.shape, lambda b: (0, 0)))
        inputs.extend([wm, bb])

    scratch_shapes = []
    for l in range(nl):
        scratch_shapes.append(pltpu.VMEM((9 * cin[l], lw[l]), jnp.float32))
        if l + 1 < nl:
            scratch_shapes.append(pltpu.VMEM((cout[l], lw[l]), jnp.float32))

    out_feat = hout[-1] * wout[-1]
    return pl.pallas_call(
        kernel,
        out_shape=jax.ShapeDtypeStruct((n, cout[-1], out_feat), jnp.float32),
        grid=(n,),
        in_specs=in_specs,
        out_specs=pl.BlockSpec((1, cout[-1], out_feat), lambda b: (b, 0, 0)),
        scratch_shapes=scratch_shapes,
        compiler_params=pltpu.CompilerParams(
            dimension_semantics=("parallel",)),
    )(*inputs)


# ----------------------------------------------------------------------------
# Head: Linear -> LeakyReLU -> Linear directly on the (N, C, P) conv features.
# FC1 weight is pre-reshaped to (C, P, hid); the grid streams channel-tiles of
# it (double-buffered by the Pallas pipeline) into a VMEM f32 accumulator.
# ----------------------------------------------------------------------------
def _head_kernel(x_ref, w1_ref, b1_ref, w2_ref, b2_ref, o_ref, acc_ref):
    k = pl.program_id(0)

    @pl.when(k == 0)
    def _():
        acc_ref[...] = jnp.zeros_like(acc_ref)

    # Accumulate this channel-tile's contribution: sum_c x[:, c, :] @ W1[c].
    part = acc_ref[...]
    for c in range(x_ref.shape[1]):
        part = part + jnp.dot(x_ref[:, c, :], w1_ref[c],
                              preferred_element_type=jnp.float32)
    acc_ref[...] = part

    @pl.when(k == pl.num_programs(0) - 1)
    def _():
        h = _leaky(acc_ref[...] + b1_ref[...])
        o_ref[...] = (jnp.dot(h, w2_ref[...], preferred_element_type=jnp.float32)
                      + b2_ref[...]).astype(o_ref.dtype)


def mlp_head(feats, w1_3d, b1, w2, b2):
    n, C, P = feats.shape
    hid = w1_3d.shape[2]
    classes = w2.shape[1]
    # Pick the largest channel-tile whose streamed FC1 block stays ~<= 1 MiB
    # (keeps double-buffered weight DMA overlapped with the tile's matmuls).
    ct = 1
    for cand in (64, 32, 16, 8, 4, 2, 1):
        if C % cand == 0 and cand * P * hid * 4 <= (1 << 20):
            ct = cand
            break
    nk = C // ct
    # TODO(synk): storing W1 in bf16 would halve the HBM-bound weight read;
    # kept f32 to stay bit-faithful to the PyTorch f32 forward within 1e-3.
    return pl.pallas_call(
        _head_kernel,
        out_shape=jax.ShapeDtypeStruct((n, classes), jnp.float32),
        grid=(nk,),
        in_specs=[
            pl.BlockSpec((n, ct, P), lambda k: (0, k, 0)),
            pl.BlockSpec((ct, P, hid), lambda k: (k, 0, 0)),
            pl.BlockSpec((1, hid), lambda k: (0, 0)),
            pl.BlockSpec((hid, classes), lambda k: (0, 0)),
            pl.BlockSpec((1, classes), lambda k: (0, 0)),
        ],
        out_specs=pl.BlockSpec((n, classes), lambda k: (0, 0)),
        scratch_shapes=[pltpu.VMEM((n, hid), jnp.float32)],
        compiler_params=pltpu.CompilerParams(
            dimension_semantics=("arbitrary",)),
    )(feats, w1_3d, b1.reshape(1, hid), w2, b2.reshape(1, classes))


# ----------------------------------------------------------------------------
# Parameter init (deterministic, PyTorch-default-style uniform fan-in bounds),
# stored in PyTorch-equivalent form (conv HWIO, FC1 rows in NCHW flatten order).
# ----------------------------------------------------------------------------
def init_params(key, height, width, output_classes):
    feat = 64 * (height - 8) * (width - 8)
    conv_channels = [(1, 8), (8, 16), (16, 32), (32, 64)]
    keys = jax.random.split(key, len(conv_channels) + 2)

    def uniform(k, shape, fan_in):
        bound = float(fan_in) ** -0.5
        return jax.random.uniform(k, shape, jnp.float32, -bound, bound)

    conv = []
    for k, (cin, cout) in zip(keys[:4], conv_channels):
        kw, kb = jax.random.split(k)
        fan_in = cin * 3 * 3
        conv.append((uniform(kw, (3, 3, cin, cout), fan_in),
                     uniform(kb, (cout,), fan_in)))

    def linear(k, fin, fout):
        kw, kb = jax.random.split(k)
        return (uniform(kw, (fin, fout), fin), uniform(kb, (fout,), fin))

    return {
        "conv": conv,
        "fc1": linear(keys[4], feat, 256),
        "fc2": linear(keys[5], 256, output_classes),
    }


def prepare_kernel_params(params):
    """One-time host-side reshape into kernel-ready (matmul) form."""
    conv_k = []
    for w, b in params["conv"]:
        cin, cout = w.shape[2], w.shape[3]
        wm = jnp.transpose(w, (3, 0, 1, 2)).reshape(cout, 9 * cin)  # (Cout, 9*Cin)
        conv_k.append((wm, b.reshape(cout, 1)))
    w1, b1 = params["fc1"]
    feat, hid = w1.shape
    c_last = conv_k[-1][0].shape[0]                    # 64
    w1_3d = w1.reshape(c_last, feat // c_last, hid)    # NCHW rows -> (c, pos, hid)
    return {"conv": conv_k, "fc1": (w1_3d, b1), "fc2": params["fc2"]}


# ----------------------------------------------------------------------------
# Forward pass (Pallas kernels) + plain-JAX reference for validation.
# ----------------------------------------------------------------------------
def base_conv_model(x, kparams):
    # x: (N, H, W) -- PyTorch forward unsqueezes a channel dim (Cin=1).
    feats = conv_stack(x.astype(jnp.float32), kparams["conv"])   # (N, 64, (H-8)*(W-8))
    w1, b1 = kparams["fc1"]
    w2, b2 = kparams["fc2"]
    return mlp_head(feats, w1, b1, w2, b2)


def reference_model(x, params):
    h = x[..., None].astype(jnp.float32)
    for (w, b) in params["conv"]:
        h = jax.lax.conv_general_dilated(
            h, w, (1, 1), "VALID",
            dimension_numbers=("NHWC", "HWIO", "NHWC")) + b
        h = jnp.where(h >= 0, h, LEAKY_SLOPE * h)
    n = h.shape[0]
    h = jnp.transpose(h, (0, 3, 1, 2)).reshape(n, -1)   # PyTorch NCHW flatten
    w1, b1 = params["fc1"]
    w2, b2 = params["fc2"]
    h = h @ w1 + b1
    h = jnp.where(h >= 0, h, LEAKY_SLOPE * h)
    return h @ w2 + b2


if __name__ == "__main__":
    HEIGHT = WIDTH = 16
    CLASSES = 10
    BATCH = 2

    key = jax.random.PRNGKey(0)
    kx, kp = jax.random.split(key)
    params = init_params(kp, HEIGHT, WIDTH, CLASSES)
    kparams = prepare_kernel_params(params)
    x = jax.random.normal(kx, (BATCH, HEIGHT, WIDTH), jnp.float32)

    fwd = jax.jit(base_conv_model)
    out = jax.block_until_ready(fwd(x, kparams))

    ref = reference_model(x, params)
    assert out.shape == (BATCH, CLASSES), out.shape
    assert jnp.allclose(out, ref, atol=1e-3, rtol=1e-3), \
        float(jnp.max(jnp.abs(out - ref)))

    print("KERNEL_OK")
</pallas_src>

<mosaic_0001>
module attributes {stable_mosaic.version = 11 : i64} {
  func.func @kernel(%arg0: i32, %arg1: memref<1x1x256xf32, #tpu.memory_space<vmem>>, %arg2: memref<8x9xf32, #tpu.memory_space<vmem>>, %arg3: memref<8x1xf32, #tpu.memory_space<vmem>>, %arg4: memref<16x72xf32, #tpu.memory_space<vmem>>, %arg5: memref<16x1xf32, #tpu.memory_space<vmem>>, %arg6: memref<32x144xf32, #tpu.memory_space<vmem>>, %arg7: memref<32x1xf32, #tpu.memory_space<vmem>>, %arg8: memref<64x288xf32, #tpu.memory_space<vmem>>, %arg9: memref<64x1xf32, #tpu.memory_space<vmem>>, %arg10: memref<1x64x64xf32, #tpu.memory_space<vmem>>, %arg11: memref<9x222xf32, #tpu.memory_space<vmem>>, %arg12: memref<8x222xf32, #tpu.memory_space<vmem>>, %arg13: memref<72x188xf32, #tpu.memory_space<vmem>>, %arg14: memref<16x188xf32, #tpu.memory_space<vmem>>, %arg15: memref<144x154xf32, #tpu.memory_space<vmem>>, %arg16: memref<32x154xf32, #tpu.memory_space<vmem>>, %arg17: memref<288x120xf32, #tpu.memory_space<vmem>>) attributes {dimension_semantics = [#tpu.dimension_semantics<parallel>], iteration_bounds = array<i64: 2>, scalar_prefetch = 0 : i64, scratch_operands = 7 : i64, tpu.core_type = #tpu.core_type<tc>, window_params = [{transform_indices = @transform_0, window_bounds = array<i64: 1, 1, 256>}, {pipeline_mode = #tpu.pipeline_mode<synchronous>, transform_indices = @transform_1, window_bounds = array<i64: 8, 9>}, {pipeline_mode = #tpu.pipeline_mode<synchronous>, transform_indices = @transform_2, window_bounds = array<i64: 8, 1>}, {pipeline_mode = #tpu.pipeline_mode<synchronous>, transform_indices = @transform_3, window_bounds = array<i64: 16, 72>}, {pipeline_mode = #tpu.pipeline_mode<synchronous>, transform_indices = @transform_4, window_bounds = array<i64: 16, 1>}, {pipeline_mode = #tpu.pipeline_mode<synchronous>, transform_indices = @transform_5, window_bounds = array<i64: 32, 144>}, {pipeline_mode = #tpu.pipeline_mode<synchronous>, transform_indices = @transform_6, window_bounds = array<i64: 32, 1>}, {pipeline_mode = #tpu.pipeline_mode<synchronous>, transform_indices = @transform_7, window_bounds = array<i64: 64, 288>}, {pipeline_mode = #tpu.pipeline_mode<synchronous>, transform_indices = @transform_8, window_bounds = array<i64: 64, 1>}, {transform_indices = @transform_9, window_bounds = array<i64: 1, 64, 64>}]} {
    %c0 = arith.constant 0 : index
    %c0_0 = arith.constant 0 : index
    %c0_1 = arith.constant 0 : index
    %0 = vector.load %arg1[%c0, %c0_0, %c0_1] : memref<1x1x256xf32, #tpu.memory_space<vmem>>, vector<1x1x256xf32>
    %1 = vector.shape_cast %0 : vector<1x1x256xf32> to vector<1x256xf32>
    %2 = vector.extract_strided_slice %1 {offsets = [0, 0], sizes = [1, 222], strides = [1, 1]} : vector<1x256xf32> to vector<1x222xf32>
    %c0_2 = arith.constant 0 : index
    %c0_3 = arith.constant 0 : index
    %3 = vector.load %arg11[%c0_2, %c0_3] : memref<9x222xf32, #tpu.memory_space<vmem>>, vector<1x222xf32>
    tpu.vector_store %arg11[%c0_2, %c0_3], %2 {strides = array<i32>} : memref<9x222xf32, #tpu.memory_space<vmem>>, vector<1x222xf32>,
    %4 = vector.extract_strided_slice %1 {offsets = [0, 1], sizes = [1, 222], strides = [1, 1]} : vector<1x256xf32> to vector<1x222xf32>
    %c1 = arith.constant 1 : index
    %c0_4 = arith.constant 0 : index
    %5 = vector.load %arg11[%c1, %c0_4] : memref<9x222xf32, #tpu.memory_space<vmem>>, vector<1x222xf32>
    tpu.vector_store %arg11[%c1, %c0_4], %4 {strides = array<i32>} : memref<9x222xf32, #tpu.memory_space<vmem>>, vector<1x222xf32>,
    %6 = vector.extract_strided_slice %1 {offsets = [0, 2], sizes = [1, 222], strides = [1, 1]} : vector<1x256xf32> to vector<1x222xf32>
    %c2 = arith.constant 2 : index
    %c0_5 = arith.constant 0 : index
    %7 = vector.load %arg11[%c2, %c0_5] : memref<9x222xf32, #tpu.memory_space<vmem>>, vector<1x222xf32>
    tpu.vector_store %arg11[%c2, %c0_5], %6 {strides = array<i32>} : memref<9x222xf32, #tpu.memory_space<vmem>>, vector<1x222xf32>,
    %8 = vector.extract_strided_slice %1 {offsets = [0, 16], sizes = [1, 222], strides = [1, 1]} : vector<1x256xf32> to vector<1x222xf32>
    %c3 = arith.constant 3 : index
    %c0_6 = arith.constant 0 : index
    %9 = vector.load %arg11[%c3, %c0_6] : memref<9x222xf32, #tpu.memory_space<vmem>>, vector<1x222xf32>
    tpu.vector_store %arg11[%c3, %c0_6], %8 {strides = array<i32>} : memref<9x222xf32, #tpu.memory_space<vmem>>, vector<1x222xf32>,
    %10 = vector.extract_strided_slice %1 {offsets = [0, 17], sizes = [1, 222], strides = [1, 1]} : vector<1x256xf32> to vector<1x222xf32>
    %c4 = arith.constant 4 : index
    %c0_7 = arith.constant 0 : index
    %11 = vector.load %arg11[%c4, %c0_7] : memref<9x222xf32, #tpu.memory_space<vmem>>, vector<1x222xf32>
    tpu.vector_store %arg11[%c4, %c0_7], %10 {strides = array<i32>} : memref<9x222xf32, #tpu.memory_space<vmem>>, vector<1x222xf32>,
    %12 = vector.extract_strided_slice %1 {offsets = [0, 18], sizes = [1, 222], strides = [1, 1]} : vector<1x256xf32> to vector<1x222xf32>
    %c5 = arith.constant 5 : index
    %c0_8 = arith.constant 0 : index
    %13 = vector.load %arg11[%c5, %c0_8] : memref<9x222xf32, #tpu.memory_space<vmem>>, vector<1x222xf32>
    tpu.vector_store %arg11[%c5, %c0_8], %12 {strides = array<i32>} : memref<9x222xf32, #tpu.memory_space<vmem>>, vector<1x222xf32>,
    %14 = vector.extract_strided_slice %1 {offsets = [0, 32], sizes = [1, 222], strides = [1, 1]} : vector<1x256xf32> to vector<1x222xf32>
    %c6 = arith.constant 6 : index
    %c0_9 = arith.constant 0 : index
    %15 = vector.load %arg11[%c6, %c0_9] : memref<9x222xf32, #tpu.memory_space<vmem>>, vector<1x222xf32>
    tpu.vector_store %arg11[%c6, %c0_9], %14 {strides = array<i32>} : memref<9x222xf32, #tpu.memory_space<vmem>>, vector<1x222xf32>,
    %16 = vector.extract_strided_slice %1 {offsets = [0, 33], sizes = [1, 222], strides = [1, 1]} : vector<1x256xf32> to vector<1x222xf32>
    %c7 = arith.constant 7 : index
    %c0_10 = arith.constant 0 : index
    %17 = vector.load %arg11[%c7, %c0_10] : memref<9x222xf32, #tpu.memory_space<vmem>>, vector<1x222xf32>
    tpu.vector_store %arg11[%c7, %c0_10], %16 {strides = array<i32>} : memref<9x222xf32, #tpu.memory_space<vmem>>, vector<1x222xf32>,
    %18 = vector.extract_strided_slice %1 {offsets = [0, 34], sizes = [1, 222], strides = [1, 1]} : vector<1x256xf32> to vector<1x222xf32>
    %c8 = arith.constant 8 : index
    %c0_11 = arith.constant 0 : index
    %19 = vector.load %arg11[%c8, %c0_11] : memref<9x222xf32, #tpu.memory_space<vmem>>, vector<1x222xf32>
    tpu.vector_store %arg11[%c8, %c0_11], %18 {strides = array<i32>} : memref<9x222xf32, #tpu.memory_space<vmem>>, vector<1x222xf32>,
    %c0_12 = arith.constant 0 : index
    %c0_13 = arith.constant 0 : index
    %20 = vector.load %arg2[%c0_12, %c0_13] : memref<8x9xf32, #tpu.memory_space<vmem>>, vector<8x9xf32>
    %c0_14 = arith.constant 0 : index
    %c0_15 = arith.constant 0 : index
    %21 = vector.load %arg11[%c0_14, %c0_15] : memref<9x222xf32, #tpu.memory_space<vmem>>, vector<9x222xf32>
    %cst = arith.constant dense<0.000000e+00> : vector<8x222xf32>
    %22 = tpu.matmul %20, %21, %cst {dimension_numbers = #tpu.dot_dimension_numbers<[1], [0], [0], [1], [0, 0, 1, 1], [], []>} : vector<8x9xf32>, vector<9x222xf32>, vector<8x222xf32> -> vector<8x222xf32>
    %c0_16 = arith.constant 0 : index
    %c0_17 = arith.constant 0 : index
    %23 = vector.load %arg3[%c0_16, %c0_17] : memref<8x1xf32, #tpu.memory_space<vmem>>, vector<8x1xf32>
    %24 = vector.broadcast %23 : vector<8x1xf32> to vector<8x222xf32>
    %25 = arith.addf %22, %24 : vector<8x222xf32>
    %cst_18 = arith.constant 2.000000e-01 : f32
    %26 = vector.broadcast %cst_18 : f32 to vector<8x222xf32>
    %27 = arith.mulf %26, %25 : vector<8x222xf32>
    %28 = arith.maximumf %25, %27 : vector<8x222xf32>
    %c0_19 = arith.constant 0 : index
    %c0_20 = arith.constant 0 : index
    %29 = vector.load %arg12[%c0_19, %c0_20] : memref<8x222xf32, #tpu.memory_space<vmem>>, vector<8x222xf32>
    tpu.vector_store %arg12[%c0_19, %c0_20], %28 {strides = array<i32>} : memref<8x222xf32, #tpu.memory_space<vmem>>, vector<8x222xf32>,
    %c0_21 = arith.constant 0 : index
    %c0_22 = arith.constant 0 : index
    %30 = vector.load %arg12[%c0_21, %c0_22] : memref<8x222xf32, #tpu.memory_space<vmem>>, vector<8x188xf32>
    %c0_23 = arith.constant 0 : index
    %c0_24 = arith.constant 0 : index
    %31 = vector.load %arg13[%c0_23, %c0_24] : memref<72x188xf32, #tpu.memory_space<vmem>>, vector<8x188xf32>
    tpu.vector_store %arg13[%c0_23, %c0_24], %30 {strides = array<i32>} : memref<72x188xf32, #tpu.memory_space<vmem>>, vector<8x188xf32>,
    %c0_25 = arith.constant 0 : index
    %c1_26 = arith.constant 1 : index
    %32 = vector.load %arg12[%c0_25, %c1_26] : memref<8x222xf32, #tpu.memory_space<vmem>>, vector<8x188xf32>
    %c8_27 = arith.constant 8 : index
    %c0_28 = arith.constant 0 : index
    %33 = vector.load %arg13[%c8_27, %c0_28] : memref<72x188xf32, #tpu.memory_space<vmem>>, vector<8x188xf32>
    tpu.vector_store %arg13[%c8_27, %c0_28], %32 {strides = array<i32>} : memref<72x188xf32, #tpu.memory_space<vmem>>, vector<8x188xf32>,
    %c0_29 = arith.constant 0 : index
    %c2_30 = arith.constant 2 : index
    %34 = vector.load %arg12[%c0_29, %c2_30] : memref<8x222xf32, #tpu.memory_space<vmem>>, vector<8x188xf32>
    %c16 = arith.constant 16 : index
    %c0_31 = arith.constant 0 : index
    %35 = vector.load %arg13[%c16, %c0_31] : memref<72x188xf32, #tpu.memory_space<vmem>>, vector<8x188xf32>
    tpu.vector_store %arg13[%c16, %c0_31], %34 {strides = array<i32>} : memref<72x188xf32, #tpu.memory_space<vmem>>, vector<8x188xf32>,
    %c0_32 = arith.constant 0 : index
    %c16_33 = arith.constant 16 : index
    %36 = vector.load %arg12[%c0_32, %c16_33] : memref<8x222xf32, #tpu.memory_space<vmem>>, vector<8x188xf32>
    %c24 = arith.constant 24 : index
    %c0_34 = arith.constant 0 : index
    %37 = vector.load %arg13[%c24, %c0_34] : memref<72x188xf32, #tpu.memory_space<vmem>>, vector<8x188xf32>
    tpu.vector_store %arg13[%c24, %c0_34], %36 {strides = array<i32>} : memref<72x188xf32, #tpu.memory_space<vmem>>, vector<8x188xf32>,
    %c0_35 = arith.constant 0 : index
    %c17 = arith.constant 17 : index
    %38 = vector.load %arg12[%c0_35, %c17] : memref<8x222xf32, #tpu.memory_space<vmem>>, vector<8x188xf32>
    %c32 = arith.constant 32 : index
    %c0_36 = arith.constant 0 : index
    %39 = vector.load %arg13[%c32, %c0_36] : memref<72x188xf32, #tpu.memory_space<vmem>>, vector<8x188xf32>
    tpu.vector_store %arg13[%c32, %c0_36], %38 {strides = array<i32>} : memref<72x188xf32, #tpu.memory_space<vmem>>, vector<8x188xf32>,
    %c0_37 = arith.constant 0 : index
    %c18 = arith.constant 18 : index
    %40 = vector.load %arg12[%c0_37, %c18] : memref<8x222xf32, #tpu.memory_space<vmem>>, vector<8x188xf32>
    %c40 = arith.constant 40 : index
    %c0_38 = arith.constant 0 : index
    %41 = vector.load %arg13[%c40, %c0_38] : memref<72x188xf32, #tpu.memory_space<vmem>>, vector<8x188xf32>
    tpu.vector_store %arg13[%c40, %c0_38], %40 {strides = array<i32>} : memref<72x188xf32, #tpu.memory_space<vmem>>, vector<8x188xf32>,
    %c0_39 = arith.constant 0 : index
    %c32_40 = arith.constant 32 : index
    %42 = vector.load %arg12[%c0_39, %c32_40] : memref<8x222xf32, #tpu.memory_space<vmem>>, vector<8x188xf32>
    %c48 = arith.constant 48 : index
    %c0_41 = arith.constant 0 : index
    %43 = vector.load %arg13[%c48, %c0_41] : memref<72x188xf32, #tpu.memory_space<vmem>>, vector<8x188xf32>
    tpu.vector_store %arg13[%c48, %c0_41], %42 {strides = array<i32>} : memref<72x188xf32, #tpu.memory_space<vmem>>, vector<8x188xf32>,
    %c0_42 = arith.constant 0 : index
    %c33 = arith.constant 33 : index
    %44 = vector.load %arg12[%c0_42, %c33] : memref<8x222xf32, #tpu.memory_space<vmem>>, vector<8x188xf32>
    %c56 = arith.constant 56 : index
    %c0_43 = arith.constant 0 : index
    %45 = vector.load %arg13[%c56, %c0_43] : memref<72x188xf32, #tpu.memory_space<vmem>>, vector<8x188xf32>
    tpu.vector_store %arg13[%c56, %c0_43], %44 {strides = array<i32>} : memref<72x188xf32, #tpu.memory_space<vmem>>, vector<8x188xf32>,
    %c0_44 = arith.constant 0 : index
    %c34 = arith.constant 34 : index
    %46 = vector.load %arg12[%c0_44, %c34] : memref<8x222xf32, #tpu.memory_space<vmem>>, vector<8x188xf32>
    %c64 = arith.constant 64 : index
    %c0_45 = arith.constant 0 : index
    %47 = vector.load %arg13[%c64, %c0_45] : memref<72x188xf32, #tpu.memory_space<vmem>>, vector<8x188xf32>
    tpu.vector_store %arg13[%c64, %c0_45], %46 {strides = array<i32>} : memref<72x188xf32, #tpu.memory_space<vmem>>, vector<8x188xf32>,
    %c0_46 = arith.constant 0 : index
    %c0_47 = arith.constant 0 : index
    %48 = vector.load %arg4[%c0_46, %c0_47] : memref<16x72xf32, #tpu.memory_space<vmem>>, vector<16x72xf32>
    %c0_48 = arith.constant 0 : index
    %c0_49 = arith.constant 0 : index
    %49 = vector.load %arg13[%c0_48, %c0_49] : memref<72x188xf32, #tpu.memory_space<vmem>>, vector<72x188xf32>
    %cst_50 = arith.constant dense<0.000000e+00> : vector<16x188xf32>
    %50 = tpu.matmul %48, %49, %cst_50 {dimension_numbers = #tpu.dot_dimension_numbers<[1], [0], [0], [1], [0, 0, 1, 1], [], []>} : vector<16x72xf32>, vector<72x188xf32>, vector<16x188xf32> -> vector<16x188xf32>
    %c0_51 = arith.constant 0 : index
    %c0_52 = arith.constant 0 : index
    %51 = vector.load %arg5[%c0_51, %c0_52] : memref<16x1xf32, #tpu.memory_space<vmem>>, vector<16x1xf32>
    %52 = vector.broadcast %51 : vector<16x1xf32> to vector<16x188xf32>
    %53 = arith.addf %50, %52 : vector<16x188xf32>
    %cst_53 = arith.constant 2.000000e-01 : f32
    %54 = vector.broadcast %cst_53 : f32 to vector<16x188xf32>
    %55 = arith.mulf %54, %53 : vector<16x188xf32>
    %56 = arith.maximumf %53, %55 : vector<16x188xf32>
    %c0_54 = arith.constant 0 : index
    %c0_55 = arith.constant 0 : index
    %57 = vector.load %arg14[%c0_54, %c0_55] : memref<16x188xf32, #tpu.memory_space<vmem>>, vector<16x188xf32>
    tpu.vector_store %arg14[%c0_54, %c0_55], %56 {strides = array<i32>} : memref<16x188xf32, #tpu.memory_space<vmem>>, vector<16x188xf32>,
    %c0_56 = arith.constant 0 : index
    %c0_57 = arith.constant 0 : index
    %58 = vector.load %arg14[%c0_56, %c0_57] : memref<16x188xf32, #tpu.memory_space<vmem>>, vector<16x154xf32>
    %c0_58 = arith.constant 0 : index
    %c0_59 = arith.constant 0 : index
    %59 = vector.load %arg15[%c0_58, %c0_59] : memref<144x154xf32, #tpu.memory_space<vmem>>, vector<16x154xf32>
    tpu.vector_store %arg15[%c0_58, %c0_59], %58 {strides = array<i32>} : memref<144x154xf32, #tpu.memory_space<vmem>>, vector<16x154xf32>,
    %c0_60 = arith.constant 0 : index
    %c1_61 = arith.constant 1 : index
    %60 = vector.load %arg14[%c0_60, %c1_61] : memref<16x188xf32, #tpu.memory_space<vmem>>, vector<16x154xf32>
    %c16_62 = arith.constant 16 : index
    %c0_63 = arith.constant 0 : index
    %61 = vector.load %arg15[%c16_62, %c0_63] : memref<144x154xf32, #tpu.memory_space<vmem>>, vector<16x154xf32>
    tpu.vector_store %arg15[%c16_62, %c0_63], %60 {strides = array<i32>} : memref<144x154xf32, #tpu.memory_space<vmem>>, vector<16x154xf32>,
    %c0_64 = arith.constant 0 : index
    %c2_65 = arith.constant 2 : index
    %62 = vector.load %arg14[%c0_64, %c2_65] : memref<16x188xf32, #tpu.memory_space<vmem>>, vector<16x154xf32>
    %c32_66 = arith.constant 32 : index
    %c0_67 = arith.constant 0 : index
    %63 = vector.load %arg15[%c32_66, %c0_67] : memref<144x154xf32, #tpu.memory_space<vmem>>, vector<16x154xf32>
    tpu.vector_store %arg15[%c32_66, %c0_67], %62 {strides = array<i32>} : memref<144x154xf32, #tpu.memory_space<vmem>>, vector<16x154xf32>,
    %c0_68 = arith.constant 0 : index
    %c16_69 = arith.constant 16 : index
    %64 = vector.load %arg14[%c0_68, %c16_69] : memref<16x188xf32, #tpu.memory_space<vmem>>, vector<16x154xf32>
    %c48_70 = arith.constant 48 : index
    %c0_71 = arith.constant 0 : index
    %65 = vector.load %arg15[%c48_70, %c0_71] : memref<144x154xf32, #tpu.memory_space<vmem>>, vector<16x154xf32>
    tpu.vector_store %arg15[%c48_70, %c0_71], %64 {strides = array<i32>} : memref<144x154xf32, #tpu.memory_space<vmem>>, vector<16x154xf32>,
    %c0_72 = arith.constant 0 : index
    %c17_73 = arith.constant 17 : index
    %66 = vector.load %arg14[%c0_72, %c17_73] : memref<16x188xf32, #tpu.memory_space<vmem>>, vector<16x154xf32>
    %c64_74 = arith.constant 64 : index
    %c0_75 = arith.constant 0 : index
    %67 = vector.load %arg15[%c64_74, %c0_75] : memref<144x154xf32, #tpu.memory_space<vmem>>, vector<16x154xf32>
    tpu.vector_store %arg15[%c64_74, %c0_75], %66 {strides = array<i32>} : memref<144x154xf32, #tpu.memory_space<vmem>>, vector<16x154xf32>,
    %c0_76 = arith.constant 0 : index
    %c18_77 = arith.constant 18 : index
    %68 = vector.load %arg14[%c0_76, %c18_77] : memref<16x188xf32, #tpu.memory_space<vmem>>, vector<16x154xf32>
    %c80 = arith.constant 80 : index
    %c0_78 = arith.constant 0 : index
    %69 = vector.load %arg15[%c80, %c0_78] : memref<144x154xf32, #tpu.memory_space<vmem>>, vector<16x154xf32>
    tpu.vector_store %arg15[%c80, %c0_78], %68 {strides = array<i32>} : memref<144x154xf32, #tpu.memory_space<vmem>>, vector<16x154xf32>,
    %c0_79 = arith.constant 0 : index
    %c32_80 = arith.constant 32 : index
    %70 = vector.load %arg14[%c0_79, %c32_80] : memref<16x188xf32, #tpu.memory_space<vmem>>, vector<16x154xf32>
    %c96 = arith.constant 96 : index
    %c0_81 = arith.constant 0 : index
    %71 = vector.load %arg15[%c96, %c0_81] : memref<144x154xf32, #tpu.memory_space<vmem>>, vector<16x154xf32>
    tpu.vector_store %arg15[%c96, %c0_81], %70 {strides = array<i32>} : memref<144x154xf32, #tpu.memory_space<vmem>>, vector<16x154xf32>,
    %c0_82 = arith.constant 0 : index
    %c33_83 = arith.constant 33 : index
    %72 = vector.load %arg14[%c0_82, %c33_83] : memref<16x188xf32, #tpu.memory_space<vmem>>, vector<16x154xf32>
    %c112 = arith.constant 112 : index
    %c0_84 = arith.constant 0 : index
    %73 = vector.load %arg15[%c112, %c0_84] : memref<144x154xf32, #tpu.memory_space<vmem>>, vector<16x154xf32>
    tpu.vector_store %arg15[%c112, %c0_84], %72 {strides = array<i32>} : memref<144x154xf32, #tpu.memory_space<vmem>>, vector<16x154xf32>,
    %c0_85 = arith.constant 0 : index
    %c34_86 = arith.constant 34 : index
    %74 = vector.load %arg14[%c0_85, %c34_86] : memref<16x188xf32, #tpu.memory_space<vmem>>, vector<16x154xf32>
    %c128 = arith.constant 128 : index
    %c0_87 = arith.constant 0 : index
    %75 = vector.load %arg15[%c128, %c0_87] : memref<144x154xf32, #tpu.memory_space<vmem>>, vector<16x154xf32>
    tpu.vector_store %arg15[%c128, %c0_87], %74 {strides = array<i32>} : memref<144x154xf32, #tpu.memory_space<vmem>>, vector<16x154xf32>,
    %c0_88 = arith.constant 0 : index
    %c0_89 = arith.constant 0 : index
    %76 = vector.load %arg6[%c0_88, %c0_89] : memref<32x144xf32, #tpu.memory_space<vmem>>, vector<32x144xf32>
    %c0_90 = arith.constant 0 : index
    %c0_91 = arith.constant 0 : index
    %77 = vector.load %arg15[%c0_90, %c0_91] : memref<144x154xf32, #tpu.memory_space<vmem>>, vector<144x154xf32>
    %cst_92 = arith.constant dense<0.000000e+00> : vector<32x154xf32>
    %78 = tpu.matmul %76, %77, %cst_92 {dimension_numbers = #tpu.dot_dimension_numbers<[1], [0], [0], [1], [0, 0, 1, 1], [], []>} : vector<32x144xf32>, vector<144x154xf32>, vector<32x154xf32> -> vector<32x154xf32>
    %c0_93 = arith.constant 0 : index
    %c0_94 = arith.constant 0 : index
    %79 = vector.load %arg7[%c0_93, %c0_94] : memref<32x1xf32, #tpu.memory_space<vmem>>, vector<32x1xf32>
    %80 = vector.broadcast %79 : vector<32x1xf32> to vector<32x154xf32>
    %81 = arith.addf %78, %80 : vector<32x154xf32>
    %cst_95 = arith.constant 2.000000e-01 : f32
    %82 = vector.broadcast %cst_95 : f32 to vector<32x154xf32>
    %83 = arith.mulf %82, %81 : vector<32x154xf32>
    %84 = arith.maximumf %81, %83 : vector<32x154xf32>
    %c0_96 = arith.constant 0 : index
    %c0_97 = arith.constant 0 : index
    %85 = vector.load %arg16[%c0_96, %c0_97] : memref<32x154xf32, #tpu.memory_space<vmem>>, vector<32x154xf32>
    tpu.vector_store %arg16[%c0_96, %c0_97], %84 {strides = array<i32>} : memref<32x154xf32, #tpu.memory_space<vmem>>, vector<32x154xf32>,
    %c0_98 = arith.constant 0 : index
    %c0_99 = arith.constant 0 : index
    %86 = vector.load %arg16[%c0_98, %c0_99] : memref<32x154xf32, #tpu.memory_space<vmem>>, vector<32x120xf32>
    %c0_100 = arith.constant 0 : index
    %c0_101 = arith.constant 0 : index
    %87 = vector.load %arg17[%c0_100, %c0_101] : memref<288x120xf32, #tpu.memory_space<vmem>>, vector<32x120xf32>
    tpu.vector_store %arg17[%c0_100, %c0_101], %86 {strides = array<i32>} : memref<288x120xf32, #tpu.memory_space<vmem>>, vector<32x120xf32>,
    %c0_102 = arith.constant 0 : index
    %c1_103 = arith.constant 1 : index
    %88 = vector.load %arg16[%c0_102, %c1_103] : memref<32x154xf32, #tpu.memory_space<vmem>>, vector<32x120xf32>
    %c32_104 = arith.constant 32 : index
    %c0_105 = arith.constant 0 : index
    %89 = vector.load %arg17[%c32_104, %c0_105] : memref<288x120xf32, #tpu.memory_space<vmem>>, vector<32x120xf32>
    tpu.vector_store %arg17[%c32_104, %c0_105], %88 {strides = array<i32>} : memref<288x120xf32, #tpu.memory_space<vmem>>, vector<32x120xf32>,
    %c0_106 = arith.constant 0 : index
    %c2_107 = arith.constant 2 : index
    %90 = vector.load %arg16[%c0_106, %c2_107] : memref<32x154xf32, #tpu.memory_space<vmem>>, vector<32x120xf32>
    %c64_108 = arith.constant 64 : index
    %c0_109 = arith.constant 0 : index
    %91 = vector.load %arg17[%c64_108, %c0_109] : memref<288x120xf32, #tpu.memory_space<vmem>>, vector<32x120xf32>
    tpu.vector_store %arg17[%c64_108, %c0_109], %90 {strides = array<i32>} : memref<288x120xf32, #tpu.memory_space<vmem>>, vector<32x120xf32>,
    %c0_110 = arith.constant 0 : index
    %c16_111 = arith.constant 16 : index
    %92 = vector.load %arg16[%c0_110, %c16_111] : memref<32x154xf32, #tpu.memory_space<vmem>>, vector<32x120xf32>
    %c96_112 = arith.constant 96 : index
    %c0_113 = arith.constant 0 : index
    %93 = vector.load %arg17[%c96_112, %c0_113] : memref<288x120xf32, #tpu.memory_space<vmem>>, vector<32x120xf32>
    tpu.vector_store %arg17[%c96_112, %c0_113], %92 {strides = array<i32>} : memref<288x120xf32, #tpu.memory_space<vmem>>, vector<32x120xf32>,
    %c0_114 = arith.constant 0 : index
    %c17_115 = arith.constant 17 : index
    %94 = vector.load %arg16[%c0_114, %c17_115] : memref<32x154xf32, #tpu.memory_space<vmem>>, vector<32x120xf32>
    %c128_116 = arith.constant 128 : index
    %c0_117 = arith.constant 0 : index
    %95 = vector.load %arg17[%c128_116, %c0_117] : memref<288x120xf32, #tpu.memory_space<vmem>>, vector<32x120xf32>
    tpu.vector_store %arg17[%c128_116, %c0_117], %94 {strides = array<i32>} : memref<288x120xf32, #tpu.memory_space<vmem>>, vector<32x120xf32>,
    %c0_118 = arith.constant 0 : index
    %c18_119 = arith.constant 18 : index
    %96 = vector.load %arg16[%c0_118, %c18_119] : memref<32x154xf32, #tpu.memory_space<vmem>>, vector<32x120xf32>
    %c160 = arith.constant 160 : index
    %c0_120 = arith.constant 0 : index
    %97 = vector.load %arg17[%c160, %c0_120] : memref<288x120xf32, #tpu.memory_space<vmem>>, vector<32x120xf32>
    tpu.vector_store %arg17[%c160, %c0_120], %96 {strides = array<i32>} : memref<288x120xf32, #tpu.memory_space<vmem>>, vector<32x120xf32>,
    %c0_121 = arith.constant 0 : index
    %c32_122 = arith.constant 32 : index
    %98 = vector.load %arg16[%c0_121, %c32_122] : memref<32x154xf32, #tpu.memory_space<vmem>>, vector<32x120xf32>
    %c192 = arith.constant 192 : index
    %c0_123 = arith.constant 0 : index
    %99 = vector.load %arg17[%c192, %c0_123] : memref<288x120xf32, #tpu.memory_space<vmem>>, vector<32x120xf32>
    tpu.vector_store %arg17[%c192, %c0_123], %98 {strides = array<i32>} : memref<288x120xf32, #tpu.memory_space<vmem>>, vector<32x120xf32>,
    %c0_124 = arith.constant 0 : index
    %c33_125 = arith.constant 33 : index
    %100 = vector.load %arg16[%c0_124, %c33_125] : memref<32x154xf32, #tpu.memory_space<vmem>>, vector<32x120xf32>
    %c224 = arith.constant 224 : index
    %c0_126 = arith.constant 0 : index
    %101 = vector.load %arg17[%c224, %c0_126] : memref<288x120xf32, #tpu.memory_space<vmem>>, vector<32x120xf32>
    tpu.vector_store %arg17[%c224, %c0_126], %100 {strides = array<i32>} : memref<288x120xf32, #tpu.memory_space<vmem>>, vector<32x120xf32>,
    %c0_127 = arith.constant 0 : index
    %c34_128 = arith.constant 34 : index
    %102 = vector.load %arg16[%c0_127, %c34_128] : memref<32x154xf32, #tpu.memory_space<vmem>>, vector<32x120xf32>
    %c256 = arith.constant 256 : index
    %c0_129 = arith.constant 0 : index
    %103 = vector.load %arg17[%c256, %c0_129] : memref<288x120xf32, #tpu.memory_space<vmem>>, vector<32x120xf32>
    tpu.vector_store %arg17[%c256, %c0_129], %102 {strides = array<i32>} : memref<288x120xf32, #tpu.memory_space<vmem>>, vector<32x120xf32>,
    %c0_130 = arith.constant 0 : index
    %c0_131 = arith.constant 0 : index
    %104 = vector.load %arg8[%c0_130, %c0_131] : memref<64x288xf32, #tpu.memory_space<vmem>>, vector<64x288xf32>
    %c0_132 = arith.constant 0 : index
    %c0_133 = arith.constant 0 : index
    %105 = vector.load %arg17[%c0_132, %c0_133] : memref<288x120xf32, #tpu.memory_space<vmem>>, vector<288x120xf32>
    %cst_134 = arith.constant dense<0.000000e+00> : vector<64x120xf32>
    %106 = tpu.matmul %104, %105, %cst_134 {dimension_numbers = #tpu.dot_dimension_numbers<[1], [0], [0], [1], [0, 0, 1, 1], [], []>} : vector<64x288xf32>, vector<288x120xf32>, vector<64x120xf32> -> vector<64x120xf32>
    %c0_135 = arith.constant 0 : index
    %c0_136 = arith.constant 0 : index
    %107 = vector.load %arg9[%c0_135, %c0_136] : memref<64x1xf32, #tpu.memory_space<vmem>>, vector<64x1xf32>
    %108 = vector.broadcast %107 : vector<64x1xf32> to vector<64x120xf32>
    %109 = arith.addf %106, %108 : vector<64x120xf32>
    %cst_137 = arith.constant 2.000000e-01 : f32
    %110 = vector.broadcast %cst_137 : f32 to vector<64x120xf32>
    %111 = arith.mulf %110, %109 : vector<64x120xf32>
    %112 = arith.maximumf %109, %111 : vector<64x120xf32>
    %113 = vector.extract_strided_slice %112 {offsets = [0, 0], sizes = [64, 8], strides = [1, 1]} : vector<64x120xf32> to vector<64x8xf32>
    %c0_138 = arith.constant 0 : index
    %c0_139 = arith.constant 0 : index
    %c0_140 = arith.constant 0 : index
    %114 = vector.load %arg10[%c0_138, %c0_139, %c0_140] : memref<1x64x64xf32, #tpu.memory_space<vmem>>, vector<1x64x8xf32>
    %115 = vector.shape_cast %114 : vector<1x64x8xf32> to vector<64x8xf32>
    %116 = vector.shape_cast %113 : vector<64x8xf32> to vector<1x64x8xf32>
    tpu.vector_store %arg10[%c0_138, %c0_139, %c0_140], %116 {strides = array<i32>} : memref<1x64x64xf32, #tpu.memory_space<vmem>>, vector<1x64x8xf32>,
    %117 = vector.extract_strided_slice %112 {offsets = [0, 16], sizes = [64, 8], strides = [1, 1]} : vector<64x120xf32> to vector<64x8xf32>
    %c0_141 = arith.constant 0 : index
    %c0_142 = arith.constant 0 : index
    %c8_143 = arith.constant 8 : index
    %118 = vector.load %arg10[%c0_141, %c0_142, %c8_143] : memref<1x64x64xf32, #tpu.memory_space<vmem>>, vector<1x64x8xf32>
    %119 = vector.shape_cast %118 : vector<1x64x8xf32> to vector<64x8xf32>
    %120 = vector.shape_cast %117 : vector<64x8xf32> to vector<1x64x8xf32>
    tpu.vector_store %arg10[%c0_141, %c0_142, %c8_143], %120 {strides = array<i32>} : memref<1x64x64xf32, #tpu.memory_space<vmem>>, vector<1x64x8xf32>,
    %121 = vector.extract_strided_slice %112 {offsets = [0, 32], sizes = [64, 8], strides = [1, 1]} : vector<64x120xf32> to vector<64x8xf32>
    %c0_144 = arith.constant 0 : index
    %c0_145 = arith.constant 0 : index
    %c16_146 = arith.constant 16 : index
    %122 = vector.load %arg10[%c0_144, %c0_145, %c16_146] : memref<1x64x64xf32, #tpu.memory_space<vmem>>, vector<1x64x8xf32>
    %123 = vector.shape_cast %122 : vector<1x64x8xf32> to vector<64x8xf32>
    %124 = vector.shape_cast %121 : vector<64x8xf32> to vector<1x64x8xf32>
    tpu.vector_store %arg10[%c0_144, %c0_145, %c16_146], %124 {strides = array<i32>} : memref<1x64x64xf32, #tpu.memory_space<vmem>>, vector<1x64x8xf32>,
    %125 = vector.extract_strided_slice %112 {offsets = [0, 48], sizes = [64, 8], strides = [1, 1]} : vector<64x120xf32> to vector<64x8xf32>
    %c0_147 = arith.constant 0 : index
    %c0_148 = arith.constant 0 : index
    %c24_149 = arith.constant 24 : index
    %126 = vector.load %arg10[%c0_147, %c0_148, %c24_149] : memref<1x64x64xf32, #tpu.memory_space<vmem>>, vector<1x64x8xf32>
    %127 = vector.shape_cast %126 : vector<1x64x8xf32> to vector<64x8xf32>
    %128 = vector.shape_cast %125 : vector<64x8xf32> to vector<1x64x8xf32>
    tpu.vector_store %arg10[%c0_147, %c0_148, %c24_149], %128 {strides = array<i32>} : memref<1x64x64xf32, #tpu.memory_space<vmem>>, vector<1x64x8xf32>,
    %129 = vector.extract_strided_slice %112 {offsets = [0, 64], sizes = [64, 8], strides = [1, 1]} : vector<64x120xf32> to vector<64x8xf32>
    %c0_150 = arith.constant 0 : index
    %c0_151 = arith.constant 0 : index
    %c32_152 = arith.constant 32 : index
    %130 = vector.load %arg10[%c0_150, %c0_151, %c32_152] : memref<1x64x64xf32, #tpu.memory_space<vmem>>, vector<1x64x8xf32>
    %131 = vector.shape_cast %130 : vector<1x64x8xf32> to vector<64x8xf32>
    %132 = vector.shape_cast %129 : vector<64x8xf32> to vector<1x64x8xf32>
    tpu.vector_store %arg10[%c0_150, %c0_151, %c32_152], %132 {strides = array<i32>} : memref<1x64x64xf32, #tpu.memory_space<vmem>>, vector<1x64x8xf32>,
    %133 = vector.extract_strided_slice %112 {offsets = [0, 80], sizes = [64, 8], strides = [1, 1]} : vector<64x120xf32> to vector<64x8xf32>
    %c0_153 = arith.constant 0 : index
    %c0_154 = arith.constant 0 : index
    %c40_155 = arith.constant 40 : index
    %134 = vector.load %arg10[%c0_153, %c0_154, %c40_155] : memref<1x64x64xf32, #tpu.memory_space<vmem>>, vector<1x64x8xf32>
    %135 = vector.shape_cast %134 : vector<1x64x8xf32> to vector<64x8xf32>
    %136 = vector.shape_cast %133 : vector<64x8xf32> to vector<1x64x8xf32>
    tpu.vector_store %arg10[%c0_153, %c0_154, %c40_155], %136 {strides = array<i32>} : memref<1x64x64xf32, #tpu.memory_space<vmem>>, vector<1x64x8xf32>,
    %137 = vector.extract_strided_slice %112 {offsets = [0, 96], sizes = [64, 8], strides = [1, 1]} : vector<64x120xf32> to vector<64x8xf32>
    %c0_156 = arith.constant 0 : index
    %c0_157 = arith.constant 0 : index
    %c48_158 = arith.constant 48 : index
    %138 = vector.load %arg10[%c0_156, %c0_157, %c48_158] : memref<1x64x64xf32, #tpu.memory_space<vmem>>, vector<1x64x8xf32>
    %139 = vector.shape_cast %138 : vector<1x64x8xf32> to vector<64x8xf32>
    %140 = vector.shape_cast %137 : vector<64x8xf32> to vector<1x64x8xf32>
    tpu.vector_store %arg10[%c0_156, %c0_157, %c48_158], %140 {strides = array<i32>} : memref<1x64x64xf32, #tpu.memory_space<vmem>>, vector<1x64x8xf32>,
    %141 = vector.extract_strided_slice %112 {offsets = [0, 112], sizes = [64, 8], strides = [1, 1]} : vector<64x120xf32> to vector<64x8xf32>
    %c0_159 = arith.constant 0 : index
    %c0_160 = arith.constant 0 : index
    %c56_161 = arith.constant 56 : index
    %142 = vector.load %arg10[%c0_159, %c0_160, %c56_161] : memref<1x64x64xf32, #tpu.memory_space<vmem>>, vector<1x64x8xf32>
    %143 = vector.shape_cast %142 : vector<1x64x8xf32> to vector<64x8xf32>
    %144 = vector.shape_cast %141 : vector<64x8xf32> to vector<1x64x8xf32>
    tpu.vector_store %arg10[%c0_159, %c0_160, %c56_161], %144 {strides = array<i32>} : memref<1x64x64xf32, #tpu.memory_space<vmem>>, vector<1x64x8xf32>,
    return
  }
  func.func @transform_0(%arg0: i32) -> (i32, i32, i32) {
    %c0_i32 = arith.constant 0 : i32
    %c0_i32_0 = arith.constant 0 : i32
    %c0_i32_1 = arith.constant 0 : i32
    return %arg0, %c0_i32, %c0_i32_0 : i32, i32, i32
  }
  func.func @transform_1(%arg0: i32) -> (i32, i32) {
    %c0_i32 = arith.constant 0 : i32
    %c0_i32_0 = arith.constant 0 : i32
    %c0_i32_1 = arith.constant 0 : i32
    return %c0_i32, %c0_i32_0 : i32, i32
  }
  func.func @transform_2(%arg0: i32) -> (i32, i32) {
    %c0_i32 = arith.constant 0 : i32
    %c0_i32_0 = arith.constant 0 : i32
    %c0_i32_1 = arith.constant 0 : i32
    return %c0_i32, %c0_i32_0 : i32, i32
  }
  func.func @transform_3(%arg0: i32) -> (i32, i32) {
    %c0_i32 = arith.constant 0 : i32
    %c0_i32_0 = arith.constant 0 : i32
    %c0_i32_1 = arith.constant 0 : i32
    return %c0_i32, %c0_i32_0 : i32, i32
  }
  func.func @transform_4(%arg0: i32) -> (i32, i32) {
    %c0_i32 = arith.constant 0 : i32
    %c0_i32_0 = arith.constant 0 : i32
    %c0_i32_1 = arith.constant 0 : i32
    return %c0_i32, %c0_i32_0 : i32, i32
  }
  func.func @transform_5(%arg0: i32) -> (i32, i32) {
    %c0_i32 = arith.constant 0 : i32
    %c0_i32_0 = arith.constant 0 : i32
    %c0_i32_1 = arith.constant 0 : i32
    return %c0_i32, %c0_i32_0 : i32, i32
  }
  func.func @transform_6(%arg0: i32) -> (i32, i32) {
    %c0_i32 = arith.constant 0 : i32
    %c0_i32_0 = arith.constant 0 : i32
    %c0_i32_1 = arith.constant 0 : i32
    return %c0_i32, %c0_i32_0 : i32, i32
  }
  func.func @transform_7(%arg0: i32) -> (i32, i32) {
    %c0_i32 = arith.constant 0 : i32
    %c0_i32_0 = arith.constant 0 : i32
    %c0_i32_1 = arith.constant 0 : i32
    return %c0_i32, %c0_i32_0 : i32, i32
  }
  func.func @transform_8(%arg0: i32) -> (i32, i32) {
    %c0_i32 = arith.constant 0 : i32
    %c0_i32_0 = arith.constant 0 : i32
    %c0_i32_1 = arith.constant 0 : i32
    return %c0_i32, %c0_i32_0 : i32, i32
  }
  func.func @transform_9(%arg0: i32) -> (i32, i32, i32) {
    %c0_i32 = arith.constant 0 : i32
    %c0_i32_0 = arith.constant 0 : i32
    %c0_i32_1 = arith.constant 0 : i32
    return %arg0, %c0_i32, %c0_i32_0 : i32, i32, i32
  }
}

module attributes {stable_mosaic.version = 11 : i64} {
  func.func @_head_kernel(%arg0: i32, %arg1: memref<2x16x64xf32, #tpu.memory_space<vmem>>, %arg2: memref<16x64x256xf32, #tpu.memory_space<vmem>>, %arg3: memref<1x256xf32, #tpu.memory_space<vmem>>, %arg4: memref<256x10xf32, #tpu.memory_space<vmem>>, %arg5: memref<1x10xf32, #tpu.memory_space<vmem>>, %arg6: memref<2x10xf32, #tpu.memory_space<vmem>>, %arg7: memref<2x256xf32, #tpu.memory_space<vmem>>) attributes {dimension_semantics = [#tpu.dimension_semantics<arbitrary>], iteration_bounds = array<i64: 4>, scalar_prefetch = 0 : i64, scratch_operands = 1 : i64, tpu.core_type = #tpu.core_type<tc>, window_params = [{transform_indices = @transform_0, window_bounds = array<i64: 2, 16, 64>}, {transform_indices = @transform_1, window_bounds = array<i64: 16, 64, 256>}, {pipeline_mode = #tpu.pipeline_mode<synchronous>, transform_indices = @transform_2, window_bounds = array<i64: 1, 256>}, {pipeline_mode = #tpu.pipeline_mode<synchronous>, transform_indices = @transform_3, window_bounds = array<i64: 256, 10>}, {pipeline_mode = #tpu.pipeline_mode<synchronous>, transform_indices = @transform_4, window_bounds = array<i64: 1, 10>}, {pipeline_mode = #tpu.pipeline_mode<synchronous>, transform_indices = @transform_5, window_bounds = array<i64: 2, 10>}]} {
    %c0_i32 = arith.constant 0 : i32
    %0 = arith.cmpi eq, %arg0, %c0_i32 : i32
    %1 = arith.extui %0 : i1 to i32
    %c0_i32_0 = arith.constant 0 : i32
    %2 = arith.cmpi ne, %1, %c0_i32_0 : i32
    scf.if %2 {
      %cst_101 = arith.constant 0.000000e+00 : f32
      %104 = vector.broadcast %cst_101 : f32 to vector<2x256xf32>
      %c0_102 = arith.constant 0 : index
      %c0_103 = arith.constant 0 : index
      %105 = vector.load %arg7[%c0_102, %c0_103] : memref<2x256xf32, #tpu.memory_space<vmem>>, vector<2x256xf32>
      tpu.vector_store %arg7[%c0_102, %c0_103], %104 {strides = array<i32>} : memref<2x256xf32, #tpu.memory_space<vmem>>, vector<2x256xf32>,
    } else {
    }
    %c0 = arith.constant 0 : index
    %c0_1 = arith.constant 0 : index
    %3 = vector.load %arg7[%c0, %c0_1] : memref<2x256xf32, #tpu.memory_space<vmem>>, vector<2x256xf32>
    %c0_2 = arith.constant 0 : index
    %c0_3 = arith.constant 0 : index
    %c0_4 = arith.constant 0 : index
    %4 = vector.load %arg1[%c0_2, %c0_3, %c0_4] : memref<2x16x64xf32, #tpu.memory_space<vmem>>, vector<2x1x64xf32>
    %5 = vector.shape_cast %4 : vector<2x1x64xf32> to vector<2x64xf32>
    %c0_5 = arith.constant 0 : index
    %c0_6 = arith.constant 0 : index
    %c0_7 = arith.constant 0 : index
    %6 = vector.load %arg2[%c0_5, %c0_6, %c0_7] : memref<16x64x256xf32, #tpu.memory_space<vmem>>, vector<1x64x256xf32>
    %7 = vector.shape_cast %6 : vector<1x64x256xf32> to vector<64x256xf32>
    %cst = arith.constant dense<0.000000e+00> : vector<2x256xf32>
    %8 = tpu.matmul %5, %7, %cst {dimension_numbers = #tpu.dot_dimension_numbers<[1], [0], [0], [1], [0, 0, 1, 1], [], []>} : vector<2x64xf32>, vector<64x256xf32>, vector<2x256xf32> -> vector<2x256xf32>
    %9 = arith.addf %3, %8 : vector<2x256xf32>
    %c0_8 = arith.constant 0 : index
    %c1 = arith.constant 1 : index
    %c0_9 = arith.constant 0 : index
    %10 = vector.load %arg1[%c0_8, %c1, %c0_9] : memref<2x16x64xf32, #tpu.memory_space<vmem>>, vector<2x1x64xf32>
    %11 = vector.shape_cast %10 : vector<2x1x64xf32> to vector<2x64xf32>
    %c1_10 = arith.constant 1 : index
    %c0_11 = arith.constant 0 : index
    %c0_12 = arith.constant 0 : index
    %12 = vector.load %arg2[%c1_10, %c0_11, %c0_12] : memref<16x64x256xf32, #tpu.memory_space<vmem>>, vector<1x64x256xf32>
    %13 = vector.shape_cast %12 : vector<1x64x256xf32> to vector<64x256xf32>
    %cst_13 = arith.constant dense<0.000000e+00> : vector<2x256xf32>
    %14 = tpu.matmul %11, %13, %cst_13 {dimension_numbers = #tpu.dot_dimension_numbers<[1], [0], [0], [1], [0, 0, 1, 1], [], []>} : vector<2x64xf32>, vector<64x256xf32>, vector<2x256xf32> -> vector<2x256xf32>
    %15 = arith.addf %9, %14 : vector<2x256xf32>
    %c0_14 = arith.constant 0 : index
    %c2 = arith.constant 2 : index
    %c0_15 = arith.constant 0 : index
    %16 = vector.load %arg1[%c0_14, %c2, %c0_15] : memref<2x16x64xf32, #tpu.memory_space<vmem>>, vector<2x1x64xf32>
    %17 = vector.shape_cast %16 : vector<2x1x64xf32> to vector<2x64xf32>
    %c2_16 = arith.constant 2 : index
    %c0_17 = arith.constant 0 : index
    %c0_18 = arith.constant 0 : index
    %18 = vector.load %arg2[%c2_16, %c0_17, %c0_18] : memref<16x64x256xf32, #tpu.memory_space<vmem>>, vector<1x64x256xf32>
    %19 = vector.shape_cast %18 : vector<1x64x256xf32> to vector<64x256xf32>
    %cst_19 = arith.constant dense<0.000000e+00> : vector<2x256xf32>
    %20 = tpu.matmul %17, %19, %cst_19 {dimension_numbers = #tpu.dot_dimension_numbers<[1], [0], [0], [1], [0, 0, 1, 1], [], []>} : vector<2x64xf32>, vector<64x256xf32>, vector<2x256xf32> -> vector<2x256xf32>
    %21 = arith.addf %15, %20 : vector<2x256xf32>
    %c0_20 = arith.constant 0 : index
    %c3 = arith.constant 3 : index
    %c0_21 = arith.constant 0 : index
    %22 = vector.load %arg1[%c0_20, %c3, %c0_21] : memref<2x16x64xf32, #tpu.memory_space<vmem>>, vector<2x1x64xf32>
    %23 = vector.shape_cast %22 : vector<2x1x64xf32> to vector<2x64xf32>
    %c3_22 = arith.constant 3 : index
    %c0_23 = arith.constant 0 : index
    %c0_24 = arith.constant 0 : index
    %24 = vector.load %arg2[%c3_22, %c0_23, %c0_24] : memref<16x64x256xf32, #tpu.memory_space<vmem>>, vector<1x64x256xf32>
    %25 = vector.shape_cast %24 : vector<1x64x256xf32> to vector<64x256xf32>
    %cst_25 = arith.constant dense<0.000000e+00> : vector<2x256xf32>
    %26 = tpu.matmul %23, %25, %cst_25 {dimension_numbers = #tpu.dot_dimension_numbers<[1], [0], [0], [1], [0, 0, 1, 1], [], []>} : vector<2x64xf32>, vector<64x256xf32>, vector<2x256xf32> -> vector<2x256xf32>
    %27 = arith.addf %21, %26 : vector<2x256xf32>
    %c0_26 = arith.constant 0 : index
    %c4 = arith.constant 4 : index
    %c0_27 = arith.constant 0 : index
    %28 = vector.load %arg1[%c0_26, %c4, %c0_27] : memref<2x16x64xf32, #tpu.memory_space<vmem>>, vector<2x1x64xf32>
    %29 = vector.shape_cast %28 : vector<2x1x64xf32> to vector<2x64xf32>
    %c4_28 = arith.constant 4 : index
    %c0_29 = arith.constant 0 : index
    %c0_30 = arith.constant 0 : index
    %30 = vector.load %arg2[%c4_28, %c0_29, %c0_30] : memref<16x64x256xf32, #tpu.memory_space<vmem>>, vector<1x64x256xf32>
    %31 = vector.shape_cast %30 : vector<1x64x256xf32> to vector<64x256xf32>
    %cst_31 = arith.constant dense<0.000000e+00> : vector<2x256xf32>
    %32 = tpu.matmul %29, %31, %cst_31 {dimension_numbers = #tpu.dot_dimension_numbers<[1], [0], [0], [1], [0, 0, 1, 1], [], []>} : vector<2x64xf32>, vector<64x256xf32>, vector<2x256xf32> -> vector<2x256xf32>
    %33 = arith.addf %27, %32 : vector<2x256xf32>
    %c0_32 = arith.constant 0 : index
    %c5 = arith.constant 5 : index
    %c0_33 = arith.constant 0 : index
    %34 = vector.load %arg1[%c0_32, %c5, %c0_33] : memref<2x16x64xf32, #tpu.memory_space<vmem>>, vector<2x1x64xf32>
    %35 = vector.shape_cast %34 : vector<2x1x64xf32> to vector<2x64xf32>
    %c5_34 = arith.constant 5 : index
    %c0_35 = arith.constant 0 : index
    %c0_36 = arith.constant 0 : index
    %36 = vector.load %arg2[%c5_34, %c0_35, %c0_36] : memref<16x64x256xf32, #tpu.memory_space<vmem>>, vector<1x64x256xf32>
    %37 = vector.shape_cast %36 : vector<1x64x256xf32> to vector<64x256xf32>
    %cst_37 = arith.constant dense<0.000000e+00> : vector<2x256xf32>
    %38 = tpu.matmul %35, %37, %cst_37 {dimension_numbers = #tpu.dot_dimension_numbers<[1], [0], [0], [1], [0, 0, 1, 1], [], []>} : vector<2x64xf32>, vector<64x256xf32>, vector<2x256xf32> -> vector<2x256xf32>
    %39 = arith.addf %33, %38 : vector<2x256xf32>
    %c0_38 = arith.constant 0 : index
    %c6 = arith.constant 6 : index
    %c0_39 = arith.constant 0 : index
    %40 = vector.load %arg1[%c0_38, %c6, %c0_39] : memref<2x16x64xf32, #tpu.memory_space<vmem>>, vector<2x1x64xf32>
    %41 = vector.shape_cast %40 : vector<2x1x64xf32> to vector<2x64xf32>
    %c6_40 = arith.constant 6 : index
    %c0_41 = arith.constant 0 : index
    %c0_42 = arith.constant 0 : index
    %42 = vector.load %arg2[%c6_40, %c0_41, %c0_42] : memref<16x64x256xf32, #tpu.memory_space<vmem>>, vector<1x64x256xf32>
    %43 = vector.shape_cast %42 : vector<1x64x256xf32> to vector<64x256xf32>
    %cst_43 = arith.constant dense<0.000000e+00> : vector<2x256xf32>
    %44 = tpu.matmul %41, %43, %cst_43 {dimension_numbers = #tpu.dot_dimension_numbers<[1], [0], [0], [1], [0, 0, 1, 1], [], []>} : vector<2x64xf32>, vector<64x256xf32>, vector<2x256xf32> -> vector<2x256xf32>
    %45 = arith.addf %39, %44 : vector<2x256xf32>
    %c0_44 = arith.constant 0 : index
    %c7 = arith.constant 7 : index
    %c0_45 = arith.constant 0 : index
    %46 = vector.load %arg1[%c0_44, %c7, %c0_45] : memref<2x16x64xf32, #tpu.memory_space<vmem>>, vector<2x1x64xf32>
    %47 = vector.shape_cast %46 : vector<2x1x64xf32> to vector<2x64xf32>
    %c7_46 = arith.constant 7 : index
    %c0_47 = arith.constant 0 : index
    %c0_48 = arith.constant 0 : index
    %48 = vector.load %arg2[%c7_46, %c0_47, %c0_48] : memref<16x64x256xf32, #tpu.memory_space<vmem>>, vector<1x64x256xf32>
    %49 = vector.shape_cast %48 : vector<1x64x256xf32> to vector<64x256xf32>
    %cst_49 = arith.constant dense<0.000000e+00> : vector<2x256xf32>
    %50 = tpu.matmul %47, %49, %cst_49 {dimension_numbers = #tpu.dot_dimension_numbers<[1], [0], [0], [1], [0, 0, 1, 1], [], []>} : vector<2x64xf32>, vector<64x256xf32>, vector<2x256xf32> -> vector<2x256xf32>
    %51 = arith.addf %45, %50 : vector<2x256xf32>
    %c0_50 = arith.constant 0 : index
    %c8 = arith.constant 8 : index
    %c0_51 = arith.constant 0 : index
    %52 = vector.load %arg1[%c0_50, %c8, %c0_51] : memref<2x16x64xf32, #tpu.memory_space<vmem>>, vector<2x1x64xf32>
    %53 = vector.shape_cast %52 : vector<2x1x64xf32> to vector<2x64xf32>
    %c8_52 = arith.constant 8 : index
    %c0_53 = arith.constant 0 : index
    %c0_54 = arith.constant 0 : index
    %54 = vector.load %arg2[%c8_52, %c0_53, %c0_54] : memref<16x64x256xf32, #tpu.memory_space<vmem>>, vector<1x64x256xf32>
    %55 = vector.shape_cast %54 : vector<1x64x256xf32> to vector<64x256xf32>
    %cst_55 = arith.constant dense<0.000000e+00> : vector<2x256xf32>
    %56 = tpu.matmul %53, %55, %cst_55 {dimension_numbers = #tpu.dot_dimension_numbers<[1], [0], [0], [1], [0, 0, 1, 1], [], []>} : vector<2x64xf32>, vector<64x256xf32>, vector<2x256xf32> -> vector<2x256xf32>
    %57 = arith.addf %51, %56 : vector<2x256xf32>
    %c0_56 = arith.constant 0 : index
    %c9 = arith.constant 9 : index
    %c0_57 = arith.constant 0 : index
    %58 = vector.load %arg1[%c0_56, %c9, %c0_57] : memref<2x16x64xf32, #tpu.memory_space<vmem>>, vector<2x1x64xf32>
    %59 = vector.shape_cast %58 : vector<2x1x64xf32> to vector<2x64xf32>
    %c9_58 = arith.constant 9 : index
    %c0_59 = arith.constant 0 : index
    %c0_60 = arith.constant 0 : index
    %60 = vector.load %arg2[%c9_58, %c0_59, %c0_60] : memref<16x64x256xf32, #tpu.memory_space<vmem>>, vector<1x64x256xf32>
    %61 = vector.shape_cast %60 : vector<1x64x256xf32> to vector<64x256xf32>
    %cst_61 = arith.constant dense<0.000000e+00> : vector<2x256xf32>
    %62 = tpu.matmul %59, %61, %cst_61 {dimension_numbers = #tpu.dot_dimension_numbers<[1], [0], [0], [1], [0, 0, 1, 1], [], []>} : vector<2x64xf32>, vector<64x256xf32>, vector<2x256xf32> -> vector<2x256xf32>
    %63 = arith.addf %57, %62 : vector<2x256xf32>
    %c0_62 = arith.constant 0 : index
    %c10 = arith.constant 10 : index
    %c0_63 = arith.constant 0 : index
    %64 = vector.load %arg1[%c0_62, %c10, %c0_63] : memref<2x16x64xf32, #tpu.memory_space<vmem>>, vector<2x1x64xf32>
    %65 = vector.shape_cast %64 : vector<2x1x64xf32> to vector<2x64xf32>
    %c10_64 = arith.constant 10 : index
    %c0_65 = arith.constant 0 : index
    %c0_66 = arith.constant 0 : index
    %66 = vector.load %arg2[%c10_64, %c0_65, %c0_66] : memref<16x64x256xf32, #tpu.memory_space<vmem>>, vector<1x64x256xf32>
    %67 = vector.shape_cast %66 : vector<1x64x256xf32> to vector<64x256xf32>
    %cst_67 = arith.constant dense<0.000000e+00> : vector<2x256xf32>
    %68 = tpu.matmul %65, %67, %cst_67 {dimension_numbers = #tpu.dot_dimension_numbers<[1], [0], [0], [1], [0, 0, 1, 1], [], []>} : vector<2x64xf32>, vector<64x256xf32>, vector<2x256xf32> -> vector<2x256xf32>
    %69 = arith.addf %63, %68 : vector<2x256xf32>
    %c0_68 = arith.constant 0 : index
    %c11 = arith.constant 11 : index
    %c0_69 = arith.constant 0 : index
    %70 = vector.load %arg1[%c0_68, %c11, %c0_69] : memref<2x16x64xf32, #tpu.memory_space<vmem>>, vector<2x1x64xf32>
    %71 = vector.shape_cast %70 : vector<2x1x64xf32> to vector<2x64xf32>
    %c11_70 = arith.constant 11 : index
    %c0_71 = arith.constant 0 : index
    %c0_72 = arith.constant 0 : index
    %72 = vector.load %arg2[%c11_70, %c0_71, %c0_72] : memref<16x64x256xf32, #tpu.memory_space<vmem>>, vector<1x64x256xf32>
    %73 = vector.shape_cast %72 : vector<1x64x256xf32> to vector<64x256xf32>
    %cst_73 = arith.constant dense<0.000000e+00> : vector<2x256xf32>
    %74 = tpu.matmul %71, %73, %cst_73 {dimension_numbers = #tpu.dot_dimension_numbers<[1], [0], [0], [1], [0, 0, 1, 1], [], []>} : vector<2x64xf32>, vector<64x256xf32>, vector<2x256xf32> -> vector<2x256xf32>
    %75 = arith.addf %69, %74 : vector<2x256xf32>
    %c0_74 = arith.constant 0 : index
    %c12 = arith.constant 12 : index
    %c0_75 = arith.constant 0 : index
    %76 = vector.load %arg1[%c0_74, %c12, %c0_75] : memref<2x16x64xf32, #tpu.memory_space<vmem>>, vector<2x1x64xf32>
    %77 = vector.shape_cast %76 : vector<2x1x64xf32> to vector<2x64xf32>
    %c12_76 = arith.constant 12 : index
    %c0_77 = arith.constant 0 : index
    %c0_78 = arith.constant 0 : index
    %78 = vector.load %arg2[%c12_76, %c0_77, %c0_78] : memref<16x64x256xf32, #tpu.memory_space<vmem>>, vector<1x64x256xf32>
    %79 = vector.shape_cast %78 : vector<1x64x256xf32> to vector<64x256xf32>
    %cst_79 = arith.constant dense<0.000000e+00> : vector<2x256xf32>
    %80 = tpu.matmul %77, %79, %cst_79 {dimension_numbers = #tpu.dot_dimension_numbers<[1], [0], [0], [1], [0, 0, 1, 1], [], []>} : vector<2x64xf32>, vector<64x256xf32>, vector<2x256xf32> -> vector<2x256xf32>
    %81 = arith.addf %75, %80 : vector<2x256xf32>
    %c0_80 = arith.constant 0 : index
    %c13 = arith.constant 13 : index
    %c0_81 = arith.constant 0 : index
    %82 = vector.load %arg1[%c0_80, %c13, %c0_81] : memref<2x16x64xf32, #tpu.memory_space<vmem>>, vector<2x1x64xf32>
    %83 = vector.shape_cast %82 : vector<2x1x64xf32> to vector<2x64xf32>
    %c13_82 = arith.constant 13 : index
    %c0_83 = arith.constant 0 : index
    %c0_84 = arith.constant 0 : index
    %84 = vector.load %arg2[%c13_82, %c0_83, %c0_84] : memref<16x64x256xf32, #tpu.memory_space<vmem>>, vector<1x64x256xf32>
    %85 = vector.shape_cast %84 : vector<1x64x256xf32> to vector<64x256xf32>
    %cst_85 = arith.constant dense<0.000000e+00> : vector<2x256xf32>
    %86 = tpu.matmul %83, %85, %cst_85 {dimension_numbers = #tpu.dot_dimension_numbers<[1], [0], [0], [1], [0, 0, 1, 1], [], []>} : vector<2x64xf32>, vector<64x256xf32>, vector<2x256xf32> -> vector<2x256xf32>
    %87 = arith.addf %81, %86 : vector<2x256xf32>
    %c0_86 = arith.constant 0 : index
    %c14 = arith.constant 14 : index
    %c0_87 = arith.constant 0 : index
    %88 = vector.load %arg1[%c0_86, %c14, %c0_87] : memref<2x16x64xf32, #tpu.memory_space<vmem>>, vector<2x1x64xf32>
    %89 = vector.shape_cast %88 : vector<2x1x64xf32> to vector<2x64xf32>
    %c14_88 = arith.constant 14 : index
    %c0_89 = arith.constant 0 : index
    %c0_90 = arith.constant 0 : index
    %90 = vector.load %arg2[%c14_88, %c0_89, %c0_90] : memref<16x64x256xf32, #tpu.memory_space<vmem>>, vector<1x64x256xf32>
    %91 = vector.shape_cast %90 : vector<1x64x256xf32> to vector<64x256xf32>
    %cst_91 = arith.constant dense<0.000000e+00> : vector<2x256xf32>
    %92 = tpu.matmul %89, %91, %cst_91 {dimension_numbers = #tpu.dot_dimension_numbers<[1], [0], [0], [1], [0, 0, 1, 1], [], []>} : vector<2x64xf32>, vector<64x256xf32>, vector<2x256xf32> -> vector<2x256xf32>
    %93 = arith.addf %87, %92 : vector<2x256xf32>
    %c0_92 = arith.constant 0 : index
    %c15 = arith.constant 15 : index
    %c0_93 = arith.constant 0 : index
    %94 = vector.load %arg1[%c0_92, %c15, %c0_93] : memref<2x16x64xf32, #tpu.memory_space<vmem>>, vector<2x1x64xf32>
    %95 = vector.shape_cast %94 : vector<2x1x64xf32> to vector<2x64xf32>
    %c15_94 = arith.constant 15 : index
    %c0_95 = arith.constant 0 : index
    %c0_96 = arith.constant 0 : index
    %96 = vector.load %arg2[%c15_94, %c0_95, %c0_96] : memref<16x64x256xf32, #tpu.memory_space<vmem>>, vector<1x64x256xf32>
    %97 = vector.shape_cast %96 : vector<1x64x256xf32> to vector<64x256xf32>
    %cst_97 = arith.constant dense<0.000000e+00> : vector<2x256xf32>
    %98 = tpu.matmul %95, %97, %cst_97 {dimension_numbers = #tpu.dot_dimension_numbers<[1], [0], [0], [1], [0, 0, 1, 1], [], []>} : vector<2x64xf32>, vector<64x256xf32>, vector<2x256xf32> -> vector<2x256xf32>
    %99 = arith.addf %93, %98 : vector<2x256xf32>
    %c0_98 = arith.constant 0 : index
    %c0_99 = arith.constant 0 : index
    %100 = vector.load %arg7[%c0_98, %c0_99] : memref<2x256xf32, #tpu.memory_space<vmem>>, vector<2x256xf32>
    tpu.vector_store %arg7[%c0_98, %c0_99], %99 {strides = array<i32>} : memref<2x256xf32, #tpu.memory_space<vmem>>, vector<2x256xf32>,
    %c3_i32 = arith.constant 3 : i32
    %101 = arith.cmpi eq, %arg0, %c3_i32 : i32
    %102 = arith.extui %101 : i1 to i32
    %c0_i32_100 = arith.constant 0 : i32
    %103 = arith.cmpi ne, %102, %c0_i32_100 : i32
    scf.if %103 {
      %c0_101 = arith.constant 0 : index
      %c0_102 = arith.constant 0 : index
      %104 = vector.load %arg7[%c0_101, %c0_102] : memref<2x256xf32, #tpu.memory_space<vmem>>, vector<2x256xf32>
      %c0_103 = arith.constant 0 : index
      %c0_104 = arith.constant 0 : index
      %105 = vector.load %arg3[%c0_103, %c0_104] : memref<1x256xf32, #tpu.memory_space<vmem>>, vector<1x256xf32>
      %106 = vector.broadcast %105 : vector<1x256xf32> to vector<2x256xf32>
      %107 = arith.addf %104, %106 : vector<2x256xf32>
      %cst_105 = arith.constant 2.000000e-01 : f32
      %108 = vector.broadcast %cst_105 : f32 to vector<2x256xf32>
      %109 = arith.mulf %108, %107 : vector<2x256xf32>
      %110 = arith.maximumf %107, %109 : vector<2x256xf32>
      %c0_106 = arith.constant 0 : index
      %c0_107 = arith.constant 0 : index
      %111 = vector.load %arg4[%c0_106, %c0_107] : memref<256x10xf32, #tpu.memory_space<vmem>>, vector<256x10xf32>
      %cst_108 = arith.constant dense<0.000000e+00> : vector<2x10xf32>
      %112 = tpu.matmul %110, %111, %cst_108 {dimension_numbers = #tpu.dot_dimension_numbers<[1], [0], [0], [1], [0, 0, 1, 1], [], []>} : vector<2x256xf32>, vector<256x10xf32>, vector<2x10xf32> -> vector<2x10xf32>
      %c0_109 = arith.constant 0 : index
      %c0_110 = arith.constant 0 : index
      %113 = vector.load %arg5[%c0_109, %c0_110] : memref<1x10xf32, #tpu.memory_space<vmem>>, vector<1x10xf32>
      %114 = vector.broadcast %113 : vector<1x10xf32> to vector<2x10xf32>
      %115 = arith.addf %112, %114 : vector<2x10xf32>
      %c0_111 = arith.constant 0 : index
      %c0_112 = arith.constant 0 : index
      %116 = vector.load %arg6[%c0_111, %c0_112] : memref<2x10xf32, #tpu.memory_space<vmem>>, vector<2x10xf32>
      tpu.vector_store %arg6[%c0_111, %c0_112], %115 {strides = array<i32>} : memref<2x10xf32, #tpu.memory_space<vmem>>, vector<2x10xf32>,
    } else {
    }
    return
  }
  func.func @transform_0(%arg0: i32) -> (i32, i32, i32) {
    %c0_i32 = arith.constant 0 : i32
    %c0_i32_0 = arith.constant 0 : i32
    %c0_i32_1 = arith.constant 0 : i32
    return %c0_i32, %arg0, %c0_i32_0 : i32, i32, i32
  }
  func.func @transform_1(%arg0: i32) -> (i32, i32, i32) {
    %c0_i32 = arith.constant 0 : i32
    %c0_i32_0 = arith.constant 0 : i32
    %c0_i32_1 = arith.constant 0 : i32
    return %arg0, %c0_i32, %c0_i32_0 : i32, i32, i32
  }
  func.func @transform_2(%arg0: i32) -> (i32, i32) {
    %c0_i32 = arith.constant 0 : i32
    %c0_i32_0 = arith.constant 0 : i32
    %c0_i32_1 = arith.constant 0 : i32
    return %c0_i32, %c0_i32_0 : i32, i32
  }
  func.func @transform_3(%arg0: i32) -> (i32, i32) {
    %c0_i32 = arith.constant 0 : i32
    %c0_i32_0 = arith.constant 0 : i32
    %c0_i32_1 = arith.constant 0 : i32
    return %c0_i32, %c0_i32_0 : i32, i32
  }
  func.func @transform_4(%arg0: i32) -> (i32, i32) {
    %c0_i32 = arith.constant 0 : i32
    %c0_i32_0 = arith.constant 0 : i32
    %c0_i32_1 = arith.constant 0 : i32
    return %c0_i32, %c0_i32_0 : i32, i32
  }
  func.func @transform_5(%arg0: i32) -> (i32, i32) {
    %c0_i32 = arith.constant 0 : i32
    %c0_i32_0 = arith.constant 0 : i32
    %c0_i32_1 = arith.constant 0 : i32
    return %c0_i32, %c0_i32_0 : i32, i32
  }
}

</mosaic_0001>

<llo_original>
// kernel: base_conv_model.2
$region0: #{base_conv_model.2}
  #allocation0 [shape = 'u32[]', space=smem, size = 0x4, offset = 0x4, fixed_abs, tag = 'smem constant byte address 0x4 - core index']
  #allocation1 [shape = 'u32[144,128]{1,0:T(1,128)}', space=vmem, size = 0x12000, scoped, tag = 'internal scratch']
  #allocation2 [shape = 'f32[9,222]{1,0:T(8,128)}', space=vmem, size = 0x4000, scoped, tag = 'scratch operand']
  #allocation3 [shape = 'f32[8,222]{1,0:T(8,128)}', space=vmem, size = 0x2000, scoped, tag = 'scratch operand']
  #allocation4 [shape = 'f32[72,188]{1,0:T(8,128)}', space=vmem, size = 0x12000, scoped, tag = 'scratch operand']
  #allocation5 [shape = 'f32[16,188]{1,0:T(8,128)}', space=vmem, size = 0x4000, scoped, tag = 'scratch operand']
  #allocation6 [shape = 'f32[144,154]{1,0:T(8,128)}', space=vmem, size = 0x24000, scoped, tag = 'scratch operand']
  #allocation7 [shape = 'f32[32,154]{1,0:T(8,128)}', space=vmem, size = 0x8000, scoped, tag = 'scratch operand']
  #allocation8 [shape = 'f32[288,120]{1,0:T(8,128)}', space=vmem, size = 0x24000, scoped, tag = 'scratch operand']
  %s0 = inlined_call_operand.vmem [shape: f32[2,1,256], index: 0, kind: input, shape index: {}]
  %s1 = inlined_call_operand.hbm [shape: f32[8,9], index: 1, kind: input, shape index: {}]
  %s2 = inlined_call_operand.vmem [shape: f32[8,1], index: 2, kind: input, shape index: {}]
  %s3 = inlined_call_operand.hbm [shape: f32[16,72], index: 3, kind: input, shape index: {}]
  %s4 = inlined_call_operand.vmem [shape: f32[16,1], index: 4, kind: input, shape index: {}]
  %s5 = inlined_call_operand.hbm [shape: f32[32,144], index: 5, kind: input, shape index: {}]
  %s6 = inlined_call_operand.vmem [shape: f32[32,1], index: 6, kind: input, shape index: {}]
  %s7 = inlined_call_operand.hbm [shape: f32[64,288], index: 7, kind: input, shape index: {}]
  %s8 = inlined_call_operand.vmem [shape: f32[64,1], index: 8, kind: input, shape index: {}]
  %s9 = inlined_call_operand.vmem [shape: f32[2,64,64], index: 9, kind: output, shape index: {}]
  %s10 = sld [smem:[#allocation0]]
  $region85: #{base_conv_model.2} parent=0
    _
  %s12 = ssub.s32 1, %s10
  %s13 = scalar_select 0, %s12, %s10
  $region1: #{base_conv_model.2} parent=0
    #allocation9 [shape = 'u8[4096]{0}', space=vmem, size = 0x1000, scoped, tag = 'input window, operand 1, single buffered']
    #allocation10 [shape = 's32[2]{0}', space=sflag, size = 0x8, scoped, tag = 'scoped memory for base_conv_model.2']
    #allocation11 [shape = 'u8[8192]{0}', space=vmem, size = 0x2000, scoped, tag = 'input window, operand 3, single buffered']
    #allocation12 [shape = 's32[1]{0}', space=sflag, size = 0x4, scoped, tag = 'scoped memory for base_conv_model.2']
    #allocation13 [shape = 'u8[32768]{0}', space=vmem, size = 0x8000, scoped, tag = 'input window, operand 5, single buffered']
    #allocation14 [shape = 'u8[98304]{0}', space=vmem, size = 0x18000, scoped, tag = 'input window, operand 7, single buffered']
    #allocation15 [shape = 's32[1]{0}', space=sflag, size = 0x4, scoped, tag = 'scoped memory for base_conv_model.2']
    %14 = vsyncpa [#allocation10], 0
    %15 = vsyncpa [#allocation12], 0
    %16 = vsyncpa [#allocation15], 0
    loop: start=0, step=1, limit=4
    $region2: #{base_conv_model.2} parent=1 // loop_pre_header
      _
    $region3: #{base_conv_model.2} parent=1 // loop_header
      %s18 = sphi 0, %s22
      %p19 = scmp.ge.s32.totalorder %s18, 4
      %s28 = sphi 0, %s30
      %s31 = sphi 0, %s28
      %s32 = sphi 0, %s31
      %s48 = sphi 0, %s32
      %s52 = sphi 0, %s52
      %s54 = sphi 0, %s52
      %s55 = sphi 0, %s54
      %s69 = sphi 0, %s55
      %s73 = sphi 0, %s73
      %s75 = sphi 0, %s73
      %s76 = sphi 0, %s75
      %s90 = sphi 0, %s76
      %s94 = sphi 0, %s94
      %s96 = sphi 0, %s94
      %s97 = sphi 0, %s96
      %s111 = sphi 0, %s97
      %s115 = sphi 0, %s115
      %s117 = sphi 0, %s115
      %s118 = sphi 0, %s117
      %s132 = sphi 0, %s118
      %s136 = sphi 0, %s136
      %s138 = sphi 0, %s136
      %s139 = sphi 0, %s138
      %s153 = sphi 0, %s139
      %s157 = sphi 0, %s157
      %s159 = sphi 0, %s157
      %s160 = sphi 0, %s159
      %s174 = sphi 0, %s160
      %s178 = sphi 0, %s178
      %s180 = sphi 0, %s178
      %s181 = sphi 0, %s180
      %s195 = sphi 0, %s181
      %s199 = sphi 0, %s199
      %s201 = sphi 0, %s199
      %s202 = sphi 0, %s201
      %s216 = sphi 0, %s202
      %s222 = sphi 0, %s224
      %s225 = sphi 0, %s222
      %s226 = sphi 0, %s225
      %s242 = sphi 0, %s226
    $region4: #{base_conv_model.2} parent=1 // loop_header_branch
      %21 = sbr.rel (%p19) target = $region8
    $region5: #{base_conv_model.2} parent=1 // loop_body
      %s23 = ssub.s32 %s18, 1
      %s24 = ssub.s32 %s18, 2
      %s25 = sadd.s32 %s18, 1
      %s26 = ssub.s32 %s18, %s25
      %p27 = scmp.eq.s32.totalorder %s26, 0
      %s29 = sadd.s32 %s28, 1
      %s30 = scalar_select %p27, %s28, %s29
      %p33 = pneg %p27
      %p34 = scmp.eq.s32.totalorder %s18, 1
      %p35 = por %p33, %p34
      %p36 = scmp.ne.s32.totalorder %s28, %s31
      %p37 = scmp.eq.s32.totalorder %s18, 0
      %p38 = por %p36, %p37
      %p39 = scmp.ne.s32.totalorder %s28, %s31
      %p40 = scmp.eq.s32.totalorder %s23, 1
      %p41 = por %p39, %p40
      %p42 = scmp.ne.s32.totalorder %s31, %s32
      %p43 = scmp.eq.s32.totalorder %s23, 0
      %p44 = por %p42, %p43
      %p45 = scmp.ne.s32.totalorder %s31, %s32
      %p46 = scmp.eq.s32.totalorder %s24, 1
      %p47 = por %p45, %p46
      %p49 = scmp.ne.s32.totalorder %s32, %s48
      %p50 = scmp.eq.s32.totalorder %s24, 0
      %p51 = por %p49, %p50
      %s53 = sadd.s32 %s52, 1
      %p56 = scmp.eq.s32.totalorder %s18, 1
      %p57 = scmp.ne.s32.totalorder %s52, %s54
      %p58 = scmp.eq.s32.totalorder %s18, 0
      %p59 = por %p57, %p58
      %p60 = scmp.ne.s32.totalorder %s52, %s54
      %p61 = scmp.eq.s32.totalorder %s23, 1
      %p62 = por %p60, %p61
      %p63 = scmp.ne.s32.totalorder %s54, %s55
      %p64 = scmp.eq.s32.totalorder %s23, 0
      %p65 = por %p63, %p64
      %p66 = scmp.ne.s32.totalorder %s54, %s55
      %p67 = scmp.eq.s32.totalorder %s24, 1
      %p68 = por %p66, %p67
      %p70 = scmp.ne.s32.totalorder %s55, %s69
      %p71 = scmp.eq.s32.totalorder %s24, 0
      %p72 = por %p70, %p71
      %s74 = sadd.s32 %s73, 1
      %p77 = scmp.eq.s32.totalorder %s18, 1
      %p78 = scmp.ne.s32.totalorder %s73, %s75
      %p79 = scmp.eq.s32.totalorder %s18, 0
      %p80 = por %p78, %p79
      %p81 = scmp.ne.s32.totalorder %s73, %s75
      %p82 = scmp.eq.s32.totalorder %s23, 1
      %p83 = por %p81, %p82
      %p84 = scmp.ne.s32.totalorder %s75, %s76
      %p85 = scmp.eq.s32.totalorder %s23, 0
      %p86 = por %p84, %p85
      %p87 = scmp.ne.s32.totalorder %s75, %s76
      %p88 = scmp.eq.s32.totalorder %s24, 1
      %p89 = por %p87, %p88
      %p91 = scmp.ne.s32.totalorder %s76, %s90
      %p92 = scmp.eq.s32.totalorder %s24, 0
      %p93 = por %p91, %p92
      %s95 = sadd.s32 %s94, 1
      %p98 = scmp.eq.s32.totalorder %s18, 1
      %p99 = scmp.ne.s32.totalorder %s94, %s96
      %p100 = scmp.eq.s32.totalorder %s18, 0
      %p101 = por %p99, %p100
      %p102 = scmp.ne.s32.totalorder %s94, %s96
      %p103 = scmp.eq.s32.totalorder %s23, 1
      %p104 = por %p102, %p103
      %p105 = scmp.ne.s32.totalorder %s96, %s97
      %p106 = scmp.eq.s32.totalorder %s23, 0
      %p107 = por %p105, %p106
      %p108 = scmp.ne.s32.totalorder %s96, %s97
      %p109 = scmp.eq.s32.totalorder %s24, 1
      %p110 = por %p108, %p109
      %p112 = scmp.ne.s32.totalorder %s97, %s111
      %p113 = scmp.eq.s32.totalorder %s24, 0
      %p114 = por %p112, %p113
      %s116 = sadd.s32 %s115, 1
      %p119 = scmp.eq.s32.totalorder %s18, 1
      %p120 = scmp.ne.s32.totalorder %s115, %s117
      %p121 = scmp.eq.s32.totalorder %s18, 0
      %p122 = por %p120, %p121
      %p123 = scmp.ne.s32.totalorder %s115, %s117
      %p124 = scmp.eq.s32.totalorder %s23, 1
      %p125 = por %p123, %p124
      %p126 = scmp.ne.s32.totalorder %s117, %s118
      %p127 = scmp.eq.s32.totalorder %s23, 0
      %p128 = por %p126, %p127
      %p129 = scmp.ne.s32.totalorder %s117, %s118
      %p130 = scmp.eq.s32.totalorder %s24, 1
      %p131 = por %p129, %p130
      %p133 = scmp.ne.s32.totalorder %s118, %s132
      %p134 = scmp.eq.s32.totalorder %s24, 0
      %p135 = por %p133, %p134
      %s137 = sadd.s32 %s136, 1
      %p140 = scmp.eq.s32.totalorder %s18, 1
      %p141 = scmp.ne.s32.totalorder %s136, %s138
      %p142 = scmp.eq.s32.totalorder %s18, 0
      %p143 = por %p141, %p142
      %p144 = scmp.ne.s32.totalorder %s136, %s138
      %p145 = scmp.eq.s32.totalorder %s23, 1
      %p146 = por %p144, %p145
      %p147 = scmp.ne.s32.totalorder %s138, %s139
      %p148 = scmp.eq.s32.totalorder %s23, 0
      %p149 = por %p147, %p148
      %p150 = scmp.ne.s32.totalorder %s138, %s139
      %p151 = scmp.eq.s32.totalorder %s24, 1
      %p152 = por %p150, %p151
      %p154 = scmp.ne.s32.totalorder %s139, %s153
      %p155 = scmp.eq.s32.totalorder %s24, 0
      %p156 = por %p154, %p155
      %s158 = sadd.s32 %s157, 1
      %p161 = scmp.eq.s32.totalorder %s18, 1
      %p162 = scmp.ne.s32.totalorder %s157, %s159
      %p163 = scmp.eq.s32.totalorder %s18, 0
      %p164 = por %p162, %p163
      %p165 = scmp.ne.s32.totalorder %s157, %s159
      %p166 = scmp.eq.s32.totalorder %s23, 1
      %p167 = por %p165, %p166
      %p168 = scmp.ne.s32.totalorder %s159, %s160
      %p169 = scmp.eq.s32.totalorder %s23, 0
      %p170 = por %p168, %p169
      %p171 = scmp.ne.s32.totalorder %s159, %s160
      %p172 = scmp.eq.s32.totalorder %s24, 1
      %p173 = por %p171, %p172
      %p175 = scmp.ne.s32.totalorder %s160, %s174
      %p176 = scmp.eq.s32.totalorder %s24, 0
      %p177 = por %p175, %p176
      %s179 = sadd.s32 %s178, 1
      %p182 = scmp.eq.s32.totalorder %s18, 1
      %p183 = scmp.ne.s32.totalorder %s178, %s180
      %p184 = scmp.eq.s32.totalorder %s18, 0
      %p185 = por %p183, %p184
      %p186 = scmp.ne.s32.totalorder %s178, %s180
      %p187 = scmp.eq.s32.totalorder %s23, 1
      %p188 = por %p186, %p187
      %p189 = scmp.ne.s32.totalorder %s180, %s181
      %p190 = scmp.eq.s32.totalorder %s23, 0
      %p191 = por %p189, %p190
      %p192 = scmp.ne.s32.totalorder %s180, %s181
      %p193 = scmp.eq.s32.totalorder %s24, 1
      %p194 = por %p192, %p193
      %p196 = scmp.ne.s32.totalorder %s181, %s195
      %p197 = scmp.eq.s32.totalorder %s24, 0
      %p198 = por %p196, %p197
      %s200 = sadd.s32 %s199, 1
      %p203 = scmp.eq.s32.totalorder %s18, 1
      %p204 = scmp.ne.s32.totalorder %s199, %s201
      %p205 = scmp.eq.s32.totalorder %s18, 0
      %p206 = por %p204, %p205
      %p207 = scmp.ne.s32.totalorder %s199, %s201
      %p208 = scmp.eq.s32.totalorder %s23, 1
      %p209 = por %p207, %p208
      %p210 = scmp.ne.s32.totalorder %s201, %s202
      %p211 = scmp.eq.s32.totalorder %s23, 0
      %p212 = por %p210, %p211
      %p213 = scmp.ne.s32.totalorder %s201, %s202
      %p214 = scmp.eq.s32.totalorder %s24, 1
      %p215 = por %p213, %p214
      %p217 = scmp.ne.s32.totalorder %s202, %s216
      %p218 = scmp.eq.s32.totalorder %s24, 0
      %p219 = por %p217, %p218
      %s220 = ssub.s32 %s18, %s25
      %p221 = scmp.eq.s32.totalorder %s220, 0
      %s223 = sadd.s32 %s222, 1
      %s224 = scalar_select %p221, %s222, %s223
      %p227 = pneg %p221
      %p228 = scmp.eq.s32.totalorder %s18, 1
      %p229 = por %p227, %p228
      %p230 = scmp.ne.s32.totalorder %s222, %s225
      %p231 = scmp.eq.s32.totalorder %s18, 0
      %p232 = por %p230, %p231
      %p233 = scmp.ne.s32.totalorder %s222, %s225
      %p234 = scmp.eq.s32.totalorder %s23, 1
      %p235 = por %p233, %p234
      %p236 = scmp.ne.s32.totalorder %s225, %s226
      %p237 = scmp.eq.s32.totalorder %s23, 0
      %p238 = por %p236, %p237
      %p239 = scmp.ne.s32.totalorder %s225, %s226
      %p240 = scmp.eq.s32.totalorder %s24, 1
      %p241 = por %p239, %p240
      %p243 = scmp.ne.s32.totalorder %s226, %s242
      %p244 = scmp.eq.s32.totalorder %s24, 0
      %p245 = por %p243, %p244
      %p246 = scmp.le.s32.totalorder 1, %s18
      %p247 = scmp.lt.s32.totalorder %s18, 3
      %p248 = pnand %p246, %p247
      %p249 = pneg %p248
      // Predicated region
      $region9: #{base_conv_model.2} parent=5 // pred_check
        _
      $region10: #{base_conv_model.2} parent=5 // pred_check_branch
        %251 = sbr.rel (%p248) target = $region12
      $region11: #{base_conv_model.2} parent=5 // pred_region
        %s252 = ssub.s32 %s18, 1
        // Predicated region
        $region13: #{base_conv_model.2} parent=11 // pred_check
          %p253 = pneg %p65
        $region14: #{base_conv_model.2} parent=11 // pred_check_branch
          %255 = sbr.rel (%p253) target = $region16
        $region15: #{base_conv_model.2} parent=11 // pred_region
          %s257 = ssub.s32 128, 128
          %258 = vsyncadd [#allocation10], %s257
          %s260 = sshll.u32 [#allocation9], 4
          %s261 = int_to_ptr.vmem [resolvable:$true] %s260
          %263 = dma.hbm_to_vmem [thread:$0]  %s1, 128, %s261, [#allocation10]
        $region16: #{base_conv_model.2} parent=11 // pred_fallthru
          _
        // Predicated region
        $region17: #{base_conv_model.2} parent=11 // pred_check
          %p264 = pneg %p86
        $region18: #{base_conv_model.2} parent=11 // pred_check_branch
          %266 = sbr.rel (%p264) target = $region20
        $region19: #{base_conv_model.2} parent=11 // pred_region
          _
        $region20: #{base_conv_model.2} parent=11 // pred_fallthru
          _
        // Predicated region
        $region21: #{base_conv_model.2} parent=11 // pred_check
          %p267 = pneg %p107
        $region22: #{base_conv_model.2} parent=11 // pred_check_branch
          %269 = sbr.rel (%p267) target = $region24
        $region23: #{base_conv_model.2} parent=11 // pred_region
          %s271 = ssub.s32 256, 256
          %272 = vsyncadd [#allocation12], %s271
          %s273 = sshll.u32 [#allocation11], 4
          %s274 = int_to_ptr.vmem [resolvable:$true] %s273
          %279 = dma.hbm_to_vmem [thread:$0]  %s3, 256, %s274, [#allocation12], 128, 128, 8
        $region24: #{base_conv_model.2} parent=11 // pred_fallthru
          _
        // Predicated region
        $region25: #{base_conv_model.2} parent=11 // pred_check
          %p280 = pneg %p128
        $region26: #{base_conv_model.2} parent=11 // pred_check_branch
          %282 = sbr.rel (%p280) target = $region28
        $region27: #{base_conv_model.2} parent=11 // pred_region
          _
        $region28: #{base_conv_model.2} parent=11 // pred_fallthru
          _
        // Predicated region
        $region29: #{base_conv_model.2} parent=11 // pred_check
          %p283 = pneg %p149
        $region30: #{base_conv_model.2} parent=11 // pred_check_branch
          %285 = sbr.rel (%p283) target = $region32
        $region31: #{base_conv_model.2} parent=11 // pred_region
          %s287 = ssub.s32 1024, 1024
          %288 = vsyncadd [#allocation12], %s287
          %s289 = sshll.u32 [#allocation13], 4
          %s290 = int_to_ptr.vmem [resolvable:$true] %s289
          %295 = dma.hbm_to_vmem [thread:$0]  %s5, 1024, %s290, [#allocation12], 256, 256, 16
        $region32: #{base_conv_model.2} parent=11 // pred_fallthru
          _
        // Predicated region
        $region33: #{base_conv_model.2} parent=11 // pred_check
          %p296 = pneg %p170
        $region34: #{base_conv_model.2} parent=11 // pred_check_branch
          %298 = sbr.rel (%p296) target = $region36
        $region35: #{base_conv_model.2} parent=11 // pred_region
          _
        $region36: #{base_conv_model.2} parent=11 // pred_fallthru
          _
        // Predicated region
        $region37: #{base_conv_model.2} parent=11 // pred_check
          %p299 = pneg %p191
        $region38: #{base_conv_model.2} parent=11 // pred_check_branch
          %301 = sbr.rel (%p299) target = $region40
        $region39: #{base_conv_model.2} parent=11 // pred_region
          %s303 = ssub.s32 3072, 3072
          %304 = vsyncadd [#allocation15], %s303
          %s305 = sshll.u32 [#allocation14], 4
          %s306 = int_to_ptr.vmem [resolvable:$true] %s305
          %311 = dma.hbm_to_vmem [thread:$0]  %s7, 3072, %s306, [#allocation15], 384, 384, 24
        $region40: #{base_conv_model.2} parent=11 // pred_fallthru
          _
        // Predicated region
        $region41: #{base_conv_model.2} parent=11 // pred_check
          %p312 = pneg %p212
        $region42: #{base_conv_model.2} parent=11 // pred_check_branch
          %314 = sbr.rel (%p312) target = $region44
        $region43: #{base_conv_model.2} parent=11 // pred_region
          _
        $region44: #{base_conv_model.2} parent=11 // pred_fallthru
          _
      $region12: #{base_conv_model.2} parent=5 // pred_fallthru
        _
      %p315 = scmp.lt.s32.totalorder %s18, 2
      // Predicated region
      $region45: #{base_conv_model.2} parent=5 // pred_check
        %p316 = pneg %p315
      $region46: #{base_conv_model.2} parent=5 // pred_check_branch
        %318 = sbr.rel (%p316) target = $region48
      $region47: #{base_conv_model.2} parent=5 // pred_region
        // Predicated region
        $region49: #{base_conv_model.2} parent=47 // pred_check
          %p319 = pneg %p38
        $region50: #{base_conv_model.2} parent=47 // pred_check_branch
          %321 = sbr.rel (%p319) target = $region52
        $region51: #{base_conv_model.2} parent=47 // pred_region
          %p322 = scmp.lt.s32.totalorder %s18, 1
          %s323 = scalar_select %p322, %s18, 1
          %s324 = smul.addr %s323, 2
          %s325 = scalar_lea.vmem %s0, %s324
        $region52: #{base_conv_model.2} parent=47 // pred_fallthru
          _
      $region48: #{base_conv_model.2} parent=5 // pred_fallthru
        _
      %p326 = scmp.le.s32.totalorder 1, %s18
      %p327 = scmp.lt.s32.totalorder %s18, 3
      %p328 = pnand %p326, %p327
      %p329 = pneg %p328
      // Predicated region
      $region53: #{base_conv_model.2} parent=5 // pred_check
        _
      $region54: #{base_conv_model.2} parent=5 // pred_check_branch
        %331 = sbr.rel (%p328) target = $region56
      $region55: #{base_conv_model.2} parent=5 // pred_region
        %s332 = ssub.s32 %s18, 1
        // Predicated region
        $region57: #{base_conv_model.2} parent=55 // pred_check
          %p333 = pneg %p65
        $region58: #{base_conv_model.2} parent=55 // pred_check_branch
          %335 = sbr.rel (%p333) target = $region60
        $region59: #{base_conv_model.2} parent=55 // pred_region
          %336 = dma.done [#allocation10], 128
        $region60: #{base_conv_model.2} parent=55 // pred_fallthru
          _
        // Predicated region
        $region61: #{base_conv_model.2} parent=55 // pred_check
          %p337 = pneg %p107
        $region62: #{base_conv_model.2} parent=55 // pred_check_branch
          %339 = sbr.rel (%p337) target = $region64
        $region63: #{base_conv_model.2} parent=55 // pred_region
          %340 = dma.done [#allocation12], 256
        $region64: #{base_conv_model.2} parent=55 // pred_fallthru
          _
        // Predicated region
        $region65: #{base_conv_model.2} parent=55 // pred_check
          %p341 = pneg %p149
        $region66: #{base_conv_model.2} parent=55 // pred_check_branch
          %343 = sbr.rel (%p341) target = $region68
        $region67: #{base_conv_model.2} parent=55 // pred_region
          %344 = dma.done [#allocation12], 1024
        $region68: #{base_conv_model.2} parent=55 // pred_fallthru
          _
        // Predicated region
        $region69: #{base_conv_model.2} parent=55 // pred_check
          %p345 = pneg %p191
        $region70: #{base_conv_model.2} parent=55 // pred_check_branch
          %347 = sbr.rel (%p345) target = $region72
        $region71: #{base_conv_model.2} parent=55 // pred_region
          %348 = dma.done [#allocation15], 3072
        $region72: #{base_conv_model.2} parent=55 // pred_fallthru
          _
        %p349 = scmp.lt.s32.totalorder %s23, 1
        %s350 = scalar_select %p349, %s23, 1
        %s351 = smul.addr %s350, 2
        %s352 = scalar_lea.vmem %s0, %s351
        %p353 = pneg %p44
        %p354 = pneg %p41
        %p355 = pneg %p65
        %p356 = pneg %p62
        %p357 = pneg %p86
        %p358 = pneg %p83
        %p359 = pneg %p107
        %p360 = pneg %p104
        %p361 = pneg %p128
        %p362 = pneg %p125
        %p363 = pneg %p149
        %p364 = pneg %p146
        %p365 = pneg %p170
        %p366 = pneg %p167
        %p367 = pneg %p191
        %p368 = pneg %p188
        %p369 = pneg %p212
        %p370 = pneg %p209
        %p371 = pneg %p238
        %p372 = pneg %p235
        %p373 = scmp.lt.s32.totalorder %s23, 1
        %s374 = scalar_select %p373, %s23, 1
        %s375 = smul.addr %s374, 8
        %s376 = smul.addr %s375, 8
        %s377 = scalar_lea.vmem %s9, %s376
        %p378 = scmp.lt.s32.totalorder %s23, 1
        %s379 = scalar_select %p378, %s23, 1
        %s380 = smul.addr %s379, 2
        %s381 = scalar_lea.vmem %s0, %s380
        %p382 = scmp.lt.s32.totalorder %s23, 1
        %s383 = scalar_select %p382, %s23, 1
        %s384 = smul.addr %s383, 8
        %s385 = smul.addr %s384, 8
        %s386 = scalar_lea.vmem %s9, %s385
        %v387 = vld [vmem:[%s381] sm:$0x3]
        %v388 = vlaneseq
        %vm389 = vcmp.ge.s32.totalorder %v388, 0
        %vm390 = vcmp.lt.s32.totalorder %v388, 222
        %vm391 = vmand %vm389, %vm390
        %392 = vst.msk [vmem:[#allocation2] ss:$8 sm:$0x3] %vm391, %v387
        %393 = vst.msk [vmem:[#allocation2] ss:$8 sm:$0x0] %vm391, %v387
        %395 = vrot.lane.b32.xlu0 %v387, 127
        %v396 = vpop.permute.xlu0 %395
        %v397 = vrot.slane %v396, 1
        %vm398 = vcmask 1039360
        %v399 = vsel %vm398, %v396, %v397
        %s401 = scalar_lea.vmem [#allocation2], 1
        %402 = vst.msk [vmem:[%s401] ss:$8 sm:$0x3] %vm391, %v399
        %403 = vst.msk [vmem:[%s401] ss:$8 sm:$0x0] %vm391, %v399
        %404 = vrot.lane.b32.xlu0 %v387, 126
        %v405 = vpop.permute.xlu0 %404
        %v406 = vrot.slane %v405, 1
        %vm407 = vcmask 1031168
        %v408 = vsel %vm407, %v405, %v406
        %s410 = scalar_lea.vmem [#allocation2], 2
        %411 = vst.msk [vmem:[%s410] ss:$8 sm:$0x3] %vm391, %v408
        %412 = vst.msk [vmem:[%s410] ss:$8 sm:$0x0] %vm391, %v408
        %413 = vrot.lane.b32.xlu0 %v387, 112
        %v414 = vpop.permute.xlu0 %413
        %v415 = vrot.slane %v414, 1
        %vm416 = vcmask 916480
        %v417 = vsel %vm416, %v414, %v415
        %s419 = scalar_lea.vmem [#allocation2], 3
        %420 = vst.msk [vmem:[%s419] ss:$8 sm:$0x3] %vm391, %v417
        %421 = vst.msk [vmem:[%s419] ss:$8 sm:$0x0] %vm391, %v417
        %422 = vrot.lane.b32.xlu0 %v387, 111
        %v423 = vpop.permute.xlu0 %422
        %v424 = vrot.slane %v423, 1
        %vm425 = vcmask 908288
        %v426 = vsel %vm425, %v423, %v424
        %s428 = scalar_lea.vmem [#allocation2], 4
        %429 = vst.msk [vmem:[%s428] ss:$8 sm:$0x3] %vm391, %v426
        %430 = vst.msk [vmem:[%s428] ss:$8 sm:$0x0] %vm391, %v426
        %431 = vrot.lane.b32.xlu0 %v387, 110
        %v432 = vpop.permute.xlu0 %431
        %v433 = vrot.slane %v432, 1
        %vm434 = vcmask 900096
        %v435 = vsel %vm434, %v432, %v433
        %s437 = scalar_lea.vmem [#allocation2], 5
        %438 = vst.msk [vmem:[%s437] ss:$8 sm:$0x3] %vm391, %v435
        %439 = vst.msk [vmem:[%s437] ss:$8 sm:$0x0] %vm391, %v435
        %440 = vrot.lane.b32.xlu0 %v387, 96
        %v441 = vpop.permute.xlu0 %440
        %v442 = vrot.slane %v441, 1
        %vm443 = vcmask 785408
        %v444 = vsel %vm443, %v441, %v442
        %s446 = scalar_lea.vmem [#allocation2], 6
        %447 = vst.msk [vmem:[%s446] ss:$8 sm:$0x3] %vm391, %v444
        %448 = vst.msk [vmem:[%s446] ss:$8 sm:$0x0] %vm391, %v444
        %449 = vrot.lane.b32.xlu0 %v387, 95
        %v450 = vpop.permute.xlu0 %449
        %v451 = vrot.slane %v450, 1
        %vm452 = vcmask 777216
        %v453 = vsel %vm452, %v450, %v451
        %s455 = scalar_lea.vmem [#allocation2], 7
        %456 = vst.msk [vmem:[%s455] ss:$8 sm:$0x3] %vm391, %v453
        %457 = vst.msk [vmem:[%s455] ss:$8 sm:$0x0] %vm391, %v453
        %458 = vrot.lane.b32.xlu0 %v387, 94
        %v459 = vpop.permute.xlu0 %458
        %v460 = vrot.slane %v459, 1
        %vm461 = vcmask 769024
        %v462 = vsel %vm461, %v459, %v460
        %s464 = scalar_lea.vmem [#allocation2], 16
        %465 = vst.msk [vmem:[%s464] ss:$8 sm:$0x3] %vm391, %v462
        %466 = vst.msk [vmem:[%s464] ss:$8 sm:$0x0] %vm391, %v462
        %v467 = vld [vmem:[#allocation9] sm:$0xff]
        %v468 = vld [vmem:[#allocation2] sm:$0xff]
        %v469 = vld [vmem:[#allocation2 + $0x8] sm:$0xff]
        %v470 = vld [vmem:[#allocation2 + $0x10] sm:$0x1]
        %v471 = vld [vmem:[#allocation2 + $0x18] sm:$0x1]
        %v472 = vld [vmem:[%s2] sm:$0xff]
        %474 = vset.pattern.permute.xlu0 0
        %475 = vperm.xlu0 %474, %v472
        %v476 = vpop.permute.xlu0 %475
        %vm478 = vcmask 72704
        %v480 = vsel %vm478, %v467, 0
        %vm482 = vcmask 1040384
        %v484 = vsel %vm482, %v470, 0
        %v487 = vsel %vm482, %v471, 0
        %489 = vmatprep.subr.mxu0 %v469
        %490 = vmatpush1.msra.mxu0 %v468
        %491 = vmatprep.subr.mxu0 %v487
        %492 = vmatpush1.msra.mxu0 %v484
        %493 = vmatprep.subr.mxu0 0.0
        %494 = vmatpush1.msra.mxu0 0.0
        %495 = vmatprep.subr.mxu0 0.0
        %496 = vmatpush1.msra.mxu0 0.0
        %497 = vmatprep.subr.mxu0 0.0
        %498 = vmatpush1.msra.mxu0 0.0
        %499 = vmatprep.subr.mxu0 0.0
        %500 = vmatpush1.msra.mxu0 0.0
        %501 = vmatprep.subr.mxu0 0.0
        %502 = vmatpush1.msra.mxu0 0.0
        %503 = vmatprep.subr.mxu0 0.0
        %504 = vmatpush1.msra.mxu0 0.0
        %505 = vmatprep.subr.mxu0 0.0
        %506 = vmatpush1.msra.mxu0 0.0
        %507 = vmatprep.subr.mxu0 0.0
        %508 = vmatpush1.msra.mxu0 0.0
        %509 = vmatprep.subr.mxu0 0.0
        %510 = vmatpush1.msra.mxu0 0.0
        %511 = vmatprep.subr.mxu0 0.0
        %512 = vmatpush1.msra.mxu0 0.0
        %513 = vmatprep.subr.mxu0 0.0
        %514 = vmatpush1.msra.mxu0 0.0
        %515 = vmatprep.subr.mxu0 0.0
        %516 = vmatpush1.msra.mxu0 0.0
        %517 = vmatprep.subr.mxu0 0.0
        %518 = vmatpush1.msra.mxu0 0.0
        %519 = vmatprep.subr.mxu0 0.0
        %520 = vmatpush1.msra.mxu0 0.0
        %521 = vmatprep.subr.mxu0 0.0
        %522 = vmatpush1.msra.mxu0 0.0
        %523 = vmatprep.subr.mxu0 0.0
        %524 = vmatpush1.msra.mxu0 0.0
        %525 = vmatprep.subr.mxu0 0.0
        %526 = vmatpush1.msra.mxu0 0.0
        %527 = vmatprep.subr.mxu0 0.0
        %528 = vmatpush1.msra.mxu0 0.0
        %529 = vmatprep.subr.mxu0 0.0
        %530 = vmatpush1.msra.mxu0 0.0
        %531 = vmatprep.subr.mxu0 0.0
        %532 = vmatpush1.msra.mxu0 0.0
        %533 = vmatprep.subr.mxu0 0.0
        %534 = vmatpush1.msra.mxu0 0.0
        %535 = vmatprep.subr.mxu0 0.0
        %536 = vmatpush1.msra.mxu0 0.0
        %537 = vmatprep.subr.mxu0 0.0
        %538 = vmatpush1.msra.mxu0 0.0
        %539 = vmatprep.subr.mxu0 0.0
        %540 = vmatpush1.msra.mxu0 0.0
        %541 = vmatprep.subr.mxu0 0.0
        %542 = vmatpush1.msra.mxu0 0.0
        %543 = vmatprep.subr.mxu0 0.0
        %544 = vmatpush1.msra.mxu0 0.0
        %545 = vmatprep.subr.mxu0 0.0
        %546 = vmatpush1.msra.mxu0 0.0
        %547 = vmatprep.subr.mxu0 0.0
        %548 = vmatpush1.msra.mxu0 0.0
        %549 = vmatprep.subr.mxu0 0.0
        %550 = vmatpush1.msra.mxu0 0.0
        %551 = vmatprep.subr.mxu0 0.0
        %552 = vmatpush1.msra.mxu0 0.0
        %553 = vmatprep.mubr.f32.mxu0 0.0
        %554 = vmatmul.mubr.f32.gmra.mrb[0].mxu0 %v480
        %v555 = vpop.f32.mrb[0].mxu0
        %v556 = vadd.f32 %v476, %v555
        %v557 = vpop.f32.mrb[0].mxu0
        %v558 = vadd.f32 %v476, %v557
        %559 = vdwg.mxu0
        %v560 = vmul.f32 %v556, 0.2
        %v561 = vmul.f32 %v558, 0.2
        %v562 = vmax.f32 %v556, %v560
        %v563 = vmax.f32 %v558, %v561
        %564 = vst [vmem:[#allocation3] sm:$0xff] %v562
        %565 = vst.msk [vmem:[#allocation3 + $0x8] sm:$0xff] %vm461, %v563
        %v566 = vld [vmem:[#allocation3] sm:$0xff]
        %v567 = vld [vmem:[#allocation3 + $0x8] sm:$0xff]
        %568 = vst [vmem:[#allocation4] sm:$0xff] %v566
        %vm569 = vcmask 490496
        %570 = vst.msk [vmem:[#allocation4 + $0x8] sm:$0xff] %vm569, %v567
        %v571 = vld [vmem:[#allocation3] sm:$0xff]
        %v572 = vld [vmem:[#allocation3 + $0x8] sm:$0xff]
        %575 = vrot.lane.b32.xlu0 %v571, 127
        %v576 = vpop.permute.xlu0 %575
        %577 = vrot.lane.b32.xlu0 %v572, 127
        %v578 = vpop.permute.xlu0 %577
        %v579 = vsel %vm398, %v576, %v578
        %582 = vst [vmem:[#allocation4 + $0x10] sm:$0xff] %v579
        %583 = vst.msk [vmem:[#allocation4 + $0x18] sm:$0xff] %vm569, %v578
        %v584 = vld [vmem:[#allocation3] sm:$0xff]
        %v585 = vld [vmem:[#allocation3 + $0x8] sm:$0xff]
        %588 = vrot.lane.b32.xlu0 %v584, 126
        %v589 = vpop.permute.xlu0 %588
        %590 = vrot.lane.b32.xlu0 %v585, 126
        %v591 = vpop.permute.xlu0 %590
        %v592 = vsel %vm407, %v589, %v591
        %595 = vst [vmem:[#allocation4 + $0x20] sm:$0xff] %v592
        %596 = vst.msk [vmem:[#allocation4 + $0x28] sm:$0xff] %vm569, %v591
        %v597 = vld [vmem:[#allocation3] sm:$0xff]
        %v598 = vld [vmem:[#allocation3 + $0x8] sm:$0xff]
        %601 = vrot.lane.b32.xlu0 %v597, 112
        %v602 = vpop.permute.xlu0 %601
        %603 = vrot.lane.b32.xlu0 %v598, 112
        %v604 = vpop.permute.xlu0 %603
        %v605 = vsel %vm416, %v602, %v604
        %608 = vst [vmem:[#allocation4 + $0x30] sm:$0xff] %v605
        %609 = vst.msk [vmem:[#allocation4 + $0x38] sm:$0xff] %vm569, %v604
        %v610 = vld [vmem:[#allocation3] sm:$0xff]
        %v611 = vld [vmem:[#allocation3 + $0x8] sm:$0xff]
        %614 = vrot.lane.b32.xlu0 %v610, 111
        %v615 = vpop.permute.xlu0 %614
        %616 = vrot.lane.b32.xlu0 %v611, 111
        %v617 = vpop.permute.xlu0 %616
        %v618 = vsel %vm425, %v615, %v617
        %621 = vst [vmem:[#allocation4 + $0x40] sm:$0xff] %v618
        %622 = vst.msk [vmem:[#allocation4 + $0x48] sm:$0xff] %vm569, %v617
        %v623 = vld [vmem:[#allocation3] sm:$0xff]
        %v624 = vld [vmem:[#allocation3 + $0x8] sm:$0xff]
        %627 = vrot.lane.b32.xlu0 %v623, 110
        %v628 = vpop.permute.xlu0 %627
        %629 = vrot.lane.b32.xlu0 %v624, 110
        %v630 = vpop.permute.xlu0 %629
        %v631 = vsel %vm434, %v628, %v630
        %634 = vst [vmem:[#allocation4 + $0x50] sm:$0xff] %v631
        %635 = vst.msk [vmem:[#allocation4 + $0x58] sm:$0xff] %vm569, %v630
        %v636 = vld [vmem:[#allocation3] sm:$0xff]
        %v637 = vld [vmem:[#allocation3 + $0x8] sm:$0xff]
        %640 = vrot.lane.b32.xlu0 %v636, 96
        %v641 = vpop.permute.xlu0 %640
        %642 = vrot.lane.b32.xlu0 %v637, 96
        %v643 = vpop.permute.xlu0 %642
        %v644 = vsel %vm443, %v641, %v643
        %647 = vst [vmem:[#allocation4 + $0x60] sm:$0xff] %v644
        %648 = vst.msk [vmem:[#allocation4 + $0x68] sm:$0xff] %vm569, %v643
        %v649 = vld [vmem:[#allocation3] sm:$0xff]
        %v650 = vld [vmem:[#allocation3 + $0x8] sm:$0xff]
        %653 = vrot.lane.b32.xlu0 %v649, 95
        %v654 = vpop.permute.xlu0 %653
        %655 = vrot.lane.b32.xlu0 %v650, 95
        %v656 = vpop.permute.xlu0 %655
        %v657 = vsel %vm452, %v654, %v656
        %660 = vst [vmem:[#allocation4 + $0x70] sm:$0xff] %v657
        %661 = vst.msk [vmem:[#allocation4 + $0x78] sm:$0xff] %vm569, %v656
        %v662 = vld [vmem:[#allocation3] sm:$0xff]
        %v663 = vld [vmem:[#allocation3 + $0x8] sm:$0xff]
        %666 = vrot.lane.b32.xlu0 %v662, 94
        %v667 = vpop.permute.xlu0 %666
        %668 = vrot.lane.b32.xlu0 %v663, 94
        %v669 = vpop.permute.xlu0 %668
        %v670 = vsel %vm461, %v667, %v669
        %673 = vst [vmem:[#allocation4 + $0x80] sm:$0xff] %v670
        %674 = vst.msk [vmem:[#allocation4 + $0x88] sm:$0xff] %vm569, %v669
        %v675 = vld [vmem:[#allocation11] sm:$0xff]
        %v676 = vld [vmem:[#allocation11 + $0x8] sm:$0xff]
        %v677 = vld [vmem:[#allocation4] sm:$0xff]
        %v678 = vld [vmem:[#allocation4 + $0x8] sm:$0xff]
        %v679 = vld [vmem:[#allocation4 + $0x10] sm:$0xff]
        %v680 = vld [vmem:[#allocation4 + $0x18] sm:$0xff]
        %v681 = vld [vmem:[#allocation4 + $0x20] sm:$0xff]
        %v682 = vld [vmem:[#allocation4 + $0x28] sm:$0xff]
        %v683 = vld [vmem:[#allocation4 + $0x30] sm:$0xff]
        %v684 = vld [vmem:[#allocation4 + $0x38] sm:$0xff]
        %v685 = vld [vmem:[#allocation4 + $0x40] sm:$0xff]
        %v686 = vld [vmem:[#allocation4 + $0x48] sm:$0xff]
        %v687 = vld [vmem:[#allocation4 + $0x50] sm:$0xff]
        %v688 = vld [vmem:[#allocation4 + $0x58] sm:$0xff]
        %v689 = vld [vmem:[#allocation4 + $0x60] sm:$0xff]
        %v690 = vld [vmem:[#allocation4 + $0x68] sm:$0xff]
        %v691 = vld [vmem:[#allocation4 + $0x70] sm:$0xff]
        %v692 = vld [vmem:[#allocation4 + $0x78] sm:$0xff]
        %v693 = vld [vmem:[#allocation4 + $0x80] sm:$0xff]
        %v694 = vld [vmem:[#allocation4 + $0x88] sm:$0xff]
        %v695 = vld [vmem:[%s4] sm:$0xff]
        %v696 = vld [vmem:[%s4 + $0x8] sm:$0xff]
        %698 = vset.pattern.permute.xlu0 0
        %699 = vperm.xlu0 %698, %v695
        %v700 = vpop.permute.xlu0 %699
        %703 = vset.pattern.permute.xlu0 0
        %704 = vperm.xlu0 %703, %v696
        %v705 = vpop.permute.xlu0 %704
        %vm707 = vcmask 588800
        %v709 = vsel %vm707, %v675, 0
        %v712 = vsel %vm707, %v676, 0
        %714 = vmatprep.subr.mxu0 %v678
        %715 = vmatpush1.msra.mxu0 %v677
        %716 = vmatprep.subr.mxu0 %v680
        %717 = vmatpush1.msra.mxu0 %v679
        %718 = vmatprep.subr.mxu0 %v682
        %719 = vmatpush1.msra.mxu0 %v681
        %720 = vmatprep.subr.mxu0 %v684
        %721 = vmatpush1.msra.mxu0 %v683
        %722 = vmatprep.subr.mxu0 %v686
        %723 = vmatpush1.msra.mxu0 %v685
        %724 = vmatprep.subr.mxu0 %v688
        %725 = vmatpush1.msra.mxu0 %v687
        %726 = vmatprep.subr.mxu0 %v690
        %727 = vmatpush1.msra.mxu0 %v689
        %728 = vmatprep.subr.mxu0 %v692
        %729 = vmatpush1.msra.mxu0 %v691
        %730 = vmatprep.subr.mxu0 %v694
        %731 = vmatpush1.msra.mxu0 %v693
        %732 = vmatprep.subr.mxu0 0.0
        %733 = vmatpush1.msra.mxu0 0.0
        %734 = vmatprep.subr.mxu0 0.0
        %735 = vmatpush1.msra.mxu0 0.0
        %736 = vmatprep.subr.mxu0 0.0
        %737 = vmatpush1.msra.mxu0 0.0
        %738 = vmatprep.subr.mxu0 0.0
        %739 = vmatpush1.msra.mxu0 0.0
        %740 = vmatprep.subr.mxu0 0.0
        %741 = vmatpush1.msra.mxu0 0.0
        %742 = vmatprep.subr.mxu0 0.0
        %743 = vmatpush1.msra.mxu0 0.0
        %744 = vmatprep.subr.mxu0 0.0
        %745 = vmatpush1.msra.mxu0 0.0
        %746 = vmatprep.subr.mxu0 0.0
        %747 = vmatpush1.msra.mxu0 0.0
        %748 = vmatprep.subr.mxu0 0.0
        %749 = vmatpush1.msra.mxu0 0.0
        %750 = vmatprep.subr.mxu0 0.0
        %751 = vmatpush1.msra.mxu0 0.0
        %752 = vmatprep.subr.mxu0 0.0
        %753 = vmatpush1.msra.mxu0 0.0
        %754 = vmatprep.subr.mxu0 0.0
        %755 = vmatpush1.msra.mxu0 0.0
        %756 = vmatprep.subr.mxu0 0.0
        %757 = vmatpush1.msra.mxu0 0.0
        %758 = vmatprep.subr.mxu0 0.0
        %759 = vmatpush1.msra.mxu0 0.0
        %760 = vmatprep.subr.mxu0 0.0
        %761 = vmatpush1.msra.mxu0 0.0
        %762 = vmatprep.subr.mxu0 0.0
        %763 = vmatpush1.msra.mxu0 0.0
        %764 = vmatprep.subr.mxu0 0.0
        %765 = vmatpush1.msra.mxu0 0.0
        %766 = vmatprep.subr.mxu0 0.0
        %767 = vmatpush1.msra.mxu0 0.0
        %768 = vmatprep.subr.mxu0 0.0
        %769 = vmatpush1.msra.mxu0 0.0
        %770 = vmatprep.subr.mxu0 0.0
        %771 = vmatpush1.msra.mxu0 0.0
        %772 = vmatprep.subr.mxu0 0.0
        %773 = vmatpush1.msra.mxu0 0.0
        %774 = vmatprep.subr.mxu0 0.0
        %775 = vmatpush1.msra.mxu0 0.0
        %776 = vmatprep.subr.mxu0 0.0
        %777 = vmatpush1.msra.mxu0 0.0
        %778 = vmatprep.mubr.f32.mxu0 0.0
        %779 = vmatmul.mubr.f32.gmra.mrb[0].mxu0 %v709
        %v780 = vpop.f32.mrb[0].mxu0
        %v781 = vadd.f32 %v700, %v780
        %v782 = vpop.f32.mrb[0].mxu0
        %v783 = vadd.f32 %v700, %v782
        %784 = vmatprep.mubr.f32.mxu0 0.0
        %785 = vmatmul.mubr.f32.gmra.mrb[0].mxu0 %v712
        %v786 = vpop.f32.mrb[0].mxu0
        %v787 = vadd.f32 %v705, %v786
        %v788 = vpop.f32.mrb[0].mxu0
        %v789 = vadd.f32 %v705, %v788
        %790 = vdwg.mxu0
        %v791 = vmul.f32 %v781, 0.2
        %v792 = vmul.f32 %v783, 0.2
        %v793 = vmul.f32 %v787, 0.2
        %v794 = vmul.f32 %v789, 0.2
        %v795 = vmax.f32 %v781, %v791
        %v796 = vmax.f32 %v783, %v792
        %v797 = vmax.f32 %v787, %v793
        %v798 = vmax.f32 %v789, %v794
        %799 = vst [vmem:[#allocation5] sm:$0xff] %v795
        %800 = vst.msk [vmem:[#allocation5 + $0x8] sm:$0xff] %vm569, %v796
        %801 = vst [vmem:[#allocation5 + $0x10] sm:$0xff] %v797
        %802 = vst.msk [vmem:[#allocation5 + $0x18] sm:$0xff] %vm569, %v798
        %v803 = vld [vmem:[#allocation5] sm:$0xff]
        %v804 = vld [vmem:[#allocation5 + $0x8] sm:$0xff]
        %v805 = vld [vmem:[#allocation5 + $0x10] sm:$0xff]
        %v806 = vld [vmem:[#allocation5 + $0x18] sm:$0xff]
        %807 = vst [vmem:[#allocation6] sm:$0xff] %v803
        %vm808 = vcmask 211968
        %809 = vst.msk [vmem:[#allocation6 + $0x8] sm:$0xff] %vm808, %v804
        %810 = vst [vmem:[#allocation6 + $0x10] sm:$0xff] %v805
        %811 = vst.msk [vmem:[#allocation6 + $0x18] sm:$0xff] %vm808, %v806
        %v812 = vld [vmem:[#allocation5] sm:$0xff]
        %v813 = vld [vmem:[#allocation5 + $0x8] sm:$0xff]
        %v814 = vld [vmem:[#allocation5 + $0x10] sm:$0xff]
        %v815 = vld [vmem:[#allocation5 + $0x18] sm:$0xff]
        %820 = vrot.lane.b32.xlu0 %v812, 127
        %v821 = vpop.permute.xlu0 %820
        %822 = vrot.lane.b32.xlu0 %v813, 127
        %v823 = vpop.permute.xlu0 %822
        %824 = vrot.lane.b32.xlu0 %v814, 127
        %v825 = vpop.permute.xlu0 %824
        %826 = vrot.lane.b32.xlu0 %v815, 127
        %v827 = vpop.permute.xlu0 %826
        %v828 = vsel %vm398, %v821, %v823
        %v829 = vsel %vm398, %v825, %v827
        %834 = vst [vmem:[#allocation6 + $0x20] sm:$0xff] %v828
        %835 = vst.msk [vmem:[#allocation6 + $0x28] sm:$0xff] %vm808, %v823
        %836 = vst [vmem:[#allocation6 + $0x30] sm:$0xff] %v829
        %837 = vst.msk [vmem:[#allocation6 + $0x38] sm:$0xff] %vm808, %v827
        %v838 = vld [vmem:[#allocation5] sm:$0xff]
        %v839 = vld [vmem:[#allocation5 + $0x8] sm:$0xff]
        %v840 = vld [vmem:[#allocation5 + $0x10] sm:$0xff]
        %v841 = vld [vmem:[#allocation5 + $0x18] sm:$0xff]
        %846 = vrot.lane.b32.xlu0 %v838, 126
        %v847 = vpop.permute.xlu0 %846
        %848 = vrot.lane.b32.xlu0 %v839, 126
        %v849 = vpop.permute.xlu0 %848
        %850 = vrot.lane.b32.xlu0 %v840, 126
        %v851 = vpop.permute.xlu0 %850
        %852 = vrot.lane.b32.xlu0 %v841, 126
        %v853 = vpop.permute.xlu0 %852
        %v854 = vsel %vm407, %v847, %v849
        %v855 = vsel %vm407, %v851, %v853
        %860 = vst [vmem:[#allocation6 + $0x40] sm:$0xff] %v854
        %861 = vst.msk [vmem:[#allocation6 + $0x48] sm:$0xff] %vm808, %v849
        %862 = vst [vmem:[#allocation6 + $0x50] sm:$0xff] %v855
        %863 = vst.msk [vmem:[#allocation6 + $0x58] sm:$0xff] %vm808, %v853
        %v864 = vld [vmem:[#allocation5] sm:$0xff]
        %v865 = vld [vmem:[#allocation5 + $0x8] sm:$0xff]
        %v866 = vld [vmem:[#allocation5 + $0x10] sm:$0xff]
        %v867 = vld [vmem:[#allocation5 + $0x18] sm:$0xff]
        %872 = vrot.lane.b32.xlu0 %v864, 112
        %v873 = vpop.permute.xlu0 %872
        %874 = vrot.lane.b32.xlu0 %v865, 112
        %v875 = vpop.permute.xlu0 %874
        %876 = vrot.lane.b32.xlu0 %v866, 112
        %v877 = vpop.permute.xlu0 %876
        %878 = vrot.lane.b32.xlu0 %v867, 112
        %v879 = vpop.permute.xlu0 %878
        %v880 = vsel %vm416, %v873, %v875
        %v881 = vsel %vm416, %v877, %v879
        %886 = vst [vmem:[#allocation6 + $0x60] sm:$0xff] %v880
        %887 = vst.msk [vmem:[#allocation6 + $0x68] sm:$0xff] %vm808, %v875
        %888 = vst [vmem:[#allocation6 + $0x70] sm:$0xff] %v881
        %889 = vst.msk [vmem:[#allocation6 + $0x78] sm:$0xff] %vm808, %v879
        %v890 = vld [vmem:[#allocation5] sm:$0xff]
        %v891 = vld [vmem:[#allocation5 + $0x8] sm:$0xff]
        %v892 = vld [vmem:[#allocation5 + $0x10] sm:$0xff]
        %v893 = vld [vmem:[#allocation5 + $0x18] sm:$0xff]
        %898 = vrot.lane.b32.xlu0 %v890, 111
        %v899 = vpop.permute.xlu0 %898
        %900 = vrot.lane.b32.xlu0 %v891, 111
        %v901 = vpop.permute.xlu0 %900
        %902 = vrot.lane.b32.xlu0 %v892, 111
        %v903 = vpop.permute.xlu0 %902
        %904 = vrot.lane.b32.xlu0 %v893, 111
        %v905 = vpop.permute.xlu0 %904
        %v906 = vsel %vm425, %v899, %v901
        %v907 = vsel %vm425, %v903, %v905
        %912 = vst [vmem:[#allocation6 + $0x80] sm:$0xff] %v906
        %913 = vst.msk [vmem:[#allocation6 + $0x88] sm:$0xff] %vm808, %v901
        %914 = vst [vmem:[#allocation6 + $0x90] sm:$0xff] %v907
        %915 = vst.msk [vmem:[#allocation6 + $0x98] sm:$0xff] %vm808, %v905
        %v916 = vld [vmem:[#allocation5] sm:$0xff]
        %v917 = vld [vmem:[#allocation5 + $0x8] sm:$0xff]
        %v918 = vld [vmem:[#allocation5 + $0x10] sm:$0xff]
        %v919 = vld [vmem:[#allocation5 + $0x18] sm:$0xff]
        %924 = vrot.lane.b32.xlu0 %v916, 110
        %v925 = vpop.permute.xlu0 %924
        %926 = vrot.lane.b32.xlu0 %v917, 110
        %v927 = vpop.permute.xlu0 %926
        %928 = vrot.lane.b32.xlu0 %v918, 110
        %v929 = vpop.permute.xlu0 %928
        %930 = vrot.lane.b32.xlu0 %v919, 110
        %v931 = vpop.permute.xlu0 %930
        %v932 = vsel %vm434, %v925, %v927
        %v933 = vsel %vm434, %v929, %v931
        %938 = vst [vmem:[#allocation6 + $0xa0] sm:$0xff] %v932
        %939 = vst.msk [vmem:[#allocation6 + $0xa8] sm:$0xff] %vm808, %v927
        %940 = vst [vmem:[#allocation6 + $0xb0] sm:$0xff] %v933
        %941 = vst.msk [vmem:[#allocation6 + $0xb8] sm:$0xff] %vm808, %v931
        %v942 = vld [vmem:[#allocation5] sm:$0xff]
        %v943 = vld [vmem:[#allocation5 + $0x8] sm:$0xff]
        %v944 = vld [vmem:[#allocation5 + $0x10] sm:$0xff]
        %v945 = vld [vmem:[#allocation5 + $0x18] sm:$0xff]
        %950 = vrot.lane.b32.xlu0 %v942, 96
        %v951 = vpop.permute.xlu0 %950
        %952 = vrot.lane.b32.xlu0 %v943, 96
        %v953 = vpop.permute.xlu0 %952
        %954 = vrot.lane.b32.xlu0 %v944, 96
        %v955 = vpop.permute.xlu0 %954
        %956 = vrot.lane.b32.xlu0 %v945, 96
        %v957 = vpop.permute.xlu0 %956
        %v958 = vsel %vm443, %v951, %v953
        %v959 = vsel %vm443, %v955, %v957
        %964 = vst [vmem:[#allocation6 + $0xc0] sm:$0xff] %v958
        %965 = vst.msk [vmem:[#allocation6 + $0xc8] sm:$0xff] %vm808, %v953
        %966 = vst [vmem:[#allocation6 + $0xd0] sm:$0xff] %v959
        %967 = vst.msk [vmem:[#allocation6 + $0xd8] sm:$0xff] %vm808, %v957
        %v968 = vld [vmem:[#allocation5] sm:$0xff]
        %v969 = vld [vmem:[#allocation5 + $0x8] sm:$0xff]
        %v970 = vld [vmem:[#allocation5 + $0x10] sm:$0xff]
        %v971 = vld [vmem:[#allocation5 + $0x18] sm:$0xff]
        %976 = vrot.lane.b32.xlu0 %v968, 95
        %v977 = vpop.permute.xlu0 %976
        %978 = vrot.lane.b32.xlu0 %v969, 95
        %v979 = vpop.permute.xlu0 %978
        %980 = vrot.lane.b32.xlu0 %v970, 95
        %v981 = vpop.permute.xlu0 %980
        %982 = vrot.lane.b32.xlu0 %v971, 95
        %v983 = vpop.permute.xlu0 %982
        %v984 = vsel %vm452, %v977, %v979
        %v985 = vsel %vm452, %v981, %v983
        %990 = vst [vmem:[#allocation6 + $0xe0] sm:$0xff] %v984
        %991 = vst.msk [vmem:[#allocation6 + $0xe8] sm:$0xff] %vm808, %v979
        %992 = vst [vmem:[#allocation6 + $0xf0] sm:$0xff] %v985
        %993 = vst.msk [vmem:[#allocation6 + $0xf8] sm:$0xff] %vm808, %v983
        %v994 = vld [vmem:[#allocation5] sm:$0xff]
        %v995 = vld [vmem:[#allocation5 + $0x8] sm:$0xff]
        %v996 = vld [vmem:[#allocation5 + $0x10] sm:$0xff]
        %v997 = vld [vmem:[#allocation5 + $0x18] sm:$0xff]
        %1002 = vrot.lane.b32.xlu0 %v994, 94
        %v1003 = vpop.permute.xlu0 %1002
        %1004 = vrot.lane.b32.xlu0 %v995, 94
        %v1005 = vpop.permute.xlu0 %1004
        %1006 = vrot.lane.b32.xlu0 %v996, 94
        %v1007 = vpop.permute.xlu0 %1006
        %1008 = vrot.lane.b32.xlu0 %v997, 94
        %v1009 = vpop.permute.xlu0 %1008
        %v1010 = vsel %vm461, %v1003, %v1005
        %v1011 = vsel %vm461, %v1007, %v1009
        %1016 = vst [vmem:[#allocation6 + $0x100] sm:$0xff] %v1010
        %1017 = vst.msk [vmem:[#allocation6 + $0x108] sm:$0xff] %vm808, %v1005
        %1018 = vst [vmem:[#allocation6 + $0x110] sm:$0xff] %v1011
        %1019 = vst.msk [vmem:[#allocation6 + $0x118] sm:$0xff] %vm808, %v1009
        %v1020 = vld [vmem:[#allocation13] sm:$0xff]
        %v1021 = vld [vmem:[#allocation13 + $0x8] sm:$0xff]
        %v1022 = vld [vmem:[#allocation13 + $0x10] sm:$0xff]
        %v1023 = vld [vmem:[#allocation13 + $0x18] sm:$0xff]
        %v1024 = vld [vmem:[#allocation13 + $0x20] sm:$0xff]
        %v1025 = vld [vmem:[#allocation13 + $0x28] sm:$0xff]
        %v1026 = vld [vmem:[#allocation13 + $0x30] sm:$0xff]
        %v1027 = vld [vmem:[#allocation13 + $0x38] sm:$0xff]
        %v1028 = vld [vmem:[#allocation6] sm:$0xff]
        %v1029 = vld [vmem:[#allocation6 + $0x8] sm:$0xff]
        %v1030 = vld [vmem:[#allocation6 + $0x10] sm:$0xff]
        %v1031 = vld [vmem:[#allocation6 + $0x18] sm:$0xff]
        %v1032 = vld [vmem:[#allocation6 + $0x20] sm:$0xff]
        %v1033 = vld [vmem:[#allocation6 + $0x28] sm:$0xff]
        %v1034 = vld [vmem:[#allocation6 + $0x30] sm:$0xff]
        %v1035 = vld [vmem:[#allocation6 + $0x38] sm:$0xff]
        %v1036 = vld [vmem:[#allocation6 + $0x40] sm:$0xff]
        %v1037 = vld [vmem:[#allocation6 + $0x48] sm:$0xff]
        %v1038 = vld [vmem:[#allocation6 + $0x50] sm:$0xff]
        %v1039 = vld [vmem:[#allocation6 + $0x58] sm:$0xff]
        %v1040 = vld [vmem:[#allocation6 + $0x60] sm:$0xff]
        %v1041 = vld [vmem:[#allocation6 + $0x68] sm:$0xff]
        %v1042 = vld [vmem:[#allocation6 + $0x70] sm:$0xff]
        %v1043 = vld [vmem:[#allocation6 + $0x78] sm:$0xff]
        %v1044 = vld [vmem:[#allocation6 + $0x80] sm:$0xff]
        %v1045 = vld [vmem:[#allocation6 + $0x88] sm:$0xff]
        %v1046 = vld [vmem:[#allocation6 + $0x90] sm:$0xff]
        %v1047 = vld [vmem:[#allocation6 + $0x98] sm:$0xff]
        %v1048 = vld [vmem:[#allocation6 + $0xa0] sm:$0xff]
        %v1049 = vld [vmem:[#allocation6 + $0xa8] sm:$0xff]
        %v1050 = vld [vmem:[#allocation6 + $0xb0] sm:$0xff]
        %v1051 = vld [vmem:[#allocation6 + $0xb8] sm:$0xff]
        %v1052 = vld [vmem:[#allocation6 + $0xc0] sm:$0xff]
        %v1053 = vld [vmem:[#allocation6 + $0xc8] sm:$0xff]
        %v1054 = vld [vmem:[#allocation6 + $0xd0] sm:$0xff]
        %v1055 = vld [vmem:[#allocation6 + $0xd8] sm:$0xff]
        %v1056 = vld [vmem:[#allocation6 + $0xe0] sm:$0xff]
        %v1057 = vld [vmem:[#allocation6 + $0xe8] sm:$0xff]
        %v1058 = vld [vmem:[#allocation6 + $0xf0] sm:$0xff]
        %v1059 = vld [vmem:[#allocation6 + $0xf8] sm:$0xff]
        %v1060 = vld [vmem:[#allocation6 + $0x100] sm:$0xff]
        %v1061 = vld [vmem:[#allocation6 + $0x108] sm:$0xff]
        %v1062 = vld [vmem:[#allocation6 + $0x110] sm:$0xff]
        %v1063 = vld [vmem:[#allocation6 + $0x118] sm:$0xff]
        %v1064 = vld [vmem:[%s6] sm:$0xff]
        %v1065 = vld [vmem:[%s6 + $0x8] sm:$0xff]
        %v1066 = vld [vmem:[%s6 + $0x10] sm:$0xff]
        %v1067 = vld [vmem:[%s6 + $0x18] sm:$0xff]
        %1069 = vset.pattern.permute.xlu0 0
        %1070 = vperm.xlu0 %1069, %v1064
        %v1071 = vpop.permute.xlu0 %1070
        %1074 = vset.pattern.permute.xlu0 0
        %1075 = vperm.xlu0 %1074, %v1065
        %v1076 = vpop.permute.xlu0 %1075
        %1079 = vset.pattern.permute.xlu0 0
        %1080 = vperm.xlu0 %1079, %v1066
        %v1081 = vpop.permute.xlu0 %1080
        %1084 = vset.pattern.permute.xlu0 0
        %1085 = vperm.xlu0 %1084, %v1067
        %v1086 = vpop.permute.xlu0 %1085
        %vm1088 = vcmask 130048
        %v1090 = vsel %vm1088, %v1021, 0
        %v1093 = vsel %vm1088, %v1023, 0
        %v1096 = vsel %vm1088, %v1025, 0
        %v1099 = vsel %vm1088, %v1027, 0
        %1101 = vmatprep.subr.mxu0 %v1029
        %1102 = vmatpush1.msra.mxu0 %v1028
        %1103 = vmatprep.subr.mxu0 %v1031
        %1104 = vmatpush1.msra.mxu0 %v1030
        %1105 = vmatprep.subr.mxu0 %v1033
        %1106 = vmatpush1.msra.mxu0 %v1032
        %1107 = vmatprep.subr.mxu0 %v1035
        %1108 = vmatpush1.msra.mxu0 %v1034
        %1109 = vmatprep.subr.mxu0 %v1037
        %1110 = vmatpush1.msra.mxu0 %v1036
        %1111 = vmatprep.subr.mxu0 %v1039
        %1112 = vmatpush1.msra.mxu0 %v1038
        %1113 = vmatprep.subr.mxu0 %v1041
        %1114 = vmatpush1.msra.mxu0 %v1040
        %1115 = vmatprep.subr.mxu0 %v1043
        %1116 = vmatpush1.msra.mxu0 %v1042
        %1117 = vmatprep.subr.mxu0 %v1045
        %1118 = vmatpush1.msra.mxu0 %v1044
        %1119 = vmatprep.subr.mxu0 %v1047
        %1120 = vmatpush1.msra.mxu0 %v1046
        %1121 = vmatprep.subr.mxu0 %v1049
        %1122 = vmatpush1.msra.mxu0 %v1048
        %1123 = vmatprep.subr.mxu0 %v1051
        %1124 = vmatpush1.msra.mxu0 %v1050
        %1125 = vmatprep.subr.mxu0 %v1053
        %1126 = vmatpush1.msra.mxu0 %v1052
        %1127 = vmatprep.subr.mxu0 %v1055
        %1128 = vmatpush1.msra.mxu0 %v1054
        %1129 = vmatprep.subr.mxu0 %v1057
        %1130 = vmatpush1.msra.mxu0 %v1056
        %1131 = vmatprep.subr.mxu0 %v1059
        %1132 = vmatpush1.msra.mxu0 %v1058
        %1133 = vmatprep.subr.mxu0 %v1061
        %1134 = vmatpush1.msra.mxu0 %v1060
        %1135 = vmatprep.subr.mxu0 %v1063
        %1136 = vmatpush1.msra.mxu0 %v1062
        %1137 = vmatprep.subr.mxu0 0.0
        %1138 = vmatpush1.msra.mxu0 0.0
        %1139 = vmatprep.subr.mxu0 0.0
        %1140 = vmatpush1.msra.mxu0 0.0
        %1141 = vmatprep.subr.mxu0 0.0
        %1142 = vmatpush1.msra.mxu0 0.0
        %1143 = vmatprep.subr.mxu0 0.0
        %1144 = vmatpush1.msra.mxu0 0.0
        %1145 = vmatprep.subr.mxu0 0.0
        %1146 = vmatpush1.msra.mxu0 0.0
        %1147 = vmatprep.subr.mxu0 0.0
        %1148 = vmatpush1.msra.mxu0 0.0
        %1149 = vmatprep.subr.mxu0 0.0
        %1150 = vmatpush1.msra.mxu0 0.0
        %1151 = vmatprep.subr.mxu0 0.0
        %1152 = vmatpush1.msra.mxu0 0.0
        %1153 = vmatprep.subr.mxu0 0.0
        %1154 = vmatpush1.msra.mxu0 0.0
        %1155 = vmatprep.subr.mxu0 0.0
        %1156 = vmatpush1.msra.mxu0 0.0
        %1157 = vmatprep.subr.mxu0 0.0
        %1158 = vmatpush1.msra.mxu0 0.0
        %1159 = vmatprep.subr.mxu0 0.0
        %1160 = vmatpush1.msra.mxu0 0.0
        %1161 = vmatprep.subr.mxu0 0.0
        %1162 = vmatpush1.msra.mxu0 0.0
        %1163 = vmatprep.subr.mxu0 0.0
        %1164 = vmatpush1.msra.mxu0 0.0
        %1165 = vmatprep.mubr.f32.mxu0 %v1090
        %1166 = vmatmul.mubr.f32.gmra.mrb[0].mxu0 %v1020
        %v1167 = vpop.f32.mrb[0].mxu0
        %v1168 = vadd.f32 %v1071, %v1167
        %v1169 = vpop.f32.mrb[0].mxu0
        %v1170 = vadd.f32 %v1071, %v1169
        %1171 = vmatprep.mubr.f32.mxu0 %v1093
        %1172 = vmatmul.mubr.f32.gmra.mrb[0].mxu0 %v1022
        %v1173 = vpop.f32.mrb[0].mxu0
        %v1174 = vadd.f32 %v1076, %v1173
        %v1175 = vpop.f32.mrb[0].mxu0
        %v1176 = vadd.f32 %v1076, %v1175
        %1177 = vmatprep.mubr.f32.mxu0 %v1096
        %1178 = vmatmul.mubr.f32.gmra.mrb[0].mxu0 %v1024
        %v1179 = vpop.f32.mrb[0].mxu0
        %v1180 = vadd.f32 %v1081, %v1179
        %v1181 = vpop.f32.mrb[0].mxu0
        %v1182 = vadd.f32 %v1081, %v1181
        %1183 = vmatprep.mubr.f32.mxu0 %v1099
        %1184 = vmatmul.mubr.f32.gmra.mrb[0].mxu0 %v1026
        %v1185 = vpop.f32.mrb[0].mxu0
        %v1186 = vadd.f32 %v1086, %v1185
        %v1187 = vpop.f32.mrb[0].mxu0
        %v1188 = vadd.f32 %v1086, %v1187
        %1189 = vdwg.mxu0
        %v1190 = vmul.f32 %v1168, 0.2
        %v1191 = vmul.f32 %v1170, 0.2
        %v1192 = vmul.f32 %v1174, 0.2
        %v1193 = vmul.f32 %v1176, 0.2
        %v1194 = vmul.f32 %v1180, 0.2
        %v1195 = vmul.f32 %v1182, 0.2
        %v1196 = vmul.f32 %v1186, 0.2
        %v1197 = vmul.f32 %v1188, 0.2
        %v1198 = vmax.f32 %v1168, %v1190
        %v1199 = vmax.f32 %v1170, %v1191
        %v1200 = vmax.f32 %v1174, %v1192
        %v1201 = vmax.f32 %v1176, %v1193
        %v1202 = vmax.f32 %v1180, %v1194
        %v1203 = vmax.f32 %v1182, %v1195
        %v1204 = vmax.f32 %v1186, %v1196
        %v1205 = vmax.f32 %v1188, %v1197
        %1206 = vst [vmem:[#allocation7] sm:$0xff] %v1198
        %1207 = vst.msk [vmem:[#allocation7 + $0x8] sm:$0xff] %vm808, %v1199
        %1208 = vst [vmem:[#allocation7 + $0x10] sm:$0xff] %v1200
        %1209 = vst.msk [vmem:[#allocation7 + $0x18] sm:$0xff] %vm808, %v1201
        %1210 = vst [vmem:[#allocation7 + $0x20] sm:$0xff] %v1202
        %1211 = vst.msk [vmem:[#allocation7 + $0x28] sm:$0xff] %vm808, %v1203
        %1212 = vst [vmem:[#allocation7 + $0x30] sm:$0xff] %v1204
        %1213 = vst.msk [vmem:[#allocation7 + $0x38] sm:$0xff] %vm808, %v1205
        %v1214 = vld [vmem:[#allocation7] sm:$0xff]
        %v1215 = vld [vmem:[#allocation7 + $0x10] sm:$0xff]
        %v1216 = vld [vmem:[#allocation7 + $0x20] sm:$0xff]
        %v1217 = vld [vmem:[#allocation7 + $0x30] sm:$0xff]
        %vm1218 = vcmask 982016
        %1219 = vst.msk [vmem:[#allocation8] sm:$0xff] %vm1218, %v1214
        %1220 = vst.msk [vmem:[#allocation8 + $0x8] sm:$0xff] %vm1218, %v1215
        %1221 = vst.msk [vmem:[#allocation8 + $0x10] sm:$0xff] %vm1218, %v1216
        %1222 = vst.msk [vmem:[#allocation8 + $0x18] sm:$0xff] %vm1218, %v1217
        %v1223 = vld [vmem:[#allocation7] sm:$0xff]
        %v1224 = vld [vmem:[#allocation7 + $0x10] sm:$0xff]
        %v1225 = vld [vmem:[#allocation7 + $0x20] sm:$0xff]
        %v1226 = vld [vmem:[#allocation7 + $0x30] sm:$0xff]
        %1231 = vrot.lane.b32.xlu0 %v1223, 127
        %v1232 = vpop.permute.xlu0 %1231
        %1233 = vrot.lane.b32.xlu0 %v1224, 127
        %v1234 = vpop.permute.xlu0 %1233
        %1235 = vrot.lane.b32.xlu0 %v1225, 127
        %v1236 = vpop.permute.xlu0 %1235
        %1237 = vrot.lane.b32.xlu0 %v1226, 127
        %v1238 = vpop.permute.xlu0 %1237
        %1243 = vst.msk [vmem:[#allocation8 + $0x20] sm:$0xff] %vm1218, %v1232
        %1244 = vst.msk [vmem:[#allocation8 + $0x28] sm:$0xff] %vm1218, %v1234
        %1245 = vst.msk [vmem:[#allocation8 + $0x30] sm:$0xff] %vm1218, %v1236
        %1246 = vst.msk [vmem:[#allocation8 + $0x38] sm:$0xff] %vm1218, %v1238
        %v1247 = vld [vmem:[#allocation7] sm:$0xff]
        %v1248 = vld [vmem:[#allocation7 + $0x10] sm:$0xff]
        %v1249 = vld [vmem:[#allocation7 + $0x20] sm:$0xff]
        %v1250 = vld [vmem:[#allocation7 + $0x30] sm:$0xff]
        %1255 = vrot.lane.b32.xlu0 %v1247, 126
        %v1256 = vpop.permute.xlu0 %1255
        %1257 = vrot.lane.b32.xlu0 %v1248, 126
        %v1258 = vpop.permute.xlu0 %1257
        %1259 = vrot.lane.b32.xlu0 %v1249, 126
        %v1260 = vpop.permute.xlu0 %1259
        %1261 = vrot.lane.b32.xlu0 %v1250, 126
        %v1262 = vpop.permute.xlu0 %1261
        %1267 = vst.msk [vmem:[#allocation8 + $0x40] sm:$0xff] %vm1218, %v1256
        %1268 = vst.msk [vmem:[#allocation8 + $0x48] sm:$0xff] %vm1218, %v1258
        %1269 = vst.msk [vmem:[#allocation8 + $0x50] sm:$0xff] %vm1218, %v1260
        %1270 = vst.msk [vmem:[#allocation8 + $0x58] sm:$0xff] %vm1218, %v1262
        %v1271 = vld [vmem:[#allocation7] sm:$0xff]
        %v1272 = vld [vmem:[#allocation7 + $0x8] sm:$0xff]
        %v1273 = vld [vmem:[#allocation7 + $0x10] sm:$0xff]
        %v1274 = vld [vmem:[#allocation7 + $0x18] sm:$0xff]
        %v1275 = vld [vmem:[#allocation7 + $0x20] sm:$0xff]
        %v1276 = vld [vmem:[#allocation7 + $0x28] sm:$0xff]
        %v1277 = vld [vmem:[#allocation7 + $0x30] sm:$0xff]
        %v1278 = vld [vmem:[#allocation7 + $0x38] sm:$0xff]
        %1287 = vrot.lane.b32.xlu0 %v1271, 112
        %v1288 = vpop.permute.xlu0 %1287
        %1289 = vrot.lane.b32.xlu0 %v1272, 112
        %v1290 = vpop.permute.xlu0 %1289
        %1291 = vrot.lane.b32.xlu0 %v1273, 112
        %v1292 = vpop.permute.xlu0 %1291
        %1293 = vrot.lane.b32.xlu0 %v1274, 112
        %v1294 = vpop.permute.xlu0 %1293
        %1295 = vrot.lane.b32.xlu0 %v1275, 112
        %v1296 = vpop.permute.xlu0 %1295
        %1297 = vrot.lane.b32.xlu0 %v1276, 112
        %v1298 = vpop.permute.xlu0 %1297
        %1299 = vrot.lane.b32.xlu0 %v1277, 112
        %v1300 = vpop.permute.xlu0 %1299
        %1301 = vrot.lane.b32.xlu0 %v1278, 112
        %v1302 = vpop.permute.xlu0 %1301
        %v1303 = vsel %vm416, %v1288, %v1290
        %v1304 = vsel %vm416, %v1292, %v1294
        %v1305 = vsel %vm416, %v1296, %v1298
        %v1306 = vsel %vm416, %v1300, %v1302
        %1311 = vst.msk [vmem:[#allocation8 + $0x60] sm:$0xff] %vm1218, %v1303
        %1312 = vst.msk [vmem:[#allocation8 + $0x68] sm:$0xff] %vm1218, %v1304
        %1313 = vst.msk [vmem:[#allocation8 + $0x70] sm:$0xff] %vm1218, %v1305
        %1314 = vst.msk [vmem:[#allocation8 + $0x78] sm:$0xff] %vm1218, %v1306
        %v1315 = vld [vmem:[#allocation7] sm:$0xff]
        %v1316 = vld [vmem:[#allocation7 + $0x8] sm:$0xff]
        %v1317 = vld [vmem:[#allocation7 + $0x10] sm:$0xff]
        %v1318 = vld [vmem:[#allocation7 + $0x18] sm:$0xff]
        %v1319 = vld [vmem:[#allocation7 + $0x20] sm:$0xff]
        %v1320 = vld [vmem:[#allocation7 + $0x28] sm:$0xff]
        %v1321 = vld [vmem:[#allocation7 + $0x30] sm:$0xff]
        %v1322 = vld [vmem:[#allocation7 + $0x38] sm:$0xff]
        %1331 = vrot.lane.b32.xlu0 %v1315, 111
        %v1332 = vpop.permute.xlu0 %1331
        %1333 = vrot.lane.b32.xlu0 %v1316, 111
        %v1334 = vpop.permute.xlu0 %1333
        %1335 = vrot.lane.b32.xlu0 %v1317, 111
        %v1336 = vpop.permute.xlu0 %1335
        %1337 = vrot.lane.b32.xlu0 %v1318, 111
        %v1338 = vpop.permute.xlu0 %1337
        %1339 = vrot.lane.b32.xlu0 %v1319, 111
        %v1340 = vpop.permute.xlu0 %1339
        %1341 = vrot.lane.b32.xlu0 %v1320, 111
        %v1342 = vpop.permute.xlu0 %1341
        %1343 = vrot.lane.b32.xlu0 %v1321, 111
        %v1344 = vpop.permute.xlu0 %1343
        %1345 = vrot.lane.b32.xlu0 %v1322, 111
        %v1346 = vpop.permute.xlu0 %1345
        %v1347 = vsel %vm425, %v1332, %v1334
        %v1348 = vsel %vm425, %v1336, %v1338
        %v1349 = vsel %vm425, %v1340, %v1342
        %v1350 = vsel %vm425, %v1344, %v1346
        %1355 = vst.msk [vmem:[#allocation8 + $0x80] sm:$0xff] %vm1218, %v1347
        %1356 = vst.msk [vmem:[#allocation8 + $0x88] sm:$0xff] %vm1218, %v1348
        %1357 = vst.msk [vmem:[#allocation8 + $0x90] sm:$0xff] %vm1218, %v1349
        %1358 = vst.msk [vmem:[#allocation8 + $0x98] sm:$0xff] %vm1218, %v1350
        %v1359 = vld [vmem:[#allocation7] sm:$0xff]
        %v1360 = vld [vmem:[#allocation7 + $0x8] sm:$0xff]
        %v1361 = vld [vmem:[#allocation7 + $0x10] sm:$0xff]
        %v1362 = vld [vmem:[#allocation7 + $0x18] sm:$0xff]
        %v1363 = vld [vmem:[#allocation7 + $0x20] sm:$0xff]
        %v1364 = vld [vmem:[#allocation7 + $0x28] sm:$0xff]
        %v1365 = vld [vmem:[#allocation7 + $0x30] sm:$0xff]
        %v1366 = vld [vmem:[#allocation7 + $0x38] sm:$0xff]
        %1375 = vrot.lane.b32.xlu0 %v1359, 110
        %v1376 = vpop.permute.xlu0 %1375
        %1377 = vrot.lane.b32.xlu0 %v1360, 110
        %v1378 = vpop.permute.xlu0 %1377
        %1379 = vrot.lane.b32.xlu0 %v1361, 110
        %v1380 = vpop.permute.xlu0 %1379
        %1381 = vrot.lane.b32.xlu0 %v1362, 110
        %v1382 = vpop.permute.xlu0 %1381
        %1383 = vrot.lane.b32.xlu0 %v1363, 110
        %v1384 = vpop.permute.xlu0 %1383
        %1385 = vrot.lane.b32.xlu0 %v1364, 110
        %v1386 = vpop.permute.xlu0 %1385
        %1387 = vrot.lane.b32.xlu0 %v1365, 110
        %v1388 = vpop.permute.xlu0 %1387
        %1389 = vrot.lane.b32.xlu0 %v1366, 110
        %v1390 = vpop.permute.xlu0 %1389
        %v1391 = vsel %vm434, %v1376, %v1378
        %v1392 = vsel %vm434, %v1380, %v1382
        %v1393 = vsel %vm434, %v1384, %v1386
        %v1394 = vsel %vm434, %v1388, %v1390
        %1399 = vst.msk [vmem:[#allocation8 + $0xa0] sm:$0xff] %vm1218, %v1391
        %1400 = vst.msk [vmem:[#allocation8 + $0xa8] sm:$0xff] %vm1218, %v1392
        %1401 = vst.msk [vmem:[#allocation8 + $0xb0] sm:$0xff] %vm1218, %v1393
        %1402 = vst.msk [vmem:[#allocation8 + $0xb8] sm:$0xff] %vm1218, %v1394
        %v1403 = vld [vmem:[#allocation7] sm:$0xff]
        %v1404 = vld [vmem:[#allocation7 + $0x8] sm:$0xff]
        %v1405 = vld [vmem:[#allocation7 + $0x10] sm:$0xff]
        %v1406 = vld [vmem:[#allocation7 + $0x18] sm:$0xff]
        %v1407 = vld [vmem:[#allocation7 + $0x20] sm:$0xff]
        %v1408 = vld [vmem:[#allocation7 + $0x28] sm:$0xff]
        %v1409 = vld [vmem:[#allocation7 + $0x30] sm:$0xff]
        %v1410 = vld [vmem:[#allocation7 + $0x38] sm:$0xff]
        %1419 = vrot.lane.b32.xlu0 %v1403, 96
        %v1420 = vpop.permute.xlu0 %1419
        %1421 = vrot.lane.b32.xlu0 %v1404, 96
        %v1422 = vpop.permute.xlu0 %1421
        %1423 = vrot.lane.b32.xlu0 %v1405, 96
        %v1424 = vpop.permute.xlu0 %1423
        %1425 = vrot.lane.b32.xlu0 %v1406, 96
        %v1426 = vpop.permute.xlu0 %1425
        %1427 = vrot.lane.b32.xlu0 %v1407, 96
        %v1428 = vpop.permute.xlu0 %1427
        %1429 = vrot.lane.b32.xlu0 %v1408, 96
        %v1430 = vpop.permute.xlu0 %1429
        %1431 = vrot.lane.b32.xlu0 %v1409, 96
        %v1432 = vpop.permute.xlu0 %1431
        %1433 = vrot.lane.b32.xlu0 %v1410, 96
        %v1434 = vpop.permute.xlu0 %1433
        %v1435 = vsel %vm443, %v1420, %v1422
        %v1436 = vsel %vm443, %v1424, %v1426
        %v1437 = vsel %vm443, %v1428, %v1430
        %v1438 = vsel %vm443, %v1432, %v1434
        %1443 = vst.msk [vmem:[#allocation8 + $0xc0] sm:$0xff] %vm1218, %v1435
        %1444 = vst.msk [vmem:[#allocation8 + $0xc8] sm:$0xff] %vm1218, %v1436
        %1445 = vst.msk [vmem:[#allocation8 + $0xd0] sm:$0xff] %vm1218, %v1437
        %1446 = vst.msk [vmem:[#allocation8 + $0xd8] sm:$0xff] %vm1218, %v1438
        %v1447 = vld [vmem:[#allocation7] sm:$0xff]
        %v1448 = vld [vmem:[#allocation7 + $0x8] sm:$0xff]
        %v1449 = vld [vmem:[#allocation7 + $0x10] sm:$0xff]
        %v1450 = vld [vmem:[#allocation7 + $0x18] sm:$0xff]
        %v1451 = vld [vmem:[#allocation7 + $0x20] sm:$0xff]
        %v1452 = vld [vmem:[#allocation7 + $0x28] sm:$0xff]
        %v1453 = vld [vmem:[#allocation7 + $0x30] sm:$0xff]
        %v1454 = vld [vmem:[#allocation7 + $0x38] sm:$0xff]
        %1463 = vrot.lane.b32.xlu0 %v1447, 95
        %v1464 = vpop.permute.xlu0 %1463
        %1465 = vrot.lane.b32.xlu0 %v1448, 95
        %v1466 = vpop.permute.xlu0 %1465
        %1467 = vrot.lane.b32.xlu0 %v1449, 95
        %v1468 = vpop.permute.xlu0 %1467
        %1469 = vrot.lane.b32.xlu0 %v1450, 95
        %v1470 = vpop.permute.xlu0 %1469
        %1471 = vrot.lane.b32.xlu0 %v1451, 95
        %v1472 = vpop.permute.xlu0 %1471
        %1473 = vrot.lane.b32.xlu0 %v1452, 95
        %v1474 = vpop.permute.xlu0 %1473
        %1475 = vrot.lane.b32.xlu0 %v1453, 95
        %v1476 = vpop.permute.xlu0 %1475
        %1477 = vrot.lane.b32.xlu0 %v1454, 95
        %v1478 = vpop.permute.xlu0 %1477
        %v1479 = vsel %vm452, %v1464, %v1466
        %v1480 = vsel %vm452, %v1468, %v1470
        %v1481 = vsel %vm452, %v1472, %v1474
        %v1482 = vsel %vm452, %v1476, %v1478
        %1487 = vst.msk [vmem:[#allocation8 + $0xe0] sm:$0xff] %vm1218, %v1479
        %1488 = vst.msk [vmem:[#allocation8 + $0xe8] sm:$0xff] %vm1218, %v1480
        %1489 = vst.msk [vmem:[#allocation8 + $0xf0] sm:$0xff] %vm1218, %v1481
        %1490 = vst.msk [vmem:[#allocation8 + $0xf8] sm:$0xff] %vm1218, %v1482
        %v1491 = vld [vmem:[#allocation7] sm:$0xff]
        %v1492 = vld [vmem:[#allocation7 + $0x8] sm:$0xff]
        %v1493 = vld [vmem:[#allocation7 + $0x10] sm:$0xff]
        %v1494 = vld [vmem:[#allocation7 + $0x18] sm:$0xff]
        %v1495 = vld [vmem:[#allocation7 + $0x20] sm:$0xff]
        %v1496 = vld [vmem:[#allocation7 + $0x28] sm:$0xff]
        %v1497 = vld [vmem:[#allocation7 + $0x30] sm:$0xff]
        %v1498 = vld [vmem:[#allocation7 + $0x38] sm:$0xff]
        %1507 = vrot.lane.b32.xlu0 %v1491, 94
        %v1508 = vpop.permute.xlu0 %1507
        %1509 = vrot.lane.b32.xlu0 %v1492, 94
        %v1510 = vpop.permute.xlu0 %1509
        %1511 = vrot.lane.b32.xlu0 %v1493, 94
        %v1512 = vpop.permute.xlu0 %1511
        %1513 = vrot.lane.b32.xlu0 %v1494, 94
        %v1514 = vpop.permute.xlu0 %1513
        %1515 = vrot.lane.b32.xlu0 %v1495, 94
        %v1516 = vpop.permute.xlu0 %1515
        %1517 = vrot.lane.b32.xlu0 %v1496, 94
        %v1518 = vpop.permute.xlu0 %1517
        %1519 = vrot.lane.b32.xlu0 %v1497, 94
        %v1520 = vpop.permute.xlu0 %1519
        %1521 = vrot.lane.b32.xlu0 %v1498, 94
        %v1522 = vpop.permute.xlu0 %1521
        %v1523 = vsel %vm461, %v1508, %v1510
        %v1524 = vsel %vm461, %v1512, %v1514
        %v1525 = vsel %vm461, %v1516, %v1518
        %v1526 = vsel %vm461, %v1520, %v1522
        %1531 = vst.msk [vmem:[#allocation8 + $0x100] sm:$0xff] %vm1218, %v1523
        %1532 = vst.msk [vmem:[#allocation8 + $0x108] sm:$0xff] %vm1218, %v1524
        %1533 = vst.msk [vmem:[#allocation8 + $0x110] sm:$0xff] %vm1218, %v1525
        %1534 = vst.msk [vmem:[#allocation8 + $0x118] sm:$0xff] %vm1218, %v1526
        %v1535 = vld [vmem:[#allocation14] sm:$0xff]
        %v1536 = vld [vmem:[#allocation14 + $0x8] sm:$0xff]
        %v1537 = vld [vmem:[#allocation14 + $0x10] sm:$0xff]
        %v1538 = vld [vmem:[#allocation14 + $0x18] sm:$0xff]
        %v1539 = vld [vmem:[#allocation14 + $0x20] sm:$0xff]
        %v1540 = vld [vmem:[#allocation14 + $0x28] sm:$0xff]
        %v1541 = vld [vmem:[#allocation14 + $0x30] sm:$0xff]
        %v1542 = vld [vmem:[#allocation14 + $0x38] sm:$0xff]
        %v1543 = vld [vmem:[#allocation14 + $0x40] sm:$0xff]
        %v1544 = vld [vmem:[#allocation14 + $0x48] sm:$0xff]
        %v1545 = vld [vmem:[#allocation14 + $0x50] sm:$0xff]
        %v1546 = vld [vmem:[#allocation14 + $0x58] sm:$0xff]
        %v1547 = vld [vmem:[#allocation14 + $0x60] sm:$0xff]
        %v1548 = vld [vmem:[#allocation14 + $0x68] sm:$0xff]
        %v1549 = vld [vmem:[#allocation14 + $0x70] sm:$0xff]
        %v1550 = vld [vmem:[#allocation14 + $0x78] sm:$0xff]
        %v1551 = vld [vmem:[#allocation14 + $0x80] sm:$0xff]
        %v1552 = vld [vmem:[#allocation14 + $0x88] sm:$0xff]
        %v1553 = vld [vmem:[#allocation14 + $0x90] sm:$0xff]
        %v1554 = vld [vmem:[#allocation14 + $0x98] sm:$0xff]
        %v1555 = vld [vmem:[#allocation14 + $0xa0] sm:$0xff]
        %v1556 = vld [vmem:[#allocation14 + $0xa8] sm:$0xff]
        %v1557 = vld [vmem:[#allocation14 + $0xb0] sm:$0xff]
        %v1558 = vld [vmem:[#allocation14 + $0xb8] sm:$0xff]
        %v1559 = vld [vmem:[#allocation8] sm:$0xff]
        %v1560 = vld [vmem:[#allocation8 + $0x8] sm:$0xff]
        %v1561 = vld [vmem:[#allocation8 + $0x10] sm:$0xff]
        %v1562 = vld [vmem:[#allocation8 + $0x18] sm:$0xff]
        %v1563 = vld [vmem:[#allocation8 + $0x20] sm:$0xff]
        %v1564 = vld [vmem:[#allocation8 + $0x28] sm:$0xff]
        %v1565 = vld [vmem:[#allocation8 + $0x30] sm:$0xff]
        %v1566 = vld [vmem:[#allocation8 + $0x38] sm:$0xff]
        %v1567 = vld [vmem:[#allocation8 + $0x40] sm:$0xff]
        %v1568 = vld [vmem:[#allocation8 + $0x48] sm:$0xff]
        %v1569 = vld [vmem:[#allocation8 + $0x50] sm:$0xff]
        %v1570 = vld [vmem:[#allocation8 + $0x58] sm:$0xff]
        %v1571 = vld [vmem:[#allocation8 + $0x60] sm:$0xff]
        %v1572 = vld [vmem:[#allocation8 + $0x68] sm:$0xff]
        %v1573 = vld [vmem:[#allocation8 + $0x70] sm:$0xff]
        %v1574 = vld [vmem:[#allocation8 + $0x78] sm:$0xff]
        %v1575 = vld [vmem:[#allocation8 + $0x80] sm:$0xff]
        %v1576 = vld [vmem:[#allocation8 + $0x88] sm:$0xff]
        %v1577 = vld [vmem:[#allocation8 + $0x90] sm:$0xff]
        %v1578 = vld [vmem:[#allocation8 + $0x98] sm:$0xff]
        %v1579 = vld [vmem:[#allocation8 + $0xa0] sm:$0xff]
        %v1580 = vld [vmem:[#allocation8 + $0xa8] sm:$0xff]
        %v1581 = vld [vmem:[#allocation8 + $0xb0] sm:$0xff]
        %v1582 = vld [vmem:[#allocation8 + $0xb8] sm:$0xff]
        %v1583 = vld [vmem:[#allocation8 + $0xc0] sm:$0xff]
        %v1584 = vld [vmem:[#allocation8 + $0xc8] sm:$0xff]
        %v1585 = vld [vmem:[#allocation8 + $0xd0] sm:$0xff]
        %v1586 = vld [vmem:[#allocation8 + $0xd8] sm:$0xff]
        %v1587 = vld [vmem:[#allocation8 + $0xe0] sm:$0xff]
        %v1588 = vld [vmem:[#allocation8 + $0xe8] sm:$0xff]
        %v1589 = vld [vmem:[#allocation8 + $0xf0] sm:$0xff]
        %v1590 = vld [vmem:[#allocation8 + $0xf8] sm:$0xff]
        %v1591 = vld [vmem:[#allocation8 + $0x100] sm:$0xff]
        %v1592 = vld [vmem:[#allocation8 + $0x108] sm:$0xff]
        %v1593 = vld [vmem:[#allocation8 + $0x110] sm:$0xff]
        %v1594 = vld [vmem:[#allocation8 + $0x118] sm:$0xff]
        %v1595 = vld [vmem:[%s8] sm:$0xff]
        %v1596 = vld [vmem:[%s8 + $0x8] sm:$0xff]
        %v1597 = vld [vmem:[%s8 + $0x10] sm:$0xff]
        %v1598 = vld [vmem:[%s8 + $0x18] sm:$0xff]
        %v1599 = vld [vmem:[%s8 + $0x20] sm:$0xff]
        %v1600 = vld [vmem:[%s8 + $0x28] sm:$0xff]
        %v1601 = vld [vmem:[%s8 + $0x30] sm:$0xff]
        %v1602 = vld [vmem:[%s8 + $0x38] sm:$0xff]
        %1604 = vset.pattern.permute.xlu0 0
        %1605 = vperm.xlu0 %1604, %v1595
        %v1606 = vpop.permute.xlu0 %1605
        %1609 = vset.pattern.permute.xlu0 0
        %1610 = vperm.xlu0 %1609, %v1596
        %v1611 = vpop.permute.xlu0 %1610
        %1614 = vset.pattern.permute.xlu0 0
        %1615 = vperm.xlu0 %1614, %v1597
        %v1616 = vpop.permute.xlu0 %1615
        %1619 = vset.pattern.permute.xlu0 0
        %1620 = vperm.xlu0 %1619, %v1598
        %v1621 = vpop.permute.xlu0 %1620
        %1624 = vset.pattern.permute.xlu0 0
        %1625 = vperm.xlu0 %1624, %v1599
        %v1626 = vpop.permute.xlu0 %1625
        %1629 = vset.pattern.permute.xlu0 0
        %1630 = vperm.xlu0 %1629, %v1600
        %v1631 = vpop.permute.xlu0 %1630
        %1634 = vset.pattern.permute.xlu0 0
        %1635 = vperm.xlu0 %1634, %v1601
        %v1636 = vpop.permute.xlu0 %1635
        %1639 = vset.pattern.permute.xlu0 0
        %1640 = vperm.xlu0 %1639, %v1602
        %v1641 = vpop.permute.xlu0 %1640
        %vm1643 = vcmask 261120
        %v1645 = vsel %vm1643, %v1537, 0
        %v1648 = vsel %vm1643, %v1540, 0
        %v1651 = vsel %vm1643, %v1543, 0
        %v1654 = vsel %vm1643, %v1546, 0
        %v1657 = vsel %vm1643, %v1549, 0
        %v1660 = vsel %vm1643, %v1552, 0
        %v1663 = vsel %vm1643, %v1555, 0
        %v1666 = vsel %vm1643, %v1558, 0
        %1668 = vmatprep.subr.mxu0 0.0
        %1669 = vmatpush1.msra.mxu0 %v1559
        %1670 = vmatprep.subr.mxu0 0.0
        %1671 = vmatpush1.msra.mxu0 %v1560
        %1672 = vmatprep.subr.mxu0 0.0
        %1673 = vmatpush1.msra.mxu0 %v1561
        %1674 = vmatprep.subr.mxu0 0.0
        %1675 = vmatpush1.msra.mxu0 %v1562
        %1676 = vmatprep.subr.mxu0 0.0
        %1677 = vmatpush1.msra.mxu0 %v1563
        %1678 = vmatprep.subr.mxu0 0.0
        %1679 = vmatpush1.msra.mxu0 %v1564
        %1680 = vmatprep.subr.mxu0 0.0
        %1681 = vmatpush1.msra.mxu0 %v1565
        %1682 = vmatprep.subr.mxu0 0.0
        %1683 = vmatpush1.msra.mxu0 %v1566
        %1684 = vmatprep.subr.mxu0 0.0
        %1685 = vmatpush1.msra.mxu0 %v1567
        %1686 = vmatprep.subr.mxu0 0.0
        %1687 = vmatpush1.msra.mxu0 %v1568
        %1688 = vmatprep.subr.mxu0 0.0
        %1689 = vmatpush1.msra.mxu0 %v1569
        %1690 = vmatprep.subr.mxu0 0.0
        %1691 = vmatpush1.msra.mxu0 %v1570
        %1692 = vmatprep.subr.mxu0 0.0
        %1693 = vmatpush1.msra.mxu0 %v1571
        %1694 = vmatprep.subr.mxu0 0.0
        %1695 = vmatpush1.msra.mxu0 %v1572
        %1696 = vmatprep.subr.mxu0 0.0
        %1697 = vmatpush1.msra.mxu0 %v1573
        %1698 = vmatprep.subr.mxu0 0.0
        %1699 = vmatpush1.msra.mxu0 %v1574
        %1700 = vmatprep.subr.mxu0 0.0
        %1701 = vmatpush1.msra.mxu0 %v1575
        %1702 = vmatprep.subr.mxu0 0.0
        %1703 = vmatpush1.msra.mxu0 %v1576
        %1704 = vmatprep.subr.mxu0 0.0
        %1705 = vmatpush1.msra.mxu0 %v1577
        %1706 = vmatprep.subr.mxu0 0.0
        %1707 = vmatpush1.msra.mxu0 %v1578
        %1708 = vmatprep.subr.mxu0 0.0
        %1709 = vmatpush1.msra.mxu0 %v1579
        %1710 = vmatprep.subr.mxu0 0.0
        %1711 = vmatpush1.msra.mxu0 %v1580
        %1712 = vmatprep.subr.mxu0 0.0
        %1713 = vmatpush1.msra.mxu0 %v1581
        %1714 = vmatprep.subr.mxu0 0.0
        %1715 = vmatpush1.msra.mxu0 %v1582
        %1716 = vmatprep.subr.mxu0 0.0
        %1717 = vmatpush1.msra.mxu0 %v1583
        %1718 = vmatprep.subr.mxu0 0.0
        %1719 = vmatpush1.msra.mxu0 %v1584
        %1720 = vmatprep.subr.mxu0 0.0
        %1721 = vmatpush1.msra.mxu0 %v1585
        %1722 = vmatprep.subr.mxu0 0.0
        %1723 = vmatpush1.msra.mxu0 %v1586
        %1724 = vmatprep.subr.mxu0 0.0
        %1725 = vmatpush1.msra.mxu0 %v1587
        %1726 = vmatprep.subr.mxu0 0.0
        %1727 = vmatpush1.msra.mxu0 %v1588
        %1728 = vmatprep.subr.mxu0 0.0
        %1729 = vmatpush1.msra.mxu0 %v1589
        %1730 = vmatprep.subr.mxu0 0.0
        %1731 = vmatpush1.msra.mxu0 %v1590
        %1732 = vmatprep.mubr.f32.mxu0 %v1536
        %1733 = vmatmul.mubr.f32.gmra.mrb[0].mxu0 %v1535
        %v1734 = vpop.f32.mrb[0].mxu0
        %v1735 = vadd.f32 %v1606, %v1734
        %v1736 = vpop.f32.mrb[0].mxu0
        %1737 = vmatprep.mubr.f32.mxu0 %v1539
        %1738 = vmatmul.mubr.f32.gmra.mrb[0].mxu0 %v1538
        %v1739 = vpop.f32.mrb[0].mxu0
        %v1740 = vadd.f32 %v1611, %v1739
        %v1741 = vpop.f32.mrb[0].mxu0
        %1742 = vmatprep.mubr.f32.mxu0 %v1542
        %1743 = vmatmul.mubr.f32.gmra.mrb[0].mxu0 %v1541
        %v1744 = vpop.f32.mrb[0].mxu0
        %v1745 = vadd.f32 %v1616, %v1744
        %v1746 = vpop.f32.mrb[0].mxu0
        %1747 = vmatprep.mubr.f32.mxu0 %v1545
        %1748 = vmatmul.mubr.f32.gmra.mrb[0].mxu0 %v1544
        %v1749 = vpop.f32.mrb[0].mxu0
        %v1750 = vadd.f32 %v1621, %v1749
        %v1751 = vpop.f32.mrb[0].mxu0
        %1752 = vmatprep.mubr.f32.mxu0 %v1548
        %1753 = vmatmul.mubr.f32.gmra.mrb[0].mxu0 %v1547
        %v1754 = vpop.f32.mrb[0].mxu0
        %v1755 = vadd.f32 %v1626, %v1754
        %v1756 = vpop.f32.mrb[0].mxu0
        %1757 = vmatprep.mubr.f32.mxu0 %v1551
        %1758 = vmatmul.mubr.f32.gmra.mrb[0].mxu0 %v1550
        %v1759 = vpop.f32.mrb[0].mxu0
        %v1760 = vadd.f32 %v1631, %v1759
        %v1761 = vpop.f32.mrb[0].mxu0
        %1762 = vmatprep.mubr.f32.mxu0 %v1554
        %1763 = vmatmul.mubr.f32.gmra.mrb[0].mxu0 %v1553
        %v1764 = vpop.f32.mrb[0].mxu0
        %v1765 = vadd.f32 %v1636, %v1764
        %v1766 = vpop.f32.mrb[0].mxu0
        %1767 = vmatprep.mubr.f32.mxu0 %v1557
        %1768 = vmatmul.mubr.f32.gmra.mrb[0].mxu0 %v1556
        %v1769 = vpop.f32.mrb[0].mxu0
        %v1770 = vadd.f32 %v1641, %v1769
        %v1771 = vpop.f32.mrb[0].mxu0
        %1772 = vdwg.mxu0
        %1773 = vmatprep.subr.mxu0 0.0
        %1774 = vmatpush1.msra.mxu0 %v1591
        %1775 = vmatprep.subr.mxu0 0.0
        %1776 = vmatpush1.msra.mxu0 %v1592
        %1777 = vmatprep.subr.mxu0 0.0
        %1778 = vmatpush1.msra.mxu0 %v1593
        %1779 = vmatprep.subr.mxu0 0.0
        %1780 = vmatpush1.msra.mxu0 %v1594
        %1781 = vmatprep.subr.mxu0 0.0
        %1782 = vmatpush1.msra.mxu0 0.0
        %1783 = vmatprep.subr.mxu0 0.0
        %1784 = vmatpush1.msra.mxu0 0.0
        %1785 = vmatprep.subr.mxu0 0.0
        %1786 = vmatpush1.msra.mxu0 0.0
        %1787 = vmatprep.subr.mxu0 0.0
        %1788 = vmatpush1.msra.mxu0 0.0
        %1789 = vmatprep.subr.mxu0 0.0
        %1790 = vmatpush1.msra.mxu0 0.0
        %1791 = vmatprep.subr.mxu0 0.0
        %1792 = vmatpush1.msra.mxu0 0.0
        %1793 = vmatprep.subr.mxu0 0.0
        %1794 = vmatpush1.msra.mxu0 0.0
        %1795 = vmatprep.subr.mxu0 0.0
        %1796 = vmatpush1.msra.mxu0 0.0
        %1797 = vmatprep.subr.mxu0 0.0
        %1798 = vmatpush1.msra.mxu0 0.0
        %1799 = vmatprep.subr.mxu0 0.0
        %1800 = vmatpush1.msra.mxu0 0.0
        %1801 = vmatprep.subr.mxu0 0.0
        %1802 = vmatpush1.msra.mxu0 0.0
        %1803 = vmatprep.subr.mxu0 0.0
        %1804 = vmatpush1.msra.mxu0 0.0
        %1805 = vmatprep.subr.mxu0 0.0
        %1806 = vmatpush1.msra.mxu0 0.0
        %1807 = vmatprep.subr.mxu0 0.0
        %1808 = vmatpush1.msra.mxu0 0.0
        %1809 = vmatprep.subr.mxu0 0.0
        %1810 = vmatpush1.msra.mxu0 0.0
        %1811 = vmatprep.subr.mxu0 0.0
        %1812 = vmatpush1.msra.mxu0 0.0
        %1813 = vmatprep.subr.mxu0 0.0
        %1814 = vmatpush1.msra.mxu0 0.0
        %1815 = vmatprep.subr.mxu0 0.0
        %1816 = vmatpush1.msra.mxu0 0.0
        %1817 = vmatprep.subr.mxu0 0.0
        %1818 = vmatpush1.msra.mxu0 0.0
        %1819 = vmatprep.subr.mxu0 0.0
        %1820 = vmatpush1.msra.mxu0 0.0
        %1821 = vmatprep.subr.mxu0 0.0
        %1822 = vmatpush1.msra.mxu0 0.0
        %1823 = vmatprep.subr.mxu0 0.0
        %1824 = vmatpush1.msra.mxu0 0.0
        %1825 = vmatprep.subr.mxu0 0.0
        %1826 = vmatpush1.msra.mxu0 0.0
        %1827 = vmatprep.subr.mxu0 0.0
        %1828 = vmatpush1.msra.mxu0 0.0
        %1829 = vmatprep.subr.mxu0 0.0
        %1830 = vmatpush1.msra.mxu0 0.0
        %1831 = vmatprep.subr.mxu0 0.0
        %1832 = vmatpush1.msra.mxu0 0.0
        %1833 = vmatprep.subr.mxu0 0.0
        %1834 = vmatpush1.msra.mxu0 0.0
        %1835 = vmatprep.subr.mxu0 0.0
        %1836 = vmatpush1.msra.mxu0 0.0
        %1837 = vmatprep.mubr.f32.mxu0 0.0
        %1838 = vmatmul.mubr.f32.gmra.mrb[0].mxu0 %v1645
        %v1839 = vpop.f32.mrb[0].mxu0
        %v1840 = vadd.f32 %v1735, %v1839
        %v1841 = vpop.f32.mrb[0].mxu0
        %1842 = vmatprep.mubr.f32.mxu0 0.0
        %1843 = vmatmul.mubr.f32.gmra.mrb[0].mxu0 %v1648
        %v1844 = vpop.f32.mrb[0].mxu0
        %v1845 = vadd.f32 %v1740, %v1844
        %v1846 = vpop.f32.mrb[0].mxu0
        %1847 = vmatprep.mubr.f32.mxu0 0.0
        %1848 = vmatmul.mubr.f32.gmra.mrb[0].mxu0 %v1651
        %v1849 = vpop.f32.mrb[0].mxu0
        %v1850 = vadd.f32 %v1745, %v1849
        %v1851 = vpop.f32.mrb[0].mxu0
        %1852 = vmatprep.mubr.f32.mxu0 0.0
        %1853 = vmatmul.mubr.f32.gmra.mrb[0].mxu0 %v1654
        %v1854 = vpop.f32.mrb[0].mxu0
        %v1855 = vadd.f32 %v1750, %v1854
        %v1856 = vpop.f32.mrb[0].mxu0
        %1857 = vmatprep.mubr.f32.mxu0 0.0
        %1858 = vmatmul.mubr.f32.gmra.mrb[0].mxu0 %v1657
        %v1859 = vpop.f32.mrb[0].mxu0
        %v1860 = vadd.f32 %v1755, %v1859
        %v1861 = vpop.f32.mrb[0].mxu0
        %1862 = vmatprep.mubr.f32.mxu0 0.0
        %1863 = vmatmul.mubr.f32.gmra.mrb[0].mxu0 %v1660
        %v1864 = vpop.f32.mrb[0].mxu0
        %v1865 = vadd.f32 %v1760, %v1864
        %v1866 = vpop.f32.mrb[0].mxu0
        %1867 = vmatprep.mubr.f32.mxu0 0.0
        %1868 = vmatmul.mubr.f32.gmra.mrb[0].mxu0 %v1663
        %v1869 = vpop.f32.mrb[0].mxu0
        %v1870 = vadd.f32 %v1765, %v1869
        %v1871 = vpop.f32.mrb[0].mxu0
        %1872 = vmatprep.mubr.f32.mxu0 0.0
        %1873 = vmatmul.mubr.f32.gmra.mrb[0].mxu0 %v1666
        %v1874 = vpop.f32.mrb[0].mxu0
        %v1875 = vadd.f32 %v1770, %v1874
        %v1876 = vpop.f32.mrb[0].mxu0
        %1877 = vdwg.mxu0
        %v1878 = vmul.f32 %v1840, 0.2
        %v1879 = vmul.f32 %v1845, 0.2
        %v1880 = vmul.f32 %v1850, 0.2
        %v1881 = vmul.f32 %v1855, 0.2
        %v1882 = vmul.f32 %v1860, 0.2
        %v1883 = vmul.f32 %v1865, 0.2
        %v1884 = vmul.f32 %v1870, 0.2
        %v1885 = vmul.f32 %v1875, 0.2
        %v1886 = vmax.f32 %v1840, %v1878
        %v1887 = vmax.f32 %v1845, %v1879
        %v1888 = vmax.f32 %v1850, %v1880
        %v1889 = vmax.f32 %v1855, %v1881
        %v1890 = vmax.f32 %v1860, %v1882
        %v1891 = vmax.f32 %v1865, %v1883
        %v1892 = vmax.f32 %v1870, %v1884
        %v1893 = vmax.f32 %v1875, %v1885
        %vm1894 = vcmask 64512
        %1895 = vst.msk [vmem:[%s386] sm:$0xff] %vm1894, %v1886
        %1896 = vst.msk [vmem:[%s386 + $0x8] sm:$0xff] %vm1894, %v1887
        %1897 = vst.msk [vmem:[%s386 + $0x10] sm:$0xff] %vm1894, %v1888
        %1898 = vst.msk [vmem:[%s386 + $0x18] sm:$0xff] %vm1894, %v1889
        %1899 = vst.msk [vmem:[%s386 + $0x20] sm:$0xff] %vm1894, %v1890
        %1900 = vst.msk [vmem:[%s386 + $0x28] sm:$0xff] %vm1894, %v1891
        %1901 = vst.msk [vmem:[%s386 + $0x30] sm:$0xff] %vm1894, %v1892
        %1902 = vst.msk [vmem:[%s386 + $0x38] sm:$0xff] %vm1894, %v1893
        %1911 = vrot.lane.b32.xlu0 %v1886, 120
        %v1912 = vpop.permute.xlu0 %1911
        %1913 = vrot.lane.b32.xlu0 %v1887, 120
        %v1914 = vpop.permute.xlu0 %1913
        %1915 = vrot.lane.b32.xlu0 %v1888, 120
        %v1916 = vpop.permute.xlu0 %1915
        %1917 = vrot.lane.b32.xlu0 %v1889, 120
        %v1918 = vpop.permute.xlu0 %1917
        %1919 = vrot.lane.b32.xlu0 %v1890, 120
        %v1920 = vpop.permute.xlu0 %1919
        %1921 = vrot.lane.b32.xlu0 %v1891, 120
        %v1922 = vpop.permute.xlu0 %1921
        %1923 = vrot.lane.b32.xlu0 %v1892, 120
        %v1924 = vpop.permute.xlu0 %1923
        %1925 = vrot.lane.b32.xlu0 %v1893, 120
        %v1926 = vpop.permute.xlu0 %1925
        %vm1935 = vcmask 130112
        %1936 = vst.msk [vmem:[%s386] sm:$0xff] %vm1935, %v1912
        %1937 = vst.msk [vmem:[%s386 + $0x8] sm:$0xff] %vm1935, %v1914
        %1938 = vst.msk [vmem:[%s386 + $0x10] sm:$0xff] %vm1935, %v1916
        %1939 = vst.msk [vmem:[%s386 + $0x18] sm:$0xff] %vm1935, %v1918
        %1940 = vst.msk [vmem:[%s386 + $0x20] sm:$0xff] %vm1935, %v1920
        %1941 = vst.msk [vmem:[%s386 + $0x28] sm:$0xff] %vm1935, %v1922
        %1942 = vst.msk [vmem:[%s386 + $0x30] sm:$0xff] %vm1935, %v1924
        %1943 = vst.msk [vmem:[%s386 + $0x38] sm:$0xff] %vm1935, %v1926
        %1944 = vrot.lane.b32.xlu0 %v1886, 112
        %v1945 = vpop.permute.xlu0 %1944
        %1946 = vrot.lane.b32.xlu0 %v1887, 112
        %v1947 = vpop.permute.xlu0 %1946
        %1948 = vrot.lane.b32.xlu0 %v1888, 112
        %v1949 = vpop.permute.xlu0 %1948
        %1950 = vrot.lane.b32.xlu0 %v1889, 112
        %v1951 = vpop.permute.xlu0 %1950
        %1952 = vrot.lane.b32.xlu0 %v1890, 112
        %v1953 = vpop.permute.xlu0 %1952
        %1954 = vrot.lane.b32.xlu0 %v1891, 112
        %v1955 = vpop.permute.xlu0 %1954
        %1956 = vrot.lane.b32.xlu0 %v1892, 112
        %v1957 = vpop.permute.xlu0 %1956
        %1958 = vrot.lane.b32.xlu0 %v1893, 112
        %v1959 = vpop.permute.xlu0 %1958
        %vm1968 = vcmask 195712
        %1969 = vst.msk [vmem:[%s386] sm:$0xff] %vm1968, %v1945
        %1970 = vst.msk [vmem:[%s386 + $0x8] sm:$0xff] %vm1968, %v1947
        %1971 = vst.msk [vmem:[%s386 + $0x10] sm:$0xff] %vm1968, %v1949
        %1972 = vst.msk [vmem:[%s386 + $0x18] sm:$0xff] %vm1968, %v1951
        %1973 = vst.msk [vmem:[%s386 + $0x20] sm:$0xff] %vm1968, %v1953
        %1974 = vst.msk [vmem:[%s386 + $0x28] sm:$0xff] %vm1968, %v1955
        %1975 = vst.msk [vmem:[%s386 + $0x30] sm:$0xff] %vm1968, %v1957
        %1976 = vst.msk [vmem:[%s386 + $0x38] sm:$0xff] %vm1968, %v1959
        %1977 = vrot.lane.b32.xlu0 %v1886, 104
        %v1978 = vpop.permute.xlu0 %1977
        %1979 = vrot.lane.b32.xlu0 %v1887, 104
        %v1980 = vpop.permute.xlu0 %1979
        %1981 = vrot.lane.b32.xlu0 %v1888, 104
        %v1982 = vpop.permute.xlu0 %1981
        %1983 = vrot.lane.b32.xlu0 %v1889, 104
        %v1984 = vpop.permute.xlu0 %1983
        %1985 = vrot.lane.b32.xlu0 %v1890, 104
        %v1986 = vpop.permute.xlu0 %1985
        %1987 = vrot.lane.b32.xlu0 %v1891, 104
        %v1988 = vpop.permute.xlu0 %1987
        %1989 = vrot.lane.b32.xlu0 %v1892, 104
        %v1990 = vpop.permute.xlu0 %1989
        %1991 = vrot.lane.b32.xlu0 %v1893, 104
        %v1992 = vpop.permute.xlu0 %1991
        %vm2001 = vcmask 261312
        %2002 = vst.msk [vmem:[%s386] sm:$0xff] %vm2001, %v1978
        %2003 = vst.msk [vmem:[%s386 + $0x8] sm:$0xff] %vm2001, %v1980
        %2004 = vst.msk [vmem:[%s386 + $0x10] sm:$0xff] %vm2001, %v1982
        %2005 = vst.msk [vmem:[%s386 + $0x18] sm:$0xff] %vm2001, %v1984
        %2006 = vst.msk [vmem:[%s386 + $0x20] sm:$0xff] %vm2001, %v1986
        %2007 = vst.msk [vmem:[%s386 + $0x28] sm:$0xff] %vm2001, %v1988
        %2008 = vst.msk [vmem:[%s386 + $0x30] sm:$0xff] %vm2001, %v1990
        %2009 = vst.msk [vmem:[%s386 + $0x38] sm:$0xff] %vm2001, %v1992
        %2010 = vrot.lane.b32.xlu0 %v1886, 96
        %v2011 = vpop.permute.xlu0 %2010
        %2012 = vrot.lane.b32.xlu0 %v1887, 96
        %v2013 = vpop.permute.xlu0 %2012
        %2014 = vrot.lane.b32.xlu0 %v1888, 96
        %v2015 = vpop.permute.xlu0 %2014
        %2016 = vrot.lane.b32.xlu0 %v1889, 96
        %v2017 = vpop.permute.xlu0 %2016
        %2018 = vrot.lane.b32.xlu0 %v1890, 96
        %v2019 = vpop.permute.xlu0 %2018
        %2020 = vrot.lane.b32.xlu0 %v1891, 96
        %v2021 = vpop.permute.xlu0 %2020
        %2022 = vrot.lane.b32.xlu0 %v1892, 96
        %v2023 = vpop.permute.xlu0 %2022
        %2024 = vrot.lane.b32.xlu0 %v1893, 96
        %v2025 = vpop.permute.xlu0 %2024
        %vm2034 = vcmask 326912
        %2035 = vst.msk [vmem:[%s386] sm:$0xff] %vm2034, %v2011
        %2036 = vst.msk [vmem:[%s386 + $0x8] sm:$0xff] %vm2034, %v2013
        %2037 = vst.msk [vmem:[%s386 + $0x10] sm:$0xff] %vm2034, %v2015
        %2038 = vst.msk [vmem:[%s386 + $0x18] sm:$0xff] %vm2034, %v2017
        %2039 = vst.msk [vmem:[%s386 + $0x20] sm:$0xff] %vm2034, %v2019
        %2040 = vst.msk [vmem:[%s386 + $0x28] sm:$0xff] %vm2034, %v2021
        %2041 = vst.msk [vmem:[%s386 + $0x30] sm:$0xff] %vm2034, %v2023
        %2042 = vst.msk [vmem:[%s386 + $0x38] sm:$0xff] %vm2034, %v2025
        %2043 = vrot.lane.b32.xlu0 %v1886, 88
        %v2044 = vpop.permute.xlu0 %2043
        %2045 = vrot.lane.b32.xlu0 %v1887, 88
        %v2046 = vpop.permute.xlu0 %2045
        %2047 = vrot.lane.b32.xlu0 %v1888, 88
        %v2048 = vpop.permute.xlu0 %2047
        %2049 = vrot.lane.b32.xlu0 %v1889, 88
        %v2050 = vpop.permute.xlu0 %2049
        %2051 = vrot.lane.b32.xlu0 %v1890, 88
        %v2052 = vpop.permute.xlu0 %2051
        %2053 = vrot.lane.b32.xlu0 %v1891, 88
        %v2054 = vpop.permute.xlu0 %2053
        %2055 = vrot.lane.b32.xlu0 %v1892, 88
        %v2056 = vpop.permute.xlu0 %2055
        %2057 = vrot.lane.b32.xlu0 %v1893, 88
        %v2058 = vpop.permute.xlu0 %2057
        %vm2067 = vcmask 392512
        %2068 = vst.msk [vmem:[%s386] sm:$0xff] %vm2067, %v2044
        %2069 = vst.msk [vmem:[%s386 + $0x8] sm:$0xff] %vm2067, %v2046
        %2070 = vst.msk [vmem:[%s386 + $0x10] sm:$0xff] %vm2067, %v2048
        %2071 = vst.msk [vmem:[%s386 + $0x18] sm:$0xff] %vm2067, %v2050
        %2072 = vst.msk [vmem:[%s386 + $0x20] sm:$0xff] %vm2067, %v2052
        %2073 = vst.msk [vmem:[%s386 + $0x28] sm:$0xff] %vm2067, %v2054
        %2074 = vst.msk [vmem:[%s386 + $0x30] sm:$0xff] %vm2067, %v2056
        %2075 = vst.msk [vmem:[%s386 + $0x38] sm:$0xff] %vm2067, %v2058
        %2076 = vrot.lane.b32.xlu0 %v1886, 80
        %v2077 = vpop.permute.xlu0 %2076
        %2078 = vrot.lane.b32.xlu0 %v1887, 80
        %v2079 = vpop.permute.xlu0 %2078
        %2080 = vrot.lane.b32.xlu0 %v1888, 80
        %v2081 = vpop.permute.xlu0 %2080
        %2082 = vrot.lane.b32.xlu0 %v1889, 80
        %v2083 = vpop.permute.xlu0 %2082
        %2084 = vrot.lane.b32.xlu0 %v1890, 80
        %v2085 = vpop.permute.xlu0 %2084
        %2086 = vrot.lane.b32.xlu0 %v1891, 80
        %v2087 = vpop.permute.xlu0 %2086
        %2088 = vrot.lane.b32.xlu0 %v1892, 80
        %v2089 = vpop.permute.xlu0 %2088
        %2090 = vrot.lane.b32.xlu0 %v1893, 80
        %v2091 = vpop.permute.xlu0 %2090
        %vm2100 = vcmask 458112
        %2101 = vst.msk [vmem:[%s386] sm:$0xff] %vm2100, %v2077
        %2102 = vst.msk [vmem:[%s386 + $0x8] sm:$0xff] %vm2100, %v2079
        %2103 = vst.msk [vmem:[%s386 + $0x10] sm:$0xff] %vm2100, %v2081
        %2104 = vst.msk [vmem:[%s386 + $0x18] sm:$0xff] %vm2100, %v2083
        %2105 = vst.msk [vmem:[%s386 + $0x20] sm:$0xff] %vm2100, %v2085
        %2106 = vst.msk [vmem:[%s386 + $0x28] sm:$0xff] %vm2100, %v2087
        %2107 = vst.msk [vmem:[%s386 + $0x30] sm:$0xff] %vm2100, %v2089
        %2108 = vst.msk [vmem:[%s386 + $0x38] sm:$0xff] %vm2100, %v2091
        %2109 = vrot.lane.b32.xlu0 %v1886, 72
        %v2110 = vpop.permute.xlu0 %2109
        %2111 = vrot.lane.b32.xlu0 %v1887, 72
        %v2112 = vpop.permute.xlu0 %2111
        %2113 = vrot.lane.b32.xlu0 %v1888, 72
        %v2114 = vpop.permute.xlu0 %2113
        %2115 = vrot.lane.b32.xlu0 %v1889, 72
        %v2116 = vpop.permute.xlu0 %2115
        %2117 = vrot.lane.b32.xlu0 %v1890, 72
        %v2118 = vpop.permute.xlu0 %2117
        %2119 = vrot.lane.b32.xlu0 %v1891, 72
        %v2120 = vpop.permute.xlu0 %2119
        %2121 = vrot.lane.b32.xlu0 %v1892, 72
        %v2122 = vpop.permute.xlu0 %2121
        %2123 = vrot.lane.b32.xlu0 %v1893, 72
        %v2124 = vpop.permute.xlu0 %2123
        %vm2133 = vcmask 523712
        %2134 = vst.msk [vmem:[%s386] sm:$0xff] %vm2133, %v2110
        %2135 = vst.msk [vmem:[%s386 + $0x8] sm:$0xff] %vm2133, %v2112
        %2136 = vst.msk [vmem:[%s386 + $0x10] sm:$0xff] %vm2133, %v2114
        %2137 = vst.msk [vmem:[%s386 + $0x18] sm:$0xff] %vm2133, %v2116
        %2138 = vst.msk [vmem:[%s386 + $0x20] sm:$0xff] %vm2133, %v2118
        %2139 = vst.msk [vmem:[%s386 + $0x28] sm:$0xff] %vm2133, %v2120
        %2140 = vst.msk [vmem:[%s386 + $0x30] sm:$0xff] %vm2133, %v2122
        %2141 = vst.msk [vmem:[%s386 + $0x38] sm:$0xff] %vm2133, %v2124
        %p2142 = scmp.lt.s32.totalorder %s23, 1
        %s2143 = scalar_select %p2142, %s23, 1
        %s2144 = smul.addr %s2143, 8
        %s2145 = smul.addr %s2144, 8
        %s2146 = scalar_lea.vmem %s9, %s2145
        // Predicated region
        $region73: #{base_conv_model.2} parent=55 // pred_check
          %p2147 = pneg %p235
        $region74: #{base_conv_model.2} parent=55 // pred_check_branch
          %2149 = sbr.rel (%p2147) target = $region76
        $region75: #{base_conv_model.2} parent=55 // pred_region
          _
        $region76: #{base_conv_model.2} parent=55 // pred_fallthru
          _
      $region56: #{base_conv_model.2} parent=5 // pred_fallthru
        _
      %p2150 = scmp.le.s32.totalorder 2, %s18
      // Predicated region
      $region77: #{base_conv_model.2} parent=5 // pred_check
        %p2151 = pneg %p2150
      $region78: #{base_conv_model.2} parent=5 // pred_check_branch
        %2153 = sbr.rel (%p2151) target = $region80
      $region79: #{base_conv_model.2} parent=5 // pred_region
        %s2154 = ssub.s32 %s18, 2
        // Predicated region
        $region81: #{base_conv_model.2} parent=79 // pred_check
          %p2155 = pneg %p241
        $region82: #{base_conv_model.2} parent=79 // pred_check_branch
          %2157 = sbr.rel (%p2155) target = $region84
        $region83: #{base_conv_model.2} parent=79 // pred_region
          %p2158 = scmp.lt.s32.totalorder %s24, 1
          %s2159 = scalar_select %p2158, %s24, 1
          %s2160 = smul.addr %s2159, 8
          %s2161 = smul.addr %s2160, 8
          %s2162 = scalar_lea.vmem %s9, %s2161
        $region84: #{base_conv_model.2} parent=79 // pred_fallthru
          _
      $region80: #{base_conv_model.2} parent=5 // pred_fallthru
        _
    $region6: #{base_conv_model.2} parent=1 // loop_footer
      %s22 = sadd.s32 1, %s18
    $region7: #{base_conv_model.2} parent=1 // loop_footer_branch
      %17 = sbr.rel target = $region3
    $region8: #{base_conv_model.2} parent=1 // loop_exit
      _
    %2163 = vsyncpa [#allocation10], 1
    %s2164 = scalar_lea.sflag [#allocation10], 1
    %2165 = vsyncpa %s2164, 1
    %2166 = vsyncpa [#allocation12], 1
    %2167 = vsyncpa [#allocation15], 1

// kernel: base_conv_model.3
$region0: #{base_conv_model.3}
  #allocation0 [shape = 'u32[]', space=smem, size = 0x4, offset = 0x4, fixed_abs, tag = 'smem constant byte address 0x4 - core index']
  #allocation1 [shape = 'u32[144,128]{1,0:T(1,128)}', space=vmem, size = 0x12000, scoped, tag = 'internal scratch']
  #allocation2 [shape = 'f32[2,256]{1,0:T(2,128)}', space=vmem, size = 0x800, scoped, tag = 'scratch operand']
  %s0 = inlined_call_operand.vmem [shape: f32[2,64,64], index: 0, kind: input, shape index: {}]
  %s1 = inlined_call_operand.hbm [shape: f32[64,64,256], index: 1, kind: input, shape index: {}]
  %s2 = inlined_call_operand.hbm [shape: f32[1,256], index: 2, kind: input, shape index: {}]
  %s3 = inlined_call_operand.vmem [shape: f32[256,10], index: 3, kind: input, shape index: {}]
  %s4 = inlined_call_operand.hbm [shape: f32[1,10], index: 4, kind: input, shape index: {}]
  %s5 = inlined_call_operand.hbm [shape: f32[2,10], index: 5, kind: output, shape index: {}]
  %s6 = sld [smem:[#allocation0]]
  $region111: #{base_conv_model.3} parent=0
    _
  %s8 = ssub.s32 1, %s6
  %s9 = scalar_select 0, %s8, %s6
  $region1: #{base_conv_model.3} parent=0
    #allocation3 [shape = 'u8[32768]{0}', space=vmem, size = 0x8000, scoped, tag = 'input window, operand 0']
    #allocation4 [shape = 'u8[2097152]{0}', space=vmem, size = 0x200000, scoped, tag = 'input window, operand 1']
    #allocation5 [shape = 's32[2]{0}', space=sflag, size = 0x8, scoped, tag = 'scoped memory for base_conv_model.3']
    #allocation6 [shape = 's32[2]{0}', space=sflag, size = 0x8, scoped, tag = 'scoped memory for base_conv_model.3']
    #allocation7 [shape = 'u8[1024]{0}', space=vmem, size = 0x400, scoped, tag = 'input window, operand 2, single buffered']
    #allocation8 [shape = 's32[1]{0}', space=sflag, size = 0x4, scoped, tag = 'scoped memory for base_conv_model.3']
    #allocation9 [shape = 'u8[512]{0}', space=vmem, size = 0x400, scoped, tag = 'input window, operand 4, single buffered']
    #allocation10 [shape = 'u8[1024]{0}', space=vmem, size = 0x400, scoped, tag = 'output window, operand 0, single buffered']
    %10 = vsyncpa [#allocation5], 0
    %s11 = scalar_lea.sflag [#allocation5], 1
    %12 = vsyncpa %s11, 0
    %13 = vsyncpa [#allocation8], 0
    %14 = vsyncpa [#allocation6], 0
    loop: start=0, step=1, limit=6
    $region2: #{base_conv_model.3} parent=1 // loop_pre_header
      _
    $region3: #{base_conv_model.3} parent=1 // loop_header
      %s16 = sphi 0, %s20
      %p17 = scmp.ge.s32.totalorder %s16, 6
      %s26 = sphi 0, %s28
      %s29 = sphi 0, %s26
      %s30 = sphi 0, %s29
      %s46 = sphi 0, %s30
      %s52 = sphi 0, %s54
      %s55 = sphi 0, %s52
      %s56 = sphi 0, %s55
      %s72 = sphi 0, %s56
      %s76 = sphi 0, %s76
      %s78 = sphi 0, %s76
      %s79 = sphi 0, %s78
      %s93 = sphi 0, %s79
      %s97 = sphi 0, %s97
      %s99 = sphi 0, %s97
      %s100 = sphi 0, %s99
      %s114 = sphi 0, %s100
      %s118 = sphi 0, %s118
      %s120 = sphi 0, %s118
      %s121 = sphi 0, %s120
      %s135 = sphi 0, %s121
      %s139 = sphi 0, %s139
      %s141 = sphi 0, %s139
      %s142 = sphi 0, %s141
      %s156 = sphi 0, %s142
    $region4: #{base_conv_model.3} parent=1 // loop_header_branch
      %19 = sbr.rel (%p17) target = $region8
    $region5: #{base_conv_model.3} parent=1 // loop_body
      %s21 = ssub.s32 %s16, 1
      %s22 = ssub.s32 %s16, 2
      %s23 = sadd.s32 %s16, 1
      %s24 = ssub.s32 %s16, %s23
      %p25 = scmp.eq.s32.totalorder %s24, 0
      %s27 = sadd.s32 %s26, 1
      %s28 = scalar_select %p25, %s26, %s27
      %p31 = pneg %p25
      %p32 = scmp.eq.s32.totalorder %s16, 3
      %p33 = por %p31, %p32
      %p34 = scmp.ne.s32.totalorder %s26, %s29
      %p35 = scmp.eq.s32.totalorder %s16, 0
      %p36 = por %p34, %p35
      %p37 = scmp.ne.s32.totalorder %s26, %s29
      %p38 = scmp.eq.s32.totalorder %s21, 3
      %p39 = por %p37, %p38
      %p40 = scmp.ne.s32.totalorder %s29, %s30
      %p41 = scmp.eq.s32.totalorder %s21, 0
      %p42 = por %p40, %p41
      %p43 = scmp.ne.s32.totalorder %s29, %s30
      %p44 = scmp.eq.s32.totalorder %s22, 3
      %p45 = por %p43, %p44
      %p47 = scmp.ne.s32.totalorder %s30, %s46
      %p48 = scmp.eq.s32.totalorder %s22, 0
      %p49 = por %p47, %p48
      %s50 = ssub.s32 %s16, %s23
      %p51 = scmp.eq.s32.totalorder %s50, 0
      %s53 = sadd.s32 %s52, 1
      %s54 = scalar_select %p51, %s52, %s53
      %p57 = pneg %p51
      %p58 = scmp.eq.s32.totalorder %s16, 3
      %p59 = por %p57, %p58
      %p60 = scmp.ne.s32.totalorder %s52, %s55
      %p61 = scmp.eq.s32.totalorder %s16, 0
      %p62 = por %p60, %p61
      %p63 = scmp.ne.s32.totalorder %s52, %s55
      %p64 = scmp.eq.s32.totalorder %s21, 3
      %p65 = por %p63, %p64
      %p66 = scmp.ne.s32.totalorder %s55, %s56
      %p67 = scmp.eq.s32.totalorder %s21, 0
      %p68 = por %p66, %p67
      %p69 = scmp.ne.s32.totalorder %s55, %s56
      %p70 = scmp.eq.s32.totalorder %s22, 3
      %p71 = por %p69, %p70
      %p73 = scmp.ne.s32.totalorder %s56, %s72
      %p74 = scmp.eq.s32.totalorder %s22, 0
      %p75 = por %p73, %p74
      %s77 = sadd.s32 %s76, 1
      %p80 = scmp.eq.s32.totalorder %s16, 3
      %p81 = scmp.ne.s32.totalorder %s76, %s78
      %p82 = scmp.eq.s32.totalorder %s16, 0
      %p83 = por %p81, %p82
      %p84 = scmp.ne.s32.totalorder %s76, %s78
      %p85 = scmp.eq.s32.totalorder %s21, 3
      %p86 = por %p84, %p85
      %p87 = scmp.ne.s32.totalorder %s78, %s79
      %p88 = scmp.eq.s32.totalorder %s21, 0
      %p89 = por %p87, %p88
      %p90 = scmp.ne.s32.totalorder %s78, %s79
      %p91 = scmp.eq.s32.totalorder %s22, 3
      %p92 = por %p90, %p91
      %p94 = scmp.ne.s32.totalorder %s79, %s93
      %p95 = scmp.eq.s32.totalorder %s22, 0
      %p96 = por %p94, %p95
      %s98 = sadd.s32 %s97, 1
      %p101 = scmp.eq.s32.totalorder %s16, 3
      %p102 = scmp.ne.s32.totalorder %s97, %s99
      %p103 = scmp.eq.s32.totalorder %s16, 0
      %p104 = por %p102, %p103
      %p105 = scmp.ne.s32.totalorder %s97, %s99
      %p106 = scmp.eq.s32.totalorder %s21, 3
      %p107 = por %p105, %p106
      %p108 = scmp.ne.s32.totalorder %s99, %s100
      %p109 = scmp.eq.s32.totalorder %s21, 0
      %p110 = por %p108, %p109
      %p111 = scmp.ne.s32.totalorder %s99, %s100
      %p112 = scmp.eq.s32.totalorder %s22, 3
      %p113 = por %p111, %p112
      %p115 = scmp.ne.s32.totalorder %s100, %s114
      %p116 = scmp.eq.s32.totalorder %s22, 0
      %p117 = por %p115, %p116
      %s119 = sadd.s32 %s118, 1
      %p122 = scmp.eq.s32.totalorder %s16, 3
      %p123 = scmp.ne.s32.totalorder %s118, %s120
      %p124 = scmp.eq.s32.totalorder %s16, 0
      %p125 = por %p123, %p124
      %p126 = scmp.ne.s32.totalorder %s118, %s120
      %p127 = scmp.eq.s32.totalorder %s21, 3
      %p128 = por %p126, %p127
      %p129 = scmp.ne.s32.totalorder %s120, %s121
      %p130 = scmp.eq.s32.totalorder %s21, 0
      %p131 = por %p129, %p130
      %p132 = scmp.ne.s32.totalorder %s120, %s121
      %p133 = scmp.eq.s32.totalorder %s22, 3
      %p134 = por %p132, %p133
      %p136 = scmp.ne.s32.totalorder %s121, %s135
      %p137 = scmp.eq.s32.totalorder %s22, 0
      %p138 = por %p136, %p137
      %s140 = sadd.s32 %s139, 1
      %p143 = scmp.eq.s32.totalorder %s16, 3
      %p144 = scmp.ne.s32.totalorder %s139, %s141
      %p145 = scmp.eq.s32.totalorder %s16, 0
      %p146 = por %p144, %p145
      %p147 = scmp.ne.s32.totalorder %s139, %s141
      %p148 = scmp.eq.s32.totalorder %s21, 3
      %p149 = por %p147, %p148
      %p150 = scmp.ne.s32.totalorder %s141, %s142
      %p151 = scmp.eq.s32.totalorder %s21, 0
      %p152 = por %p150, %p151
      %p153 = scmp.ne.s32.totalorder %s141, %s142
      %p154 = scmp.eq.s32.totalorder %s22, 3
      %p155 = por %p153, %p154
      %p157 = scmp.ne.s32.totalorder %s142, %s156
      %p158 = scmp.eq.s32.totalorder %s22, 0
      %p159 = por %p157, %p158
      %p160 = scmp.le.s32.totalorder 1, %s16
      %p161 = scmp.lt.s32.totalorder %s16, 5
      %p162 = pnand %p160, %p161
      %p163 = pneg %p162
      // Predicated region
      $region9: #{base_conv_model.3} parent=5 // pred_check
        _
      $region10: #{base_conv_model.3} parent=5 // pred_check_branch
        %165 = sbr.rel (%p162) target = $region12
      $region11: #{base_conv_model.3} parent=5 // pred_region
        %s166 = ssub.s32 %s16, 1
        // Predicated region
        $region13: #{base_conv_model.3} parent=11 // pred_check
          %p167 = pneg %p89
        $region14: #{base_conv_model.3} parent=11 // pred_check_branch
          %169 = sbr.rel (%p167) target = $region16
        $region15: #{base_conv_model.3} parent=11 // pred_region
          %s171 = ssub.s32 32, 32
          %172 = vsyncadd [#allocation8], %s171
          %s174 = sshll.u32 [#allocation7], 4
          %s175 = int_to_ptr.vmem [resolvable:$true] %s174
          %177 = dma.hbm_to_vmem [thread:$0]  %s2, 32, %s175, [#allocation8]
        $region16: #{base_conv_model.3} parent=11 // pred_fallthru
          _
        // Predicated region
        $region17: #{base_conv_model.3} parent=11 // pred_check
          %p178 = pneg %p110
        $region18: #{base_conv_model.3} parent=11 // pred_check_branch
          %180 = sbr.rel (%p178) target = $region20
        $region19: #{base_conv_model.3} parent=11 // pred_region
          _
        $region20: #{base_conv_model.3} parent=11 // pred_fallthru
          _
        // Predicated region
        $region21: #{base_conv_model.3} parent=11 // pred_check
          %p181 = pneg %p131
        $region22: #{base_conv_model.3} parent=11 // pred_check_branch
          %183 = sbr.rel (%p181) target = $region24
        $region23: #{base_conv_model.3} parent=11 // pred_region
          %s185 = ssub.s32 16, 16
          %186 = vsyncadd [#allocation8], %s185
          %s188 = sshll.u32 [#allocation9], 4
          %s189 = int_to_ptr.vmem [resolvable:$true] %s188
          %191 = dma.hbm_to_vmem [thread:$0]  %s4, 16, %s189, [#allocation8]
        $region24: #{base_conv_model.3} parent=11 // pred_fallthru
          _
      $region12: #{base_conv_model.3} parent=5 // pred_fallthru
        _
      %p192 = scmp.lt.s32.totalorder %s16, 4
      // Predicated region
      $region25: #{base_conv_model.3} parent=5 // pred_check
        %p193 = pneg %p192
      $region26: #{base_conv_model.3} parent=5 // pred_check_branch
        %195 = sbr.rel (%p193) target = $region28
      $region27: #{base_conv_model.3} parent=5 // pred_region
        // Predicated region
        $region29: #{base_conv_model.3} parent=27 // pred_check
          %p196 = pneg %p36
        $region30: #{base_conv_model.3} parent=27 // pred_check_branch
          %198 = sbr.rel (%p196) target = $region32
        $region31: #{base_conv_model.3} parent=27 // pred_region
          %s199 = sand.u32 %s26, 1
          %s200 = sand.u32 %s26, 1
          %s201 = smul.addr %s200, 32
          %s202 = scalar_lea.vmem [#allocation3], %s201
          %s203 = smul.u32 2, %s16
          %s204 = smul.addr %s203, 8
          %s205 = scalar_lea.vmem %s0, %s204
          // Predicated region
          $region33: #{base_conv_model.3} parent=31 // pred_check
            _
          $region34: #{base_conv_model.3} parent=31 // pred_check_branch
            %207 = sbr.rel (0) target = $region36
          $region35: #{base_conv_model.3} parent=31 // pred_region
            // Predicated region
            $region37: #{base_conv_model.3} parent=35 // pred_check
              _
            $region38: #{base_conv_model.3} parent=35 // pred_check_branch
              %209 = sbr.rel (0) target = $region40
            $region39: #{base_conv_model.3} parent=35 // pred_region
              // Predicated region
              $region52: #{base_conv_model.3} parent=39 // pred_check
                _
              $region53: #{base_conv_model.3} parent=39 // pred_check_branch
                %230 = sbr.rel (0) target = $region55
              $region54: #{base_conv_model.3} parent=39 // pred_region
                loop: start=0, step=1, limit=1
                $region56: #{base_conv_model.3} parent=54 // loop_pre_header
                  _
                $region57: #{base_conv_model.3} parent=54 // loop_header
                  %s232 = sphi 0, %s236
                  %p233 = scmp.ge.s32.totalorder %s232, 1
                  %s237 = sphi %s205, %s205
                  %s238 = sphi %s202, %s202
                $region58: #{base_conv_model.3} parent=54 // loop_header_branch
                  %235 = sbr.rel (%p233) target = $region62
                $region59: #{base_conv_model.3} parent=54 // loop_body
                  %v239 = vld [vmem:[%s237] sm:$0xff]
                  %240 = vst [vmem:[%s238] sm:$0xff] %v239
                  %v241 = vld [vmem:[%s237 + $0x8] sm:$0xff]
                  %242 = vst [vmem:[%s238 + $0x8] sm:$0xff] %v241
                  %v243 = vld [vmem:[%s237 + $0x40] sm:$0xff]
                  %244 = vst [vmem:[%s238 + $0x10] sm:$0xff] %v243
                  %v245 = vld [vmem:[%s237 + $0x48] sm:$0xff]
                  %246 = vst [vmem:[%s238 + $0x18] sm:$0xff] %v245
                $region60: #{base_conv_model.3} parent=54 // loop_footer
                  %s236 = sadd.s32 1, %s232
                $region61: #{base_conv_model.3} parent=54 // loop_footer_branch
                  %231 = sbr.rel target = $region57
                $region62: #{base_conv_model.3} parent=54 // loop_exit
                  _
              $region55: #{base_conv_model.3} parent=39 // pred_fallthru
                _
              // Predicated region
              $region63: #{base_conv_model.3} parent=39 // pred_check
                _
              $region64: #{base_conv_model.3} parent=39 // pred_check_branch
                %248 = sbr.rel target = $region66
              $region65: #{base_conv_model.3} parent=39 // pred_region
                _
              $region66: #{base_conv_model.3} parent=39 // pred_fallthru
                _
            $region40: #{base_conv_model.3} parent=35 // pred_fallthru
              _
            // Predicated region
            $region41: #{base_conv_model.3} parent=35 // pred_check
              _
            $region42: #{base_conv_model.3} parent=35 // pred_check_branch
              %211 = sbr.rel target = $region44
            $region43: #{base_conv_model.3} parent=35 // pred_region
              loop: start=0, step=1, limit=1
              $region45: #{base_conv_model.3} parent=43 // loop_pre_header
                _
              $region46: #{base_conv_model.3} parent=43 // loop_header
                %s214 = sphi 0, %s218
                %p215 = scmp.ge.s32.totalorder %s214, 1
                %s219 = sphi %s205, %s205
                %s220 = sphi %s202, %s202
              $region47: #{base_conv_model.3} parent=43 // loop_header_branch
                %217 = sbr.rel (%p215) target = $region51
              $region48: #{base_conv_model.3} parent=43 // loop_body
                %v221 = vld [vmem:[%s219] sm:$0xff]
                %222 = vst [vmem:[%s220] sm:$0xff] %v221
                %v223 = vld [vmem:[%s219 + $0x8] sm:$0xff]
                %224 = vst [vmem:[%s220 + $0x8] sm:$0xff] %v223
                %v225 = vld [vmem:[%s219 + $0x40] sm:$0xff]
                %226 = vst [vmem:[%s220 + $0x10] sm:$0xff] %v225
                %v227 = vld [vmem:[%s219 + $0x48] sm:$0xff]
                %228 = vst [vmem:[%s220 + $0x18] sm:$0xff] %v227
              $region49: #{base_conv_model.3} parent=43 // loop_footer
                %s218 = sadd.s32 1, %s214
              $region50: #{base_conv_model.3} parent=43 // loop_footer_branch
                %213 = sbr.rel target = $region46
              $region51: #{base_conv_model.3} parent=43 // loop_exit
                _
            $region44: #{base_conv_model.3} parent=35 // pred_fallthru
              _
          $region36: #{base_conv_model.3} parent=31 // pred_fallthru
            _
          %249 = vnop
        $region32: #{base_conv_model.3} parent=27 // pred_fallthru
          _
        // Predicated region
        $region67: #{base_conv_model.3} parent=27 // pred_check
          %p250 = pneg %p62
        $region68: #{base_conv_model.3} parent=27 // pred_check_branch
          %252 = sbr.rel (%p250) target = $region70
        $region69: #{base_conv_model.3} parent=27 // pred_region
          %s253 = sand.u32 %s52, 1
          %s254 = scalar_lea.sflag [#allocation5], %s253
          %s255 = sand.u32 %s52, 1
          %s256 = smul.addr %s255, 2048
          %s257 = scalar_lea.vmem [#allocation4], %s256
          %s258 = smul.u32 16, %s16
          %s260 = ssub.s32 32768, 32768
          %261 = vsyncadd %s254, %s260
          %s262 = smul.addr %s258, 16
          %s263 = smul.addr %s262, 128
          %s264 = scalar_lea.hbm %s1, %s263
          %s265 = sshll.u32 %s257, 4
          %s266 = int_to_ptr.vmem [resolvable:$true] %s265
          %271 = dma.hbm_to_vmem [thread:$0]  %s264, 32768, %s266, %s254, 256, 256, 16
        $region70: #{base_conv_model.3} parent=27 // pred_fallthru
          _
      $region28: #{base_conv_model.3} parent=5 // pred_fallthru
        _
      %p272 = scmp.le.s32.totalorder 1, %s16
      %p273 = scmp.lt.s32.totalorder %s16, 5
      %p274 = pnand %p272, %p273
      %p275 = pneg %p274
      // Predicated region
      $region71: #{base_conv_model.3} parent=5 // pred_check
        _
      $region72: #{base_conv_model.3} parent=5 // pred_check_branch
        %277 = sbr.rel (%p274) target = $region74
      $region73: #{base_conv_model.3} parent=5 // pred_region
        %s278 = ssub.s32 %s16, 1
        %s279 = sand.u32 %s29, 1
        %s280 = sand.u32 %s29, 1
        %s281 = smul.addr %s280, 32
        %s282 = scalar_lea.vmem [#allocation3], %s281
        // Predicated region
        $region75: #{base_conv_model.3} parent=73 // pred_check
          %p283 = pneg %p42
        $region76: #{base_conv_model.3} parent=73 // pred_check_branch
          %285 = sbr.rel (%p283) target = $region78
        $region77: #{base_conv_model.3} parent=73 // pred_region
          _
        $region78: #{base_conv_model.3} parent=73 // pred_fallthru
          _
        %s286 = sand.u32 %s55, 1
        %s287 = scalar_lea.sflag [#allocation5], %s286
        %s288 = sand.u32 %s55, 1
        %s289 = smul.addr %s288, 2048
        %s290 = scalar_lea.vmem [#allocation4], %s289
        // Predicated region
        $region79: #{base_conv_model.3} parent=73 // pred_check
          %p291 = pneg %p68
        $region80: #{base_conv_model.3} parent=73 // pred_check_branch
          %293 = sbr.rel (%p291) target = $region82
        $region81: #{base_conv_model.3} parent=73 // pred_region
          %294 = dma.done %s287, 32768
        $region82: #{base_conv_model.3} parent=73 // pred_fallthru
          _
        // Predicated region
        $region83: #{base_conv_model.3} parent=73 // pred_check
          %p295 = pneg %p89
        $region84: #{base_conv_model.3} parent=73 // pred_check_branch
          %297 = sbr.rel (%p295) target = $region86
        $region85: #{base_conv_model.3} parent=73 // pred_region
          %298 = dma.done [#allocation8], 32
        $region86: #{base_conv_model.3} parent=73 // pred_fallthru
          _
        // Predicated region
        $region87: #{base_conv_model.3} parent=73 // pred_check
          %p299 = pneg %p131
        $region88: #{base_conv_model.3} parent=73 // pred_check_branch
          %301 = sbr.rel (%p299) target = $region90
        $region89: #{base_conv_model.3} parent=73 // pred_region
          %302 = dma.done [#allocation8], 16
        $region90: #{base_conv_model.3} parent=73 // pred_fallthru
          _
        %s303 = sand.u32 %s29, 1
        %s304 = sand.u32 %s29, 1
        %s305 = smul.addr %s304, 32
        %s306 = scalar_lea.vmem [#allocation3], %s305
        %p307 = pneg %p42
        %p308 = pneg %p39
        %s309 = sand.u32 %s55, 1
        %s310 = scalar_lea.sflag [#allocation5], %s309
        %s311 = sand.u32 %s55, 1
        %s312 = smul.addr %s311, 2048
        %s313 = scalar_lea.vmem [#allocation4], %s312
        %p314 = pneg %p68
        %p315 = pneg %p65
        %p316 = pneg %p89
        %p317 = pneg %p86
        %p318 = pneg %p110
        %p319 = pneg %p107
        %p320 = pneg %p131
        %p321 = pneg %p128
        %p322 = pneg %p152
        %p323 = pneg %p149
        %s324 = smul.u32 2, %s21
        %s325 = smul.u32 16, %s21
        %p326 = scmp.eq.s32.totalorder %s21, 0
        // Predicated region
        $region91: #{base_conv_model.3} parent=73 // pred_check
          %p327 = pneg %p326
        $region92: #{base_conv_model.3} parent=73 // pred_check_branch
          %329 = sbr.rel (%p327) target = $region94
        $region93: #{base_conv_model.3} parent=73 // pred_region
          %330 = vst [vmem:[#allocation2] sm:$0xf] 0.0
        $region94: #{base_conv_model.3} parent=73 // pred_fallthru
          _
        %v331 = vld [vmem:[#allocation2] sm:$0xf]
        %v332 = vld [vmem:[%s282] sm:$0x1]
        %v333 = vld [vmem:[%s282 + $0x10] sm:$0x1]
        %v334 = vld [vmem:[%s290] sm:$0xff]
        %v335 = vld [vmem:[%s290 + $0x8] sm:$0xff]
        %v336 = vld [vmem:[%s290 + $0x10] sm:$0xff]
        %v337 = vld [vmem:[%s290 + $0x18] sm:$0xff]
        %v338 = vld [vmem:[%s290 + $0x20] sm:$0xff]
        %v339 = vld [vmem:[%s290 + $0x28] sm:$0xff]
        %v340 = vld [vmem:[%s290 + $0x30] sm:$0xff]
        %v341 = vld [vmem:[%s290 + $0x38] sm:$0xff]
        %v342 = vld [vmem:[%s290 + $0x40] sm:$0xff]
        %v343 = vld [vmem:[%s290 + $0x48] sm:$0xff]
        %v344 = vld [vmem:[%s290 + $0x50] sm:$0xff]
        %v345 = vld [vmem:[%s290 + $0x58] sm:$0xff]
        %v346 = vld [vmem:[%s290 + $0x60] sm:$0xff]
        %v347 = vld [vmem:[%s290 + $0x68] sm:$0xff]
        %v348 = vld [vmem:[%s290 + $0x70] sm:$0xff]
        %v349 = vld [vmem:[%s290 + $0x78] sm:$0xff]
        %v352 = vrot.slane %v333, 7
        %vm353 = vcmask 1041409
        %v354 = vsel %vm353, %v352, %v332
        %vm355 = vcmask 523264
        %v356 = vsel %vm355, %v354, 0
        %358 = vmatprep.subr.mxu0 %v335
        %359 = vmatpush1.msra.mxu0 %v334
        %360 = vmatprep.subr.mxu0 %v337
        %361 = vmatpush1.msra.mxu0 %v336
        %362 = vmatprep.subr.mxu0 %v339
        %363 = vmatpush1.msra.mxu0 %v338
        %364 = vmatprep.subr.mxu0 %v341
        %365 = vmatpush1.msra.mxu0 %v340
        %366 = vmatprep.subr.mxu0 %v343
        %367 = vmatpush1.msra.mxu0 %v342
        %368 = vmatprep.subr.mxu0 %v345
        %369 = vmatpush1.msra.mxu0 %v344
        %370 = vmatprep.subr.mxu0 %v347
        %371 = vmatpush1.msra.mxu0 %v346
        %372 = vmatprep.subr.mxu0 %v349
        %373 = vmatpush1.msra.mxu0 %v348
        %374 = vmatprep.subr.mxu0 0.0
        %375 = vmatpush1.msra.mxu0 0.0
        %376 = vmatprep.subr.mxu0 0.0
        %377 = vmatpush1.msra.mxu0 0.0
        %378 = vmatprep.subr.mxu0 0.0
        %379 = vmatpush1.msra.mxu0 0.0
        %380 = vmatprep.subr.mxu0 0.0
        %381 = vmatpush1.msra.mxu0 0.0
        %382 = vmatprep.subr.mxu0 0.0
        %383 = vmatpush1.msra.mxu0 0.0
        %384 = vmatprep.subr.mxu0 0.0
        %385 = vmatpush1.msra.mxu0 0.0
        %386 = vmatprep.subr.mxu0 0.0
        %387 = vmatpush1.msra.mxu0 0.0
        %388 = vmatprep.subr.mxu0 0.0
        %389 = vmatpush1.msra.mxu0 0.0
        %390 = vmatprep.subr.mxu0 0.0
        %391 = vmatpush1.msra.mxu0 0.0
        %392 = vmatprep.subr.mxu0 0.0
        %393 = vmatpush1.msra.mxu0 0.0
        %394 = vmatprep.subr.mxu0 0.0
        %395 = vmatpush1.msra.mxu0 0.0
        %396 = vmatprep.subr.mxu0 0.0
        %397 = vmatpush1.msra.mxu0 0.0
        %398 = vmatprep.subr.mxu0 0.0
        %399 = vmatpush1.msra.mxu0 0.0
        %400 = vmatprep.subr.mxu0 0.0
        %401 = vmatpush1.msra.mxu0 0.0
        %402 = vmatprep.subr.mxu0 0.0
        %403 = vmatpush1.msra.mxu0 0.0
        %404 = vmatprep.subr.mxu0 0.0
        %405 = vmatpush1.msra.mxu0 0.0
        %406 = vmatprep.subr.mxu0 0.0
        %407 = vmatpush1.msra.mxu0 0.0
        %408 = vmatprep.subr.mxu0 0.0
        %409 = vmatpush1.msra.mxu0 0.0
        %410 = vmatprep.subr.mxu0 0.0
        %411 = vmatpush1.msra.mxu0 0.0
        %412 = vmatprep.subr.mxu0 0.0
        %413 = vmatpush1.msra.mxu0 0.0
        %414 = vmatprep.subr.mxu0 0.0
        %415 = vmatpush1.msra.mxu0 0.0
        %416 = vmatprep.subr.mxu0 0.0
        %417 = vmatpush1.msra.mxu0 0.0
        %418 = vmatprep.subr.mxu0 0.0
        %419 = vmatpush1.msra.mxu0 0.0
        %420 = vmatprep.subr.mxu0 0.0
        %421 = vmatpush1.msra.mxu0 0.0
        %422 = vmatprep.mubr.f32.mxu0 0.0
        %423 = vmatmul.mubr.f32.gmra.mrb[0].mxu0 %v356
        %v424 = vpop.f32.mrb[0].mxu0
        %v425 = vadd.f32 0.0, %v424
        %v426 = vpop.f32.mrb[0].mxu0
        %v427 = vadd.f32 0.0, %v426
        %428 = vdwg.mxu0
        %v431 = vcombine.low %v425, %v427
        %v433 = vunpack.c.l.s4 1983009808
        %v434 = vunpack.c.0.s8 %v433
        %v435 = vlaneseq
        %v436 = vshrl.u32 %v435, 7
        %v437 = vsub.s32 %v434, %v436
        %v438 = vrot.slane %v431, %v437
        %v440 = vadd.f32 %v331, %v438
        %v441 = vld [vmem:[%s282 + $0x1] sm:$0x1]
        %v442 = vld [vmem:[%s282 + $0x11] sm:$0x1]
        %s443 = scalar_lea.vmem %s290, 128 [#allocation4]
        %v444 = vld [vmem:[%s443] sm:$0xff]
        %v445 = vld [vmem:[%s443 + $0x8] sm:$0xff]
        %v446 = vld [vmem:[%s443 + $0x10] sm:$0xff]
        %v447 = vld [vmem:[%s443 + $0x18] sm:$0xff]
        %v448 = vld [vmem:[%s443 + $0x20] sm:$0xff]
        %v449 = vld [vmem:[%s443 + $0x28] sm:$0xff]
        %v450 = vld [vmem:[%s443 + $0x30] sm:$0xff]
        %v451 = vld [vmem:[%s443 + $0x38] sm:$0xff]
        %v452 = vld [vmem:[%s443 + $0x40] sm:$0xff]
        %v453 = vld [vmem:[%s443 + $0x48] sm:$0xff]
        %v454 = vld [vmem:[%s443 + $0x50] sm:$0xff]
        %v455 = vld [vmem:[%s443 + $0x58] sm:$0xff]
        %v456 = vld [vmem:[%s443 + $0x60] sm:$0xff]
        %v457 = vld [vmem:[%s443 + $0x68] sm:$0xff]
        %v458 = vld [vmem:[%s443 + $0x70] sm:$0xff]
        %v459 = vld [vmem:[%s443 + $0x78] sm:$0xff]
        %v462 = vrot.slane %v442, 7
        %v463 = vsel %vm353, %v462, %v441
        %v464 = vsel %vm355, %v463, 0
        %466 = vmatprep.subr.mxu0 %v445
        %467 = vmatpush1.msra.mxu0 %v444
        %468 = vmatprep.subr.mxu0 %v447
        %469 = vmatpush1.msra.mxu0 %v446
        %470 = vmatprep.subr.mxu0 %v449
        %471 = vmatpush1.msra.mxu0 %v448
        %472 = vmatprep.subr.mxu0 %v451
        %473 = vmatpush1.msra.mxu0 %v450
        %474 = vmatprep.subr.mxu0 %v453
        %475 = vmatpush1.msra.mxu0 %v452
        %476 = vmatprep.subr.mxu0 %v455
        %477 = vmatpush1.msra.mxu0 %v454
        %478 = vmatprep.subr.mxu0 %v457
        %479 = vmatpush1.msra.mxu0 %v456
        %480 = vmatprep.subr.mxu0 %v459
        %481 = vmatpush1.msra.mxu0 %v458
        %482 = vmatprep.subr.mxu0 0.0
        %483 = vmatpush1.msra.mxu0 0.0
        %484 = vmatprep.subr.mxu0 0.0
        %485 = vmatpush1.msra.mxu0 0.0
        %486 = vmatprep.subr.mxu0 0.0
        %487 = vmatpush1.msra.mxu0 0.0
        %488 = vmatprep.subr.mxu0 0.0
        %489 = vmatpush1.msra.mxu0 0.0
        %490 = vmatprep.subr.mxu0 0.0
        %491 = vmatpush1.msra.mxu0 0.0
        %492 = vmatprep.subr.mxu0 0.0
        %493 = vmatpush1.msra.mxu0 0.0
        %494 = vmatprep.subr.mxu0 0.0
        %495 = vmatpush1.msra.mxu0 0.0
        %496 = vmatprep.subr.mxu0 0.0
        %497 = vmatpush1.msra.mxu0 0.0
        %498 = vmatprep.subr.mxu0 0.0
        %499 = vmatpush1.msra.mxu0 0.0
        %500 = vmatprep.subr.mxu0 0.0
        %501 = vmatpush1.msra.mxu0 0.0
        %502 = vmatprep.subr.mxu0 0.0
        %503 = vmatpush1.msra.mxu0 0.0
        %504 = vmatprep.subr.mxu0 0.0
        %505 = vmatpush1.msra.mxu0 0.0
        %506 = vmatprep.subr.mxu0 0.0
        %507 = vmatpush1.msra.mxu0 0.0
        %508 = vmatprep.subr.mxu0 0.0
        %509 = vmatpush1.msra.mxu0 0.0
        %510 = vmatprep.subr.mxu0 0.0
        %511 = vmatpush1.msra.mxu0 0.0
        %512 = vmatprep.subr.mxu0 0.0
        %513 = vmatpush1.msra.mxu0 0.0
        %514 = vmatprep.subr.mxu0 0.0
        %515 = vmatpush1.msra.mxu0 0.0
        %516 = vmatprep.subr.mxu0 0.0
        %517 = vmatpush1.msra.mxu0 0.0
        %518 = vmatprep.subr.mxu0 0.0
        %519 = vmatpush1.msra.mxu0 0.0
        %520 = vmatprep.subr.mxu0 0.0
        %521 = vmatpush1.msra.mxu0 0.0
        %522 = vmatprep.subr.mxu0 0.0
        %523 = vmatpush1.msra.mxu0 0.0
        %524 = vmatprep.subr.mxu0 0.0
        %525 = vmatpush1.msra.mxu0 0.0
        %526 = vmatprep.subr.mxu0 0.0
        %527 = vmatpush1.msra.mxu0 0.0
        %528 = vmatprep.subr.mxu0 0.0
        %529 = vmatpush1.msra.mxu0 0.0
        %530 = vmatprep.mubr.f32.mxu0 0.0
        %531 = vmatmul.mubr.f32.gmra.mrb[0].mxu0 %v464
        %v532 = vpop.f32.mrb[0].mxu0
        %v533 = vadd.f32 0.0, %v532
        %v534 = vpop.f32.mrb[0].mxu0
        %v535 = vadd.f32 0.0, %v534
        %536 = vdwg.mxu0
        %v539 = vcombine.low %v533, %v535
        %v541 = vunpack.c.l.s4 1983009808
        %v542 = vunpack.c.0.s8 %v541
        %v543 = vlaneseq
        %v544 = vshrl.u32 %v543, 7
        %v545 = vsub.s32 %v542, %v544
        %v546 = vrot.slane %v539, %v545
        %v548 = vadd.f32 %v440, %v546
        %v549 = vld [vmem:[%s282 + $0x2] sm:$0x1]
        %v550 = vld [vmem:[%s282 + $0x12] sm:$0x1]
        %s551 = scalar_lea.vmem %s290, 256 [#allocation4]
        %v552 = vld [vmem:[%s551] sm:$0xff]
        %v553 = vld [vmem:[%s551 + $0x8] sm:$0xff]
        %v554 = vld [vmem:[%s551 + $0x10] sm:$0xff]
        %v555 = vld [vmem:[%s551 + $0x18] sm:$0xff]
        %v556 = vld [vmem:[%s551 + $0x20] sm:$0xff]
        %v557 = vld [vmem:[%s551 + $0x28] sm:$0xff]
        %v558 = vld [vmem:[%s551 + $0x30] sm:$0xff]
        %v559 = vld [vmem:[%s551 + $0x38] sm:$0xff]
        %v560 = vld [vmem:[%s551 + $0x40] sm:$0xff]
        %v561 = vld [vmem:[%s551 + $0x48] sm:$0xff]
        %v562 = vld [vmem:[%s551 + $0x50] sm:$0xff]
        %v563 = vld [vmem:[%s551 + $0x58] sm:$0xff]
        %v564 = vld [vmem:[%s551 + $0x60] sm:$0xff]
        %v565 = vld [vmem:[%s551 + $0x68] sm:$0xff]
        %v566 = vld [vmem:[%s551 + $0x70] sm:$0xff]
        %v567 = vld [vmem:[%s551 + $0x78] sm:$0xff]
        %v570 = vrot.slane %v550, 7
        %v571 = vsel %vm353, %v570, %v549
        %v572 = vsel %vm355, %v571, 0
        %574 = vmatprep.subr.mxu0 %v553
        %575 = vmatpush1.msra.mxu0 %v552
        %576 = vmatprep.subr.mxu0 %v555
        %577 = vmatpush1.msra.mxu0 %v554
        %578 = vmatprep.subr.mxu0 %v557
        %579 = vmatpush1.msra.mxu0 %v556
        %580 = vmatprep.subr.mxu0 %v559
        %581 = vmatpush1.msra.mxu0 %v558
        %582 = vmatprep.subr.mxu0 %v561
        %583 = vmatpush1.msra.mxu0 %v560
        %584 = vmatprep.subr.mxu0 %v563
        %585 = vmatpush1.msra.mxu0 %v562
        %586 = vmatprep.subr.mxu0 %v565
        %587 = vmatpush1.msra.mxu0 %v564
        %588 = vmatprep.subr.mxu0 %v567
        %589 = vmatpush1.msra.mxu0 %v566
        %590 = vmatprep.subr.mxu0 0.0
        %591 = vmatpush1.msra.mxu0 0.0
        %592 = vmatprep.subr.mxu0 0.0
        %593 = vmatpush1.msra.mxu0 0.0
        %594 = vmatprep.subr.mxu0 0.0
        %595 = vmatpush1.msra.mxu0 0.0
        %596 = vmatprep.subr.mxu0 0.0
        %597 = vmatpush1.msra.mxu0 0.0
        %598 = vmatprep.subr.mxu0 0.0
        %599 = vmatpush1.msra.mxu0 0.0
        %600 = vmatprep.subr.mxu0 0.0
        %601 = vmatpush1.msra.mxu0 0.0
        %602 = vmatprep.subr.mxu0 0.0
        %603 = vmatpush1.msra.mxu0 0.0
        %604 = vmatprep.subr.mxu0 0.0
        %605 = vmatpush1.msra.mxu0 0.0
        %606 = vmatprep.subr.mxu0 0.0
        %607 = vmatpush1.msra.mxu0 0.0
        %608 = vmatprep.subr.mxu0 0.0
        %609 = vmatpush1.msra.mxu0 0.0
        %610 = vmatprep.subr.mxu0 0.0
        %611 = vmatpush1.msra.mxu0 0.0
        %612 = vmatprep.subr.mxu0 0.0
        %613 = vmatpush1.msra.mxu0 0.0
        %614 = vmatprep.subr.mxu0 0.0
        %615 = vmatpush1.msra.mxu0 0.0
        %616 = vmatprep.subr.mxu0 0.0
        %617 = vmatpush1.msra.mxu0 0.0
        %618 = vmatprep.subr.mxu0 0.0
        %619 = vmatpush1.msra.mxu0 0.0
        %620 = vmatprep.subr.mxu0 0.0
        %621 = vmatpush1.msra.mxu0 0.0
        %622 = vmatprep.subr.mxu0 0.0
        %623 = vmatpush1.msra.mxu0 0.0
        %624 = vmatprep.subr.mxu0 0.0
        %625 = vmatpush1.msra.mxu0 0.0
        %626 = vmatprep.subr.mxu0 0.0
        %627 = vmatpush1.msra.mxu0 0.0
        %628 = vmatprep.subr.mxu0 0.0
        %629 = vmatpush1.msra.mxu0 0.0
        %630 = vmatprep.subr.mxu0 0.0
        %631 = vmatpush1.msra.mxu0 0.0
        %632 = vmatprep.subr.mxu0 0.0
        %633 = vmatpush1.msra.mxu0 0.0
        %634 = vmatprep.subr.mxu0 0.0
        %635 = vmatpush1.msra.mxu0 0.0
        %636 = vmatprep.subr.mxu0 0.0
        %637 = vmatpush1.msra.mxu0 0.0
        %638 = vmatprep.mubr.f32.mxu0 0.0
        %639 = vmatmul.mubr.f32.gmra.mrb[0].mxu0 %v572
        %v640 = vpop.f32.mrb[0].mxu0
        %v641 = vadd.f32 0.0, %v640
        %v642 = vpop.f32.mrb[0].mxu0
        %v643 = vadd.f32 0.0, %v642
        %644 = vdwg.mxu0
        %v647 = vcombine.low %v641, %v643
        %v649 = vunpack.c.l.s4 1983009808
        %v650 = vunpack.c.0.s8 %v649
        %v651 = vlaneseq
        %v652 = vshrl.u32 %v651, 7
        %v653 = vsub.s32 %v650, %v652
        %v654 = vrot.slane %v647, %v653
        %v656 = vadd.f32 %v548, %v654
        %v657 = vld [vmem:[%s282 + $0x3] sm:$0x1]
        %v658 = vld [vmem:[%s282 + $0x13] sm:$0x1]
        %s659 = scalar_lea.vmem %s290, 384 [#allocation4]
        %v660 = vld [vmem:[%s659] sm:$0xff]
        %v661 = vld [vmem:[%s659 + $0x8] sm:$0xff]
        %v662 = vld [vmem:[%s659 + $0x10] sm:$0xff]
        %v663 = vld [vmem:[%s659 + $0x18] sm:$0xff]
        %v664 = vld [vmem:[%s659 + $0x20] sm:$0xff]
        %v665 = vld [vmem:[%s659 + $0x28] sm:$0xff]
        %v666 = vld [vmem:[%s659 + $0x30] sm:$0xff]
        %v667 = vld [vmem:[%s659 + $0x38] sm:$0xff]
        %v668 = vld [vmem:[%s659 + $0x40] sm:$0xff]
        %v669 = vld [vmem:[%s659 + $0x48] sm:$0xff]
        %v670 = vld [vmem:[%s659 + $0x50] sm:$0xff]
        %v671 = vld [vmem:[%s659 + $0x58] sm:$0xff]
        %v672 = vld [vmem:[%s659 + $0x60] sm:$0xff]
        %v673 = vld [vmem:[%s659 + $0x68] sm:$0xff]
        %v674 = vld [vmem:[%s659 + $0x70] sm:$0xff]
        %v675 = vld [vmem:[%s659 + $0x78] sm:$0xff]
        %v678 = vrot.slane %v658, 7
        %v679 = vsel %vm353, %v678, %v657
        %v680 = vsel %vm355, %v679, 0
        %682 = vmatprep.subr.mxu0 %v661
        %683 = vmatpush1.msra.mxu0 %v660
        %684 = vmatprep.subr.mxu0 %v663
        %685 = vmatpush1.msra.mxu0 %v662
        %686 = vmatprep.subr.mxu0 %v665
        %687 = vmatpush1.msra.mxu0 %v664
        %688 = vmatprep.subr.mxu0 %v667
        %689 = vmatpush1.msra.mxu0 %v666
        %690 = vmatprep.subr.mxu0 %v669
        %691 = vmatpush1.msra.mxu0 %v668
        %692 = vmatprep.subr.mxu0 %v671
        %693 = vmatpush1.msra.mxu0 %v670
        %694 = vmatprep.subr.mxu0 %v673
        %695 = vmatpush1.msra.mxu0 %v672
        %696 = vmatprep.subr.mxu0 %v675
        %697 = vmatpush1.msra.mxu0 %v674
        %698 = vmatprep.subr.mxu0 0.0
        %699 = vmatpush1.msra.mxu0 0.0
        %700 = vmatprep.subr.mxu0 0.0
        %701 = vmatpush1.msra.mxu0 0.0
        %702 = vmatprep.subr.mxu0 0.0
        %703 = vmatpush1.msra.mxu0 0.0
        %704 = vmatprep.subr.mxu0 0.0
        %705 = vmatpush1.msra.mxu0 0.0
        %706 = vmatprep.subr.mxu0 0.0
        %707 = vmatpush1.msra.mxu0 0.0
        %708 = vmatprep.subr.mxu0 0.0
        %709 = vmatpush1.msra.mxu0 0.0
        %710 = vmatprep.subr.mxu0 0.0
        %711 = vmatpush1.msra.mxu0 0.0
        %712 = vmatprep.subr.mxu0 0.0
        %713 = vmatpush1.msra.mxu0 0.0
        %714 = vmatprep.subr.mxu0 0.0
        %715 = vmatpush1.msra.mxu0 0.0
        %716 = vmatprep.subr.mxu0 0.0
        %717 = vmatpush1.msra.mxu0 0.0
        %718 = vmatprep.subr.mxu0 0.0
        %719 = vmatpush1.msra.mxu0 0.0
        %720 = vmatprep.subr.mxu0 0.0
        %721 = vmatpush1.msra.mxu0 0.0
        %722 = vmatprep.subr.mxu0 0.0
        %723 = vmatpush1.msra.mxu0 0.0
        %724 = vmatprep.subr.mxu0 0.0
        %725 = vmatpush1.msra.mxu0 0.0
        %726 = vmatprep.subr.mxu0 0.0
        %727 = vmatpush1.msra.mxu0 0.0
        %728 = vmatprep.subr.mxu0 0.0
        %729 = vmatpush1.msra.mxu0 0.0
        %730 = vmatprep.subr.mxu0 0.0
        %731 = vmatpush1.msra.mxu0 0.0
        %732 = vmatprep.subr.mxu0 0.0
        %733 = vmatpush1.msra.mxu0 0.0
        %734 = vmatprep.subr.mxu0 0.0
        %735 = vmatpush1.msra.mxu0 0.0
        %736 = vmatprep.subr.mxu0 0.0
        %737 = vmatpush1.msra.mxu0 0.0
        %738 = vmatprep.subr.mxu0 0.0
        %739 = vmatpush1.msra.mxu0 0.0
        %740 = vmatprep.subr.mxu0 0.0
        %741 = vmatpush1.msra.mxu0 0.0
        %742 = vmatprep.subr.mxu0 0.0
        %743 = vmatpush1.msra.mxu0 0.0
        %744 = vmatprep.subr.mxu0 0.0
        %745 = vmatpush1.msra.mxu0 0.0
        %746 = vmatprep.mubr.f32.mxu0 0.0
        %747 = vmatmul.mubr.f32.gmra.mrb[0].mxu0 %v680
        %v748 = vpop.f32.mrb[0].mxu0
        %v749 = vadd.f32 0.0, %v748
        %v750 = vpop.f32.mrb[0].mxu0
        %v751 = vadd.f32 0.0, %v750
        %752 = vdwg.mxu0
        %v755 = vcombine.low %v749, %v751
        %v757 = vunpack.c.l.s4 1983009808
        %v758 = vunpack.c.0.s8 %v757
        %v759 = vlaneseq
        %v760 = vshrl.u32 %v759, 7
        %v761 = vsub.s32 %v758, %v760
        %v762 = vrot.slane %v755, %v761
        %v764 = vadd.f32 %v656, %v762
        %v765 = vld [vmem:[%s282 + $0x4] sm:$0x1]
        %v766 = vld [vmem:[%s282 + $0x14] sm:$0x1]
        %s767 = scalar_lea.vmem %s290, 512 [#allocation4]
        %v768 = vld [vmem:[%s767] sm:$0xff]
        %v769 = vld [vmem:[%s767 + $0x8] sm:$0xff]
        %v770 = vld [vmem:[%s767 + $0x10] sm:$0xff]
        %v771 = vld [vmem:[%s767 + $0x18] sm:$0xff]
        %v772 = vld [vmem:[%s767 + $0x20] sm:$0xff]
        %v773 = vld [vmem:[%s767 + $0x28] sm:$0xff]
        %v774 = vld [vmem:[%s767 + $0x30] sm:$0xff]
        %v775 = vld [vmem:[%s767 + $0x38] sm:$0xff]
        %v776 = vld [vmem:[%s767 + $0x40] sm:$0xff]
        %v777 = vld [vmem:[%s767 + $0x48] sm:$0xff]
        %v778 = vld [vmem:[%s767 + $0x50] sm:$0xff]
        %v779 = vld [vmem:[%s767 + $0x58] sm:$0xff]
        %v780 = vld [vmem:[%s767 + $0x60] sm:$0xff]
        %v781 = vld [vmem:[%s767 + $0x68] sm:$0xff]
        %v782 = vld [vmem:[%s767 + $0x70] sm:$0xff]
        %v783 = vld [vmem:[%s767 + $0x78] sm:$0xff]
        %v786 = vrot.slane %v766, 7
        %v787 = vsel %vm353, %v786, %v765
        %v788 = vsel %vm355, %v787, 0
        %790 = vmatprep.subr.mxu0 %v769
        %791 = vmatpush1.msra.mxu0 %v768
        %792 = vmatprep.subr.mxu0 %v771
        %793 = vmatpush1.msra.mxu0 %v770
        %794 = vmatprep.subr.mxu0 %v773
        %795 = vmatpush1.msra.mxu0 %v772
        %796 = vmatprep.subr.mxu0 %v775
        %797 = vmatpush1.msra.mxu0 %v774
        %798 = vmatprep.subr.mxu0 %v777
        %799 = vmatpush1.msra.mxu0 %v776
        %800 = vmatprep.subr.mxu0 %v779
        %801 = vmatpush1.msra.mxu0 %v778
        %802 = vmatprep.subr.mxu0 %v781
        %803 = vmatpush1.msra.mxu0 %v780
        %804 = vmatprep.subr.mxu0 %v783
        %805 = vmatpush1.msra.mxu0 %v782
        %806 = vmatprep.subr.mxu0 0.0
        %807 = vmatpush1.msra.mxu0 0.0
        %808 = vmatprep.subr.mxu0 0.0
        %809 = vmatpush1.msra.mxu0 0.0
        %810 = vmatprep.subr.mxu0 0.0
        %811 = vmatpush1.msra.mxu0 0.0
        %812 = vmatprep.subr.mxu0 0.0
        %813 = vmatpush1.msra.mxu0 0.0
        %814 = vmatprep.subr.mxu0 0.0
        %815 = vmatpush1.msra.mxu0 0.0
        %816 = vmatprep.subr.mxu0 0.0
        %817 = vmatpush1.msra.mxu0 0.0
        %818 = vmatprep.subr.mxu0 0.0
        %819 = vmatpush1.msra.mxu0 0.0
        %820 = vmatprep.subr.mxu0 0.0
        %821 = vmatpush1.msra.mxu0 0.0
        %822 = vmatprep.subr.mxu0 0.0
        %823 = vmatpush1.msra.mxu0 0.0
        %824 = vmatprep.subr.mxu0 0.0
        %825 = vmatpush1.msra.mxu0 0.0
        %826 = vmatprep.subr.mxu0 0.0
        %827 = vmatpush1.msra.mxu0 0.0
        %828 = vmatprep.subr.mxu0 0.0
        %829 = vmatpush1.msra.mxu0 0.0
        %830 = vmatprep.subr.mxu0 0.0
        %831 = vmatpush1.msra.mxu0 0.0
        %832 = vmatprep.subr.mxu0 0.0
        %833 = vmatpush1.msra.mxu0 0.0
        %834 = vmatprep.subr.mxu0 0.0
        %835 = vmatpush1.msra.mxu0 0.0
        %836 = vmatprep.subr.mxu0 0.0
        %837 = vmatpush1.msra.mxu0 0.0
        %838 = vmatprep.subr.mxu0 0.0
        %839 = vmatpush1.msra.mxu0 0.0
        %840 = vmatprep.subr.mxu0 0.0
        %841 = vmatpush1.msra.mxu0 0.0
        %842 = vmatprep.subr.mxu0 0.0
        %843 = vmatpush1.msra.mxu0 0.0
        %844 = vmatprep.subr.mxu0 0.0
        %845 = vmatpush1.msra.mxu0 0.0
        %846 = vmatprep.subr.mxu0 0.0
        %847 = vmatpush1.msra.mxu0 0.0
        %848 = vmatprep.subr.mxu0 0.0
        %849 = vmatpush1.msra.mxu0 0.0
        %850 = vmatprep.subr.mxu0 0.0
        %851 = vmatpush1.msra.mxu0 0.0
        %852 = vmatprep.subr.mxu0 0.0
        %853 = vmatpush1.msra.mxu0 0.0
        %854 = vmatprep.mubr.f32.mxu0 0.0
        %855 = vmatmul.mubr.f32.gmra.mrb[0].mxu0 %v788
        %v856 = vpop.f32.mrb[0].mxu0
        %v857 = vadd.f32 0.0, %v856
        %v858 = vpop.f32.mrb[0].mxu0
        %v859 = vadd.f32 0.0, %v858
        %860 = vdwg.mxu0
        %v863 = vcombine.low %v857, %v859
        %v865 = vunpack.c.l.s4 1983009808
        %v866 = vunpack.c.0.s8 %v865
        %v867 = vlaneseq
        %v868 = vshrl.u32 %v867, 7
        %v869 = vsub.s32 %v866, %v868
        %v870 = vrot.slane %v863, %v869
        %v872 = vadd.f32 %v764, %v870
        %v873 = vld [vmem:[%s282 + $0x5] sm:$0x1]
        %v874 = vld [vmem:[%s282 + $0x15] sm:$0x1]
        %s875 = scalar_lea.vmem %s290, 640 [#allocation4]
        %v876 = vld [vmem:[%s875] sm:$0xff]
        %v877 = vld [vmem:[%s875 + $0x8] sm:$0xff]
        %v878 = vld [vmem:[%s875 + $0x10] sm:$0xff]
        %v879 = vld [vmem:[%s875 + $0x18] sm:$0xff]
        %v880 = vld [vmem:[%s875 + $0x20] sm:$0xff]
        %v881 = vld [vmem:[%s875 + $0x28] sm:$0xff]
        %v882 = vld [vmem:[%s875 + $0x30] sm:$0xff]
        %v883 = vld [vmem:[%s875 + $0x38] sm:$0xff]
        %v884 = vld [vmem:[%s875 + $0x40] sm:$0xff]
        %v885 = vld [vmem:[%s875 + $0x48] sm:$0xff]
        %v886 = vld [vmem:[%s875 + $0x50] sm:$0xff]
        %v887 = vld [vmem:[%s875 + $0x58] sm:$0xff]
        %v888 = vld [vmem:[%s875 + $0x60] sm:$0xff]
        %v889 = vld [vmem:[%s875 + $0x68] sm:$0xff]
        %v890 = vld [vmem:[%s875 + $0x70] sm:$0xff]
        %v891 = vld [vmem:[%s875 + $0x78] sm:$0xff]
        %v894 = vrot.slane %v874, 7
        %v895 = vsel %vm353, %v894, %v873
        %v896 = vsel %vm355, %v895, 0
        %898 = vmatprep.subr.mxu0 %v877
        %899 = vmatpush1.msra.mxu0 %v876
        %900 = vmatprep.subr.mxu0 %v879
        %901 = vmatpush1.msra.mxu0 %v878
        %902 = vmatprep.subr.mxu0 %v881
        %903 = vmatpush1.msra.mxu0 %v880
        %904 = vmatprep.subr.mxu0 %v883
        %905 = vmatpush1.msra.mxu0 %v882
        %906 = vmatprep.subr.mxu0 %v885
        %907 = vmatpush1.msra.mxu0 %v884
        %908 = vmatprep.subr.mxu0 %v887
        %909 = vmatpush1.msra.mxu0 %v886
        %910 = vmatprep.subr.mxu0 %v889
        %911 = vmatpush1.msra.mxu0 %v888
        %912 = vmatprep.subr.mxu0 %v891
        %913 = vmatpush1.msra.mxu0 %v890
        %914 = vmatprep.subr.mxu0 0.0
        %915 = vmatpush1.msra.mxu0 0.0
        %916 = vmatprep.subr.mxu0 0.0
        %917 = vmatpush1.msra.mxu0 0.0
        %918 = vmatprep.subr.mxu0 0.0
        %919 = vmatpush1.msra.mxu0 0.0
        %920 = vmatprep.subr.mxu0 0.0
        %921 = vmatpush1.msra.mxu0 0.0
        %922 = vmatprep.subr.mxu0 0.0
        %923 = vmatpush1.msra.mxu0 0.0
        %924 = vmatprep.subr.mxu0 0.0
        %925 = vmatpush1.msra.mxu0 0.0
        %926 = vmatprep.subr.mxu0 0.0
        %927 = vmatpush1.msra.mxu0 0.0
        %928 = vmatprep.subr.mxu0 0.0
        %929 = vmatpush1.msra.mxu0 0.0
        %930 = vmatprep.subr.mxu0 0.0
        %931 = vmatpush1.msra.mxu0 0.0
        %932 = vmatprep.subr.mxu0 0.0
        %933 = vmatpush1.msra.mxu0 0.0
        %934 = vmatprep.subr.mxu0 0.0
        %935 = vmatpush1.msra.mxu0 0.0
        %936 = vmatprep.subr.mxu0 0.0
        %937 = vmatpush1.msra.mxu0 0.0
        %938 = vmatprep.subr.mxu0 0.0
        %939 = vmatpush1.msra.mxu0 0.0
        %940 = vmatprep.subr.mxu0 0.0
        %941 = vmatpush1.msra.mxu0 0.0
        %942 = vmatprep.subr.mxu0 0.0
        %943 = vmatpush1.msra.mxu0 0.0
        %944 = vmatprep.subr.mxu0 0.0
        %945 = vmatpush1.msra.mxu0 0.0
        %946 = vmatprep.subr.mxu0 0.0
        %947 = vmatpush1.msra.mxu0 0.0
        %948 = vmatprep.subr.mxu0 0.0
        %949 = vmatpush1.msra.mxu0 0.0
        %950 = vmatprep.subr.mxu0 0.0
        %951 = vmatpush1.msra.mxu0 0.0
        %952 = vmatprep.subr.mxu0 0.0
        %953 = vmatpush1.msra.mxu0 0.0
        %954 = vmatprep.subr.mxu0 0.0
        %955 = vmatpush1.msra.mxu0 0.0
        %956 = vmatprep.subr.mxu0 0.0
        %957 = vmatpush1.msra.mxu0 0.0
        %958 = vmatprep.subr.mxu0 0.0
        %959 = vmatpush1.msra.mxu0 0.0
        %960 = vmatprep.subr.mxu0 0.0
        %961 = vmatpush1.msra.mxu0 0.0
        %962 = vmatprep.mubr.f32.mxu0 0.0
        %963 = vmatmul.mubr.f32.gmra.mrb[0].mxu0 %v896
        %v964 = vpop.f32.mrb[0].mxu0
        %v965 = vadd.f32 0.0, %v964
        %v966 = vpop.f32.mrb[0].mxu0
        %v967 = vadd.f32 0.0, %v966
        %968 = vdwg.mxu0
        %v971 = vcombine.low %v965, %v967
        %v973 = vunpack.c.l.s4 1983009808
        %v974 = vunpack.c.0.s8 %v973
        %v975 = vlaneseq
        %v976 = vshrl.u32 %v975, 7
        %v977 = vsub.s32 %v974, %v976
        %v978 = vrot.slane %v971, %v977
        %v980 = vadd.f32 %v872, %v978
        %v981 = vld [vmem:[%s282 + $0x6] sm:$0x1]
        %v982 = vld [vmem:[%s282 + $0x16] sm:$0x1]
        %s983 = scalar_lea.vmem %s290, 768 [#allocation4]
        %v984 = vld [vmem:[%s983] sm:$0xff]
        %v985 = vld [vmem:[%s983 + $0x8] sm:$0xff]
        %v986 = vld [vmem:[%s983 + $0x10] sm:$0xff]
        %v987 = vld [vmem:[%s983 + $0x18] sm:$0xff]
        %v988 = vld [vmem:[%s983 + $0x20] sm:$0xff]
        %v989 = vld [vmem:[%s983 + $0x28] sm:$0xff]
        %v990 = vld [vmem:[%s983 + $0x30] sm:$0xff]
        %v991 = vld [vmem:[%s983 + $0x38] sm:$0xff]
        %v992 = vld [vmem:[%s983 + $0x40] sm:$0xff]
        %v993 = vld [vmem:[%s983 + $0x48] sm:$0xff]
        %v994 = vld [vmem:[%s983 + $0x50] sm:$0xff]
        %v995 = vld [vmem:[%s983 + $0x58] sm:$0xff]
        %v996 = vld [vmem:[%s983 + $0x60] sm:$0xff]
        %v997 = vld [vmem:[%s983 + $0x68] sm:$0xff]
        %v998 = vld [vmem:[%s983 + $0x70] sm:$0xff]
        %v999 = vld [vmem:[%s983 + $0x78] sm:$0xff]
        %v1002 = vrot.slane %v982, 7
        %v1003 = vsel %vm353, %v1002, %v981
        %v1004 = vsel %vm355, %v1003, 0
        %1006 = vmatprep.subr.mxu0 %v985
        %1007 = vmatpush1.msra.mxu0 %v984
        %1008 = vmatprep.subr.mxu0 %v987
        %1009 = vmatpush1.msra.mxu0 %v986
        %1010 = vmatprep.subr.mxu0 %v989
        %1011 = vmatpush1.msra.mxu0 %v988
        %1012 = vmatprep.subr.mxu0 %v991
        %1013 = vmatpush1.msra.mxu0 %v990
        %1014 = vmatprep.subr.mxu0 %v993
        %1015 = vmatpush1.msra.mxu0 %v992
        %1016 = vmatprep.subr.mxu0 %v995
        %1017 = vmatpush1.msra.mxu0 %v994
        %1018 = vmatprep.subr.mxu0 %v997
        %1019 = vmatpush1.msra.mxu0 %v996
        %1020 = vmatprep.subr.mxu0 %v999
        %1021 = vmatpush1.msra.mxu0 %v998
        %1022 = vmatprep.subr.mxu0 0.0
        %1023 = vmatpush1.msra.mxu0 0.0
        %1024 = vmatprep.subr.mxu0 0.0
        %1025 = vmatpush1.msra.mxu0 0.0
        %1026 = vmatprep.subr.mxu0 0.0
        %1027 = vmatpush1.msra.mxu0 0.0
        %1028 = vmatprep.subr.mxu0 0.0
        %1029 = vmatpush1.msra.mxu0 0.0
        %1030 = vmatprep.subr.mxu0 0.0
        %1031 = vmatpush1.msra.mxu0 0.0
        %1032 = vmatprep.subr.mxu0 0.0
        %1033 = vmatpush1.msra.mxu0 0.0
        %1034 = vmatprep.subr.mxu0 0.0
        %1035 = vmatpush1.msra.mxu0 0.0
        %1036 = vmatprep.subr.mxu0 0.0
        %1037 = vmatpush1.msra.mxu0 0.0
        %1038 = vmatprep.subr.mxu0 0.0
        %1039 = vmatpush1.msra.mxu0 0.0
        %1040 = vmatprep.subr.mxu0 0.0
        %1041 = vmatpush1.msra.mxu0 0.0
        %1042 = vmatprep.subr.mxu0 0.0
        %1043 = vmatpush1.msra.mxu0 0.0
        %1044 = vmatprep.subr.mxu0 0.0
        %1045 = vmatpush1.msra.mxu0 0.0
        %1046 = vmatprep.subr.mxu0 0.0
        %1047 = vmatpush1.msra.mxu0 0.0
        %1048 = vmatprep.subr.mxu0 0.0
        %1049 = vmatpush1.msra.mxu0 0.0
        %1050 = vmatprep.subr.mxu0 0.0
        %1051 = vmatpush1.msra.mxu0 0.0
        %1052 = vmatprep.subr.mxu0 0.0
        %1053 = vmatpush1.msra.mxu0 0.0
        %1054 = vmatprep.subr.mxu0 0.0
        %1055 = vmatpush1.msra.mxu0 0.0
        %1056 = vmatprep.subr.mxu0 0.0
        %1057 = vmatpush1.msra.mxu0 0.0
        %1058 = vmatprep.subr.mxu0 0.0
        %1059 = vmatpush1.msra.mxu0 0.0
        %1060 = vmatprep.subr.mxu0 0.0
        %1061 = vmatpush1.msra.mxu0 0.0
        %1062 = vmatprep.subr.mxu0 0.0
        %1063 = vmatpush1.msra.mxu0 0.0
        %1064 = vmatprep.subr.mxu0 0.0
        %1065 = vmatpush1.msra.mxu0 0.0
        %1066 = vmatprep.subr.mxu0 0.0
        %1067 = vmatpush1.msra.mxu0 0.0
        %1068 = vmatprep.subr.mxu0 0.0
        %1069 = vmatpush1.msra.mxu0 0.0
        %1070 = vmatprep.mubr.f32.mxu0 0.0
        %1071 = vmatmul.mubr.f32.gmra.mrb[0].mxu0 %v1004
        %v1072 = vpop.f32.mrb[0].mxu0
        %v1073 = vadd.f32 0.0, %v1072
        %v1074 = vpop.f32.mrb[0].mxu0
        %v1075 = vadd.f32 0.0, %v1074
        %1076 = vdwg.mxu0
        %v1079 = vcombine.low %v1073, %v1075
        %v1081 = vunpack.c.l.s4 1983009808
        %v1082 = vunpack.c.0.s8 %v1081
        %v1083 = vlaneseq
        %v1084 = vshrl.u32 %v1083, 7
        %v1085 = vsub.s32 %v1082, %v1084
        %v1086 = vrot.slane %v1079, %v1085
        %v1088 = vadd.f32 %v980, %v1086
        %v1089 = vld [vmem:[%s282 + $0x7] sm:$0x1]
        %v1090 = vld [vmem:[%s282 + $0x17] sm:$0x1]
        %s1091 = scalar_lea.vmem %s290, 896 [#allocation4]
        %v1092 = vld [vmem:[%s1091] sm:$0xff]
        %v1093 = vld [vmem:[%s1091 + $0x8] sm:$0xff]
        %v1094 = vld [vmem:[%s1091 + $0x10] sm:$0xff]
        %v1095 = vld [vmem:[%s1091 + $0x18] sm:$0xff]
        %v1096 = vld [vmem:[%s1091 + $0x20] sm:$0xff]
        %v1097 = vld [vmem:[%s1091 + $0x28] sm:$0xff]
        %v1098 = vld [vmem:[%s1091 + $0x30] sm:$0xff]
        %v1099 = vld [vmem:[%s1091 + $0x38] sm:$0xff]
        %v1100 = vld [vmem:[%s1091 + $0x40] sm:$0xff]
        %v1101 = vld [vmem:[%s1091 + $0x48] sm:$0xff]
        %v1102 = vld [vmem:[%s1091 + $0x50] sm:$0xff]
        %v1103 = vld [vmem:[%s1091 + $0x58] sm:$0xff]
        %v1104 = vld [vmem:[%s1091 + $0x60] sm:$0xff]
        %v1105 = vld [vmem:[%s1091 + $0x68] sm:$0xff]
        %v1106 = vld [vmem:[%s1091 + $0x70] sm:$0xff]
        %v1107 = vld [vmem:[%s1091 + $0x78] sm:$0xff]
        %v1110 = vrot.slane %v1090, 7
        %v1111 = vsel %vm353, %v1110, %v1089
        %v1112 = vsel %vm355, %v1111, 0
        %1114 = vmatprep.subr.mxu0 %v1093
        %1115 = vmatpush1.msra.mxu0 %v1092
        %1116 = vmatprep.subr.mxu0 %v1095
        %1117 = vmatpush1.msra.mxu0 %v1094
        %1118 = vmatprep.subr.mxu0 %v1097
        %1119 = vmatpush1.msra.mxu0 %v1096
        %1120 = vmatprep.subr.mxu0 %v1099
        %1121 = vmatpush1.msra.mxu0 %v1098
        %1122 = vmatprep.subr.mxu0 %v1101
        %1123 = vmatpush1.msra.mxu0 %v1100
        %1124 = vmatprep.subr.mxu0 %v1103
        %1125 = vmatpush1.msra.mxu0 %v1102
        %1126 = vmatprep.subr.mxu0 %v1105
        %1127 = vmatpush1.msra.mxu0 %v1104
        %1128 = vmatprep.subr.mxu0 %v1107
        %1129 = vmatpush1.msra.mxu0 %v1106
        %1130 = vmatprep.subr.mxu0 0.0
        %1131 = vmatpush1.msra.mxu0 0.0
        %1132 = vmatprep.subr.mxu0 0.0
        %1133 = vmatpush1.msra.mxu0 0.0
        %1134 = vmatprep.subr.mxu0 0.0
        %1135 = vmatpush1.msra.mxu0 0.0
        %1136 = vmatprep.subr.mxu0 0.0
        %1137 = vmatpush1.msra.mxu0 0.0
        %1138 = vmatprep.subr.mxu0 0.0
        %1139 = vmatpush1.msra.mxu0 0.0
        %1140 = vmatprep.subr.mxu0 0.0
        %1141 = vmatpush1.msra.mxu0 0.0
        %1142 = vmatprep.subr.mxu0 0.0
        %1143 = vmatpush1.msra.mxu0 0.0
        %1144 = vmatprep.subr.mxu0 0.0
        %1145 = vmatpush1.msra.mxu0 0.0
        %1146 = vmatprep.subr.mxu0 0.0
        %1147 = vmatpush1.msra.mxu0 0.0
        %1148 = vmatprep.subr.mxu0 0.0
        %1149 = vmatpush1.msra.mxu0 0.0
        %1150 = vmatprep.subr.mxu0 0.0
        %1151 = vmatpush1.msra.mxu0 0.0
        %1152 = vmatprep.subr.mxu0 0.0
        %1153 = vmatpush1.msra.mxu0 0.0
        %1154 = vmatprep.subr.mxu0 0.0
        %1155 = vmatpush1.msra.mxu0 0.0
        %1156 = vmatprep.subr.mxu0 0.0
        %1157 = vmatpush1.msra.mxu0 0.0
        %1158 = vmatprep.subr.mxu0 0.0
        %1159 = vmatpush1.msra.mxu0 0.0
        %1160 = vmatprep.subr.mxu0 0.0
        %1161 = vmatpush1.msra.mxu0 0.0
        %1162 = vmatprep.subr.mxu0 0.0
        %1163 = vmatpush1.msra.mxu0 0.0
        %1164 = vmatprep.subr.mxu0 0.0
        %1165 = vmatpush1.msra.mxu0 0.0
        %1166 = vmatprep.subr.mxu0 0.0
        %1167 = vmatpush1.msra.mxu0 0.0
        %1168 = vmatprep.subr.mxu0 0.0
        %1169 = vmatpush1.msra.mxu0 0.0
        %1170 = vmatprep.subr.mxu0 0.0
        %1171 = vmatpush1.msra.mxu0 0.0
        %1172 = vmatprep.subr.mxu0 0.0
        %1173 = vmatpush1.msra.mxu0 0.0
        %1174 = vmatprep.subr.mxu0 0.0
        %1175 = vmatpush1.msra.mxu0 0.0
        %1176 = vmatprep.subr.mxu0 0.0
        %1177 = vmatpush1.msra.mxu0 0.0
        %1178 = vmatprep.mubr.f32.mxu0 0.0
        %1179 = vmatmul.mubr.f32.gmra.mrb[0].mxu0 %v1112
        %v1180 = vpop.f32.mrb[0].mxu0
        %v1181 = vadd.f32 0.0, %v1180
        %v1182 = vpop.f32.mrb[0].mxu0
        %v1183 = vadd.f32 0.0, %v1182
        %1184 = vdwg.mxu0
        %v1187 = vcombine.low %v1181, %v1183
        %v1189 = vunpack.c.l.s4 1983009808
        %v1190 = vunpack.c.0.s8 %v1189
        %v1191 = vlaneseq
        %v1192 = vshrl.u32 %v1191, 7
        %v1193 = vsub.s32 %v1190, %v1192
        %v1194 = vrot.slane %v1187, %v1193
        %v1196 = vadd.f32 %v1088, %v1194
        %v1197 = vld [vmem:[%s282 + $0x8] sm:$0x1]
        %v1198 = vld [vmem:[%s282 + $0x18] sm:$0x1]
        %s1199 = scalar_lea.vmem %s290, 1024 [#allocation4]
        %v1200 = vld [vmem:[%s1199] sm:$0xff]
        %v1201 = vld [vmem:[%s1199 + $0x8] sm:$0xff]
        %v1202 = vld [vmem:[%s1199 + $0x10] sm:$0xff]
        %v1203 = vld [vmem:[%s1199 + $0x18] sm:$0xff]
        %v1204 = vld [vmem:[%s1199 + $0x20] sm:$0xff]
        %v1205 = vld [vmem:[%s1199 + $0x28] sm:$0xff]
        %v1206 = vld [vmem:[%s1199 + $0x30] sm:$0xff]
        %v1207 = vld [vmem:[%s1199 + $0x38] sm:$0xff]
        %v1208 = vld [vmem:[%s1199 + $0x40] sm:$0xff]
        %v1209 = vld [vmem:[%s1199 + $0x48] sm:$0xff]
        %v1210 = vld [vmem:[%s1199 + $0x50] sm:$0xff]
        %v1211 = vld [vmem:[%s1199 + $0x58] sm:$0xff]
        %v1212 = vld [vmem:[%s1199 + $0x60] sm:$0xff]
        %v1213 = vld [vmem:[%s1199 + $0x68] sm:$0xff]
        %v1214 = vld [vmem:[%s1199 + $0x70] sm:$0xff]
        %v1215 = vld [vmem:[%s1199 + $0x78] sm:$0xff]
        %v1218 = vrot.slane %v1198, 7
        %v1219 = vsel %vm353, %v1218, %v1197
        %v1220 = vsel %vm355, %v1219, 0
        %1222 = vmatprep.subr.mxu0 %v1201
        %1223 = vmatpush1.msra.mxu0 %v1200
        %1224 = vmatprep.subr.mxu0 %v1203
        %1225 = vmatpush1.msra.mxu0 %v1202
        %1226 = vmatprep.subr.mxu0 %v1205
        %1227 = vmatpush1.msra.mxu0 %v1204
        %1228 = vmatprep.subr.mxu0 %v1207
        %1229 = vmatpush1.msra.mxu0 %v1206
        %1230 = vmatprep.subr.mxu0 %v1209
        %1231 = vmatpush1.msra.mxu0 %v1208
        %1232 = vmatprep.subr.mxu0 %v1211
        %1233 = vmatpush1.msra.mxu0 %v1210
        %1234 = vmatprep.subr.mxu0 %v1213
        %1235 = vmatpush1.msra.mxu0 %v1212
        %1236 = vmatprep.subr.mxu0 %v1215
        %1237 = vmatpush1.msra.mxu0 %v1214
        %1238 = vmatprep.subr.mxu0 0.0
        %1239 = vmatpush1.msra.mxu0 0.0
        %1240 = vmatprep.subr.mxu0 0.0
        %1241 = vmatpush1.msra.mxu0 0.0
        %1242 = vmatprep.subr.mxu0 0.0
        %1243 = vmatpush1.msra.mxu0 0.0
        %1244 = vmatprep.subr.mxu0 0.0
        %1245 = vmatpush1.msra.mxu0 0.0
        %1246 = vmatprep.subr.mxu0 0.0
        %1247 = vmatpush1.msra.mxu0 0.0
        %1248 = vmatprep.subr.mxu0 0.0
        %1249 = vmatpush1.msra.mxu0 0.0
        %1250 = vmatprep.subr.mxu0 0.0
        %1251 = vmatpush1.msra.mxu0 0.0
        %1252 = vmatprep.subr.mxu0 0.0
        %1253 = vmatpush1.msra.mxu0 0.0
        %1254 = vmatprep.subr.mxu0 0.0
        %1255 = vmatpush1.msra.mxu0 0.0
        %1256 = vmatprep.subr.mxu0 0.0
        %1257 = vmatpush1.msra.mxu0 0.0
        %1258 = vmatprep.subr.mxu0 0.0
        %1259 = vmatpush1.msra.mxu0 0.0
        %1260 = vmatprep.subr.mxu0 0.0
        %1261 = vmatpush1.msra.mxu0 0.0
        %1262 = vmatprep.subr.mxu0 0.0
        %1263 = vmatpush1.msra.mxu0 0.0
        %1264 = vmatprep.subr.mxu0 0.0
        %1265 = vmatpush1.msra.mxu0 0.0
        %1266 = vmatprep.subr.mxu0 0.0
        %1267 = vmatpush1.msra.mxu0 0.0
        %1268 = vmatprep.subr.mxu0 0.0
        %1269 = vmatpush1.msra.mxu0 0.0
        %1270 = vmatprep.subr.mxu0 0.0
        %1271 = vmatpush1.msra.mxu0 0.0
        %1272 = vmatprep.subr.mxu0 0.0
        %1273 = vmatpush1.msra.mxu0 0.0
        %1274 = vmatprep.subr.mxu0 0.0
        %1275 = vmatpush1.msra.mxu0 0.0
        %1276 = vmatprep.subr.mxu0 0.0
        %1277 = vmatpush1.msra.mxu0 0.0
        %1278 = vmatprep.subr.mxu0 0.0
        %1279 = vmatpush1.msra.mxu0 0.0
        %1280 = vmatprep.subr.mxu0 0.0
        %1281 = vmatpush1.msra.mxu0 0.0
        %1282 = vmatprep.subr.mxu0 0.0
        %1283 = vmatpush1.msra.mxu0 0.0
        %1284 = vmatprep.subr.mxu0 0.0
        %1285 = vmatpush1.msra.mxu0 0.0
        %1286 = vmatprep.mubr.f32.mxu0 0.0
        %1287 = vmatmul.mubr.f32.gmra.mrb[0].mxu0 %v1220
        %v1288 = vpop.f32.mrb[0].mxu0
        %v1289 = vadd.f32 0.0, %v1288
        %v1290 = vpop.f32.mrb[0].mxu0
        %v1291 = vadd.f32 0.0, %v1290
        %1292 = vdwg.mxu0
        %v1295 = vcombine.low %v1289, %v1291
        %v1297 = vunpack.c.l.s4 1983009808
        %v1298 = vunpack.c.0.s8 %v1297
        %v1299 = vlaneseq
        %v1300 = vshrl.u32 %v1299, 7
        %v1301 = vsub.s32 %v1298, %v1300
        %v1302 = vrot.slane %v1295, %v1301
        %v1304 = vadd.f32 %v1196, %v1302
        %v1305 = vld [vmem:[%s282 + $0x9] sm:$0x1]
        %v1306 = vld [vmem:[%s282 + $0x19] sm:$0x1]
        %s1307 = scalar_lea.vmem %s290, 1152 [#allocation4]
        %v1308 = vld [vmem:[%s1307] sm:$0xff]
        %v1309 = vld [vmem:[%s1307 + $0x8] sm:$0xff]
        %v1310 = vld [vmem:[%s1307 + $0x10] sm:$0xff]
        %v1311 = vld [vmem:[%s1307 + $0x18] sm:$0xff]
        %v1312 = vld [vmem:[%s1307 + $0x20] sm:$0xff]
        %v1313 = vld [vmem:[%s1307 + $0x28] sm:$0xff]
        %v1314 = vld [vmem:[%s1307 + $0x30] sm:$0xff]
        %v1315 = vld [vmem:[%s1307 + $0x38] sm:$0xff]
        %v1316 = vld [vmem:[%s1307 + $0x40] sm:$0xff]
        %v1317 = vld [vmem:[%s1307 + $0x48] sm:$0xff]
        %v1318 = vld [vmem:[%s1307 + $0x50] sm:$0xff]
        %v1319 = vld [vmem:[%s1307 + $0x58] sm:$0xff]
        %v1320 = vld [vmem:[%s1307 + $0x60] sm:$0xff]
        %v1321 = vld [vmem:[%s1307 + $0x68] sm:$0xff]
        %v1322 = vld [vmem:[%s1307 + $0x70] sm:$0xff]
        %v1323 = vld [vmem:[%s1307 + $0x78] sm:$0xff]
        %v1326 = vrot.slane %v1306, 7
        %v1327 = vsel %vm353, %v1326, %v1305
        %v1328 = vsel %vm355, %v1327, 0
        %1330 = vmatprep.subr.mxu0 %v1309
        %1331 = vmatpush1.msra.mxu0 %v1308
        %1332 = vmatprep.subr.mxu0 %v1311
        %1333 = vmatpush1.msra.mxu0 %v1310
        %1334 = vmatprep.subr.mxu0 %v1313
        %1335 = vmatpush1.msra.mxu0 %v1312
        %1336 = vmatprep.subr.mxu0 %v1315
        %1337 = vmatpush1.msra.mxu0 %v1314
        %1338 = vmatprep.subr.mxu0 %v1317
        %1339 = vmatpush1.msra.mxu0 %v1316
        %1340 = vmatprep.subr.mxu0 %v1319
        %1341 = vmatpush1.msra.mxu0 %v1318
        %1342 = vmatprep.subr.mxu0 %v1321
        %1343 = vmatpush1.msra.mxu0 %v1320
        %1344 = vmatprep.subr.mxu0 %v1323
        %1345 = vmatpush1.msra.mxu0 %v1322
        %1346 = vmatprep.subr.mxu0 0.0
        %1347 = vmatpush1.msra.mxu0 0.0
        %1348 = vmatprep.subr.mxu0 0.0
        %1349 = vmatpush1.msra.mxu0 0.0
        %1350 = vmatprep.subr.mxu0 0.0
        %1351 = vmatpush1.msra.mxu0 0.0
        %1352 = vmatprep.subr.mxu0 0.0
        %1353 = vmatpush1.msra.mxu0 0.0
        %1354 = vmatprep.subr.mxu0 0.0
        %1355 = vmatpush1.msra.mxu0 0.0
        %1356 = vmatprep.subr.mxu0 0.0
        %1357 = vmatpush1.msra.mxu0 0.0
        %1358 = vmatprep.subr.mxu0 0.0
        %1359 = vmatpush1.msra.mxu0 0.0
        %1360 = vmatprep.subr.mxu0 0.0
        %1361 = vmatpush1.msra.mxu0 0.0
        %1362 = vmatprep.subr.mxu0 0.0
        %1363 = vmatpush1.msra.mxu0 0.0
        %1364 = vmatprep.subr.mxu0 0.0
        %1365 = vmatpush1.msra.mxu0 0.0
        %1366 = vmatprep.subr.mxu0 0.0
        %1367 = vmatpush1.msra.mxu0 0.0
        %1368 = vmatprep.subr.mxu0 0.0
        %1369 = vmatpush1.msra.mxu0 0.0
        %1370 = vmatprep.subr.mxu0 0.0
        %1371 = vmatpush1.msra.mxu0 0.0
        %1372 = vmatprep.subr.mxu0 0.0
        %1373 = vmatpush1.msra.mxu0 0.0
        %1374 = vmatprep.subr.mxu0 0.0
        %1375 = vmatpush1.msra.mxu0 0.0
        %1376 = vmatprep.subr.mxu0 0.0
        %1377 = vmatpush1.msra.mxu0 0.0
        %1378 = vmatprep.subr.mxu0 0.0
        %1379 = vmatpush1.msra.mxu0 0.0
        %1380 = vmatprep.subr.mxu0 0.0
        %1381 = vmatpush1.msra.mxu0 0.0
        %1382 = vmatprep.subr.mxu0 0.0
        %1383 = vmatpush1.msra.mxu0 0.0
        %1384 = vmatprep.subr.mxu0 0.0
        %1385 = vmatpush1.msra.mxu0 0.0
        %1386 = vmatprep.subr.mxu0 0.0
        %1387 = vmatpush1.msra.mxu0 0.0
        %1388 = vmatprep.subr.mxu0 0.0
        %1389 = vmatpush1.msra.mxu0 0.0
        %1390 = vmatprep.subr.mxu0 0.0
        %1391 = vmatpush1.msra.mxu0 0.0
        %1392 = vmatprep.subr.mxu0 0.0
        %1393 = vmatpush1.msra.mxu0 0.0
        %1394 = vmatprep.mubr.f32.mxu0 0.0
        %1395 = vmatmul.mubr.f32.gmra.mrb[0].mxu0 %v1328
        %v1396 = vpop.f32.mrb[0].mxu0
        %v1397 = vadd.f32 0.0, %v1396
        %v1398 = vpop.f32.mrb[0].mxu0
        %v1399 = vadd.f32 0.0, %v1398
        %1400 = vdwg.mxu0
        %v1403 = vcombine.low %v1397, %v1399
        %v1405 = vunpack.c.l.s4 1983009808
        %v1406 = vunpack.c.0.s8 %v1405
        %v1407 = vlaneseq
        %v1408 = vshrl.u32 %v1407, 7
        %v1409 = vsub.s32 %v1406, %v1408
        %v1410 = vrot.slane %v1403, %v1409
        %v1412 = vadd.f32 %v1304, %v1410
        %v1413 = vld [vmem:[%s282 + $0xa] sm:$0x1]
        %v1414 = vld [vmem:[%s282 + $0x1a] sm:$0x1]
        %s1415 = scalar_lea.vmem %s290, 1280 [#allocation4]
        %v1416 = vld [vmem:[%s1415] sm:$0xff]
        %v1417 = vld [vmem:[%s1415 + $0x8] sm:$0xff]
        %v1418 = vld [vmem:[%s1415 + $0x10] sm:$0xff]
        %v1419 = vld [vmem:[%s1415 + $0x18] sm:$0xff]
        %v1420 = vld [vmem:[%s1415 + $0x20] sm:$0xff]
        %v1421 = vld [vmem:[%s1415 + $0x28] sm:$0xff]
        %v1422 = vld [vmem:[%s1415 + $0x30] sm:$0xff]
        %v1423 = vld [vmem:[%s1415 + $0x38] sm:$0xff]
        %v1424 = vld [vmem:[%s1415 + $0x40] sm:$0xff]
        %v1425 = vld [vmem:[%s1415 + $0x48] sm:$0xff]
        %v1426 = vld [vmem:[%s1415 + $0x50] sm:$0xff]
        %v1427 = vld [vmem:[%s1415 + $0x58] sm:$0xff]
        %v1428 = vld [vmem:[%s1415 + $0x60] sm:$0xff]
        %v1429 = vld [vmem:[%s1415 + $0x68] sm:$0xff]
        %v1430 = vld [vmem:[%s1415 + $0x70] sm:$0xff]
        %v1431 = vld [vmem:[%s1415 + $0x78] sm:$0xff]
        %v1434 = vrot.slane %v1414, 7
        %v1435 = vsel %vm353, %v1434, %v1413
        %v1436 = vsel %vm355, %v1435, 0
        %1438 = vmatprep.subr.mxu0 %v1417
        %1439 = vmatpush1.msra.mxu0 %v1416
        %1440 = vmatprep.subr.mxu0 %v1419
        %1441 = vmatpush1.msra.mxu0 %v1418
        %1442 = vmatprep.subr.mxu0 %v1421
        %1443 = vmatpush1.msra.mxu0 %v1420
        %1444 = vmatprep.subr.mxu0 %v1423
        %1445 = vmatpush1.msra.mxu0 %v1422
        %1446 = vmatprep.subr.mxu0 %v1425
        %1447 = vmatpush1.msra.mxu0 %v1424
        %1448 = vmatprep.subr.mxu0 %v1427
        %1449 = vmatpush1.msra.mxu0 %v1426
        %1450 = vmatprep.subr.mxu0 %v1429
        %1451 = vmatpush1.msra.mxu0 %v1428
        %1452 = vmatprep.subr.mxu0 %v1431
        %1453 = vmatpush1.msra.mxu0 %v1430
        %1454 = vmatprep.subr.mxu0 0.0
        %1455 = vmatpush1.msra.mxu0 0.0
        %1456 = vmatprep.subr.mxu0 0.0
        %1457 = vmatpush1.msra.mxu0 0.0
        %1458 = vmatprep.subr.mxu0 0.0
        %1459 = vmatpush1.msra.mxu0 0.0
        %1460 = vmatprep.subr.mxu0 0.0
        %1461 = vmatpush1.msra.mxu0 0.0
        %1462 = vmatprep.subr.mxu0 0.0
        %1463 = vmatpush1.msra.mxu0 0.0
        %1464 = vmatprep.subr.mxu0 0.0
        %1465 = vmatpush1.msra.mxu0 0.0
        %1466 = vmatprep.subr.mxu0 0.0
        %1467 = vmatpush1.msra.mxu0 0.0
        %1468 = vmatprep.subr.mxu0 0.0
        %1469 = vmatpush1.msra.mxu0 0.0
        %1470 = vmatprep.subr.mxu0 0.0
        %1471 = vmatpush1.msra.mxu0 0.0
        %1472 = vmatprep.subr.mxu0 0.0
        %1473 = vmatpush1.msra.mxu0 0.0
        %1474 = vmatprep.subr.mxu0 0.0
        %1475 = vmatpush1.msra.mxu0 0.0
        %1476 = vmatprep.subr.mxu0 0.0
        %1477 = vmatpush1.msra.mxu0 0.0
        %1478 = vmatprep.subr.mxu0 0.0
        %1479 = vmatpush1.msra.mxu0 0.0
        %1480 = vmatprep.subr.mxu0 0.0
        %1481 = vmatpush1.msra.mxu0 0.0
        %1482 = vmatprep.subr.mxu0 0.0
        %1483 = vmatpush1.msra.mxu0 0.0
        %1484 = vmatprep.subr.mxu0 0.0
        %1485 = vmatpush1.msra.mxu0 0.0
        %1486 = vmatprep.subr.mxu0 0.0
        %1487 = vmatpush1.msra.mxu0 0.0
        %1488 = vmatprep.subr.mxu0 0.0
        %1489 = vmatpush1.msra.mxu0 0.0
        %1490 = vmatprep.subr.mxu0 0.0
        %1491 = vmatpush1.msra.mxu0 0.0
        %1492 = vmatprep.subr.mxu0 0.0
        %1493 = vmatpush1.msra.mxu0 0.0
        %1494 = vmatprep.subr.mxu0 0.0
        %1495 = vmatpush1.msra.mxu0 0.0
        %1496 = vmatprep.subr.mxu0 0.0
        %1497 = vmatpush1.msra.mxu0 0.0
        %1498 = vmatprep.subr.mxu0 0.0
        %1499 = vmatpush1.msra.mxu0 0.0
        %1500 = vmatprep.subr.mxu0 0.0
        %1501 = vmatpush1.msra.mxu0 0.0
        %1502 = vmatprep.mubr.f32.mxu0 0.0
        %1503 = vmatmul.mubr.f32.gmra.mrb[0].mxu0 %v1436
        %v1504 = vpop.f32.mrb[0].mxu0
        %v1505 = vadd.f32 0.0, %v1504
        %v1506 = vpop.f32.mrb[0].mxu0
        %v1507 = vadd.f32 0.0, %v1506
        %1508 = vdwg.mxu0
        %v1511 = vcombine.low %v1505, %v1507
        %v1513 = vunpack.c.l.s4 1983009808
        %v1514 = vunpack.c.0.s8 %v1513
        %v1515 = vlaneseq
        %v1516 = vshrl.u32 %v1515, 7
        %v1517 = vsub.s32 %v1514, %v1516
        %v1518 = vrot.slane %v1511, %v1517
        %v1520 = vadd.f32 %v1412, %v1518
        %v1521 = vld [vmem:[%s282 + $0xb] sm:$0x1]
        %v1522 = vld [vmem:[%s282 + $0x1b] sm:$0x1]
        %s1523 = scalar_lea.vmem %s290, 1408 [#allocation4]
        %v1524 = vld [vmem:[%s1523] sm:$0xff]
        %v1525 = vld [vmem:[%s1523 + $0x8] sm:$0xff]
        %v1526 = vld [vmem:[%s1523 + $0x10] sm:$0xff]
        %v1527 = vld [vmem:[%s1523 + $0x18] sm:$0xff]
        %v1528 = vld [vmem:[%s1523 + $0x20] sm:$0xff]
        %v1529 = vld [vmem:[%s1523 + $0x28] sm:$0xff]
        %v1530 = vld [vmem:[%s1523 + $0x30] sm:$0xff]
        %v1531 = vld [vmem:[%s1523 + $0x38] sm:$0xff]
        %v1532 = vld [vmem:[%s1523 + $0x40] sm:$0xff]
        %v1533 = vld [vmem:[%s1523 + $0x48] sm:$0xff]
        %v1534 = vld [vmem:[%s1523 + $0x50] sm:$0xff]
        %v1535 = vld [vmem:[%s1523 + $0x58] sm:$0xff]
        %v1536 = vld [vmem:[%s1523 + $0x60] sm:$0xff]
        %v1537 = vld [vmem:[%s1523 + $0x68] sm:$0xff]
        %v1538 = vld [vmem:[%s1523 + $0x70] sm:$0xff]
        %v1539 = vld [vmem:[%s1523 + $0x78] sm:$0xff]
        %v1542 = vrot.slane %v1522, 7
        %v1543 = vsel %vm353, %v1542, %v1521
        %v1544 = vsel %vm355, %v1543, 0
        %1546 = vmatprep.subr.mxu0 %v1525
        %1547 = vmatpush1.msra.mxu0 %v1524
        %1548 = vmatprep.subr.mxu0 %v1527
        %1549 = vmatpush1.msra.mxu0 %v1526
        %1550 = vmatprep.subr.mxu0 %v1529
        %1551 = vmatpush1.msra.mxu0 %v1528
        %1552 = vmatprep.subr.mxu0 %v1531
        %1553 = vmatpush1.msra.mxu0 %v1530
        %1554 = vmatprep.subr.mxu0 %v1533
        %1555 = vmatpush1.msra.mxu0 %v1532
        %1556 = vmatprep.subr.mxu0 %v1535
        %1557 = vmatpush1.msra.mxu0 %v1534
        %1558 = vmatprep.subr.mxu0 %v1537
        %1559 = vmatpush1.msra.mxu0 %v1536
        %1560 = vmatprep.subr.mxu0 %v1539
        %1561 = vmatpush1.msra.mxu0 %v1538
        %1562 = vmatprep.subr.mxu0 0.0
        %1563 = vmatpush1.msra.mxu0 0.0
        %1564 = vmatprep.subr.mxu0 0.0
        %1565 = vmatpush1.msra.mxu0 0.0
        %1566 = vmatprep.subr.mxu0 0.0
        %1567 = vmatpush1.msra.mxu0 0.0
        %1568 = vmatprep.subr.mxu0 0.0
        %1569 = vmatpush1.msra.mxu0 0.0
        %1570 = vmatprep.subr.mxu0 0.0
        %1571 = vmatpush1.msra.mxu0 0.0
        %1572 = vmatprep.subr.mxu0 0.0
        %1573 = vmatpush1.msra.mxu0 0.0
        %1574 = vmatprep.subr.mxu0 0.0
        %1575 = vmatpush1.msra.mxu0 0.0
        %1576 = vmatprep.subr.mxu0 0.0
        %1577 = vmatpush1.msra.mxu0 0.0
        %1578 = vmatprep.subr.mxu0 0.0
        %1579 = vmatpush1.msra.mxu0 0.0
        %1580 = vmatprep.subr.mxu0 0.0
        %1581 = vmatpush1.msra.mxu0 0.0
        %1582 = vmatprep.subr.mxu0 0.0
        %1583 = vmatpush1.msra.mxu0 0.0
        %1584 = vmatprep.subr.mxu0 0.0
        %1585 = vmatpush1.msra.mxu0 0.0
        %1586 = vmatprep.subr.mxu0 0.0
        %1587 = vmatpush1.msra.mxu0 0.0
        %1588 = vmatprep.subr.mxu0 0.0
        %1589 = vmatpush1.msra.mxu0 0.0
        %1590 = vmatprep.subr.mxu0 0.0
        %1591 = vmatpush1.msra.mxu0 0.0
        %1592 = vmatprep.subr.mxu0 0.0
        %1593 = vmatpush1.msra.mxu0 0.0
        %1594 = vmatprep.subr.mxu0 0.0
        %1595 = vmatpush1.msra.mxu0 0.0
        %1596 = vmatprep.subr.mxu0 0.0
        %1597 = vmatpush1.msra.mxu0 0.0
        %1598 = vmatprep.subr.mxu0 0.0
        %1599 = vmatpush1.msra.mxu0 0.0
        %1600 = vmatprep.subr.mxu0 0.0
        %1601 = vmatpush1.msra.mxu0 0.0
        %1602 = vmatprep.subr.mxu0 0.0
        %1603 = vmatpush1.msra.mxu0 0.0
        %1604 = vmatprep.subr.mxu0 0.0
        %1605 = vmatpush1.msra.mxu0 0.0
        %1606 = vmatprep.subr.mxu0 0.0
        %1607 = vmatpush1.msra.mxu0 0.0
        %1608 = vmatprep.subr.mxu0 0.0
        %1609 = vmatpush1.msra.mxu0 0.0
        %1610 = vmatprep.mubr.f32.mxu0 0.0
        %1611 = vmatmul.mubr.f32.gmra.mrb[0].mxu0 %v1544
        %v1612 = vpop.f32.mrb[0].mxu0
        %v1613 = vadd.f32 0.0, %v1612
        %v1614 = vpop.f32.mrb[0].mxu0
        %v1615 = vadd.f32 0.0, %v1614
        %1616 = vdwg.mxu0
        %v1619 = vcombine.low %v1613, %v1615
        %v1621 = vunpack.c.l.s4 1983009808
        %v1622 = vunpack.c.0.s8 %v1621
        %v1623 = vlaneseq
        %v1624 = vshrl.u32 %v1623, 7
        %v1625 = vsub.s32 %v1622, %v1624
        %v1626 = vrot.slane %v1619, %v1625
        %v1628 = vadd.f32 %v1520, %v1626
        %v1629 = vld [vmem:[%s282 + $0xc] sm:$0x1]
        %v1630 = vld [vmem:[%s282 + $0x1c] sm:$0x1]
        %s1631 = scalar_lea.vmem %s290, 1536 [#allocation4]
        %v1632 = vld [vmem:[%s1631] sm:$0xff]
        %v1633 = vld [vmem:[%s1631 + $0x8] sm:$0xff]
        %v1634 = vld [vmem:[%s1631 + $0x10] sm:$0xff]
        %v1635 = vld [vmem:[%s1631 + $0x18] sm:$0xff]
        %v1636 = vld [vmem:[%s1631 + $0x20] sm:$0xff]
        %v1637 = vld [vmem:[%s1631 + $0x28] sm:$0xff]
        %v1638 = vld [vmem:[%s1631 + $0x30] sm:$0xff]
        %v1639 = vld [vmem:[%s1631 + $0x38] sm:$0xff]
        %v1640 = vld [vmem:[%s1631 + $0x40] sm:$0xff]
        %v1641 = vld [vmem:[%s1631 + $0x48] sm:$0xff]
        %v1642 = vld [vmem:[%s1631 + $0x50] sm:$0xff]
        %v1643 = vld [vmem:[%s1631 + $0x58] sm:$0xff]
        %v1644 = vld [vmem:[%s1631 + $0x60] sm:$0xff]
        %v1645 = vld [vmem:[%s1631 + $0x68] sm:$0xff]
        %v1646 = vld [vmem:[%s1631 + $0x70] sm:$0xff]
        %v1647 = vld [vmem:[%s1631 + $0x78] sm:$0xff]
        %v1650 = vrot.slane %v1630, 7
        %v1651 = vsel %vm353, %v1650, %v1629
        %v1652 = vsel %vm355, %v1651, 0
        %1654 = vmatprep.subr.mxu0 %v1633
        %1655 = vmatpush1.msra.mxu0 %v1632
        %1656 = vmatprep.subr.mxu0 %v1635
        %1657 = vmatpush1.msra.mxu0 %v1634
        %1658 = vmatprep.subr.mxu0 %v1637
        %1659 = vmatpush1.msra.mxu0 %v1636
        %1660 = vmatprep.subr.mxu0 %v1639
        %1661 = vmatpush1.msra.mxu0 %v1638
        %1662 = vmatprep.subr.mxu0 %v1641
        %1663 = vmatpush1.msra.mxu0 %v1640
        %1664 = vmatprep.subr.mxu0 %v1643
        %1665 = vmatpush1.msra.mxu0 %v1642
        %1666 = vmatprep.subr.mxu0 %v1645
        %1667 = vmatpush1.msra.mxu0 %v1644
        %1668 = vmatprep.subr.mxu0 %v1647
        %1669 = vmatpush1.msra.mxu0 %v1646
        %1670 = vmatprep.subr.mxu0 0.0
        %1671 = vmatpush1.msra.mxu0 0.0
        %1672 = vmatprep.subr.mxu0 0.0
        %1673 = vmatpush1.msra.mxu0 0.0
        %1674 = vmatprep.subr.mxu0 0.0
        %1675 = vmatpush1.msra.mxu0 0.0
        %1676 = vmatprep.subr.mxu0 0.0
        %1677 = vmatpush1.msra.mxu0 0.0
        %1678 = vmatprep.subr.mxu0 0.0
        %1679 = vmatpush1.msra.mxu0 0.0
        %1680 = vmatprep.subr.mxu0 0.0
        %1681 = vmatpush1.msra.mxu0 0.0
        %1682 = vmatprep.subr.mxu0 0.0
        %1683 = vmatpush1.msra.mxu0 0.0
        %1684 = vmatprep.subr.mxu0 0.0
        %1685 = vmatpush1.msra.mxu0 0.0
        %1686 = vmatprep.subr.mxu0 0.0
        %1687 = vmatpush1.msra.mxu0 0.0
        %1688 = vmatprep.subr.mxu0 0.0
        %1689 = vmatpush1.msra.mxu0 0.0
        %1690 = vmatprep.subr.mxu0 0.0
        %1691 = vmatpush1.msra.mxu0 0.0
        %1692 = vmatprep.subr.mxu0 0.0
        %1693 = vmatpush1.msra.mxu0 0.0
        %1694 = vmatprep.subr.mxu0 0.0
        %1695 = vmatpush1.msra.mxu0 0.0
        %1696 = vmatprep.subr.mxu0 0.0
        %1697 = vmatpush1.msra.mxu0 0.0
        %1698 = vmatprep.subr.mxu0 0.0
        %1699 = vmatpush1.msra.mxu0 0.0
        %1700 = vmatprep.subr.mxu0 0.0
        %1701 = vmatpush1.msra.mxu0 0.0
        %1702 = vmatprep.subr.mxu0 0.0
        %1703 = vmatpush1.msra.mxu0 0.0
        %1704 = vmatprep.subr.mxu0 0.0
        %1705 = vmatpush1.msra.mxu0 0.0
        %1706 = vmatprep.subr.mxu0 0.0
        %1707 = vmatpush1.msra.mxu0 0.0
        %1708 = vmatprep.subr.mxu0 0.0
        %1709 = vmatpush1.msra.mxu0 0.0
        %1710 = vmatprep.subr.mxu0 0.0
        %1711 = vmatpush1.msra.mxu0 0.0
        %1712 = vmatprep.subr.mxu0 0.0
        %1713 = vmatpush1.msra.mxu0 0.0
        %1714 = vmatprep.subr.mxu0 0.0
        %1715 = vmatpush1.msra.mxu0 0.0
        %1716 = vmatprep.subr.mxu0 0.0
        %1717 = vmatpush1.msra.mxu0 0.0
        %1718 = vmatprep.mubr.f32.mxu0 0.0
        %1719 = vmatmul.mubr.f32.gmra.mrb[0].mxu0 %v1652
        %v1720 = vpop.f32.mrb[0].mxu0
        %v1721 = vadd.f32 0.0, %v1720
        %v1722 = vpop.f32.mrb[0].mxu0
        %v1723 = vadd.f32 0.0, %v1722
        %1724 = vdwg.mxu0
        %v1727 = vcombine.low %v1721, %v1723
        %v1729 = vunpack.c.l.s4 1983009808
        %v1730 = vunpack.c.0.s8 %v1729
        %v1731 = vlaneseq
        %v1732 = vshrl.u32 %v1731, 7
        %v1733 = vsub.s32 %v1730, %v1732
        %v1734 = vrot.slane %v1727, %v1733
        %v1736 = vadd.f32 %v1628, %v1734
        %v1737 = vld [vmem:[%s282 + $0xd] sm:$0x1]
        %v1738 = vld [vmem:[%s282 + $0x1d] sm:$0x1]
        %s1739 = scalar_lea.vmem %s290, 1664 [#allocation4]
        %v1740 = vld [vmem:[%s1739] sm:$0xff]
        %v1741 = vld [vmem:[%s1739 + $0x8] sm:$0xff]
        %v1742 = vld [vmem:[%s1739 + $0x10] sm:$0xff]
        %v1743 = vld [vmem:[%s1739 + $0x18] sm:$0xff]
        %v1744 = vld [vmem:[%s1739 + $0x20] sm:$0xff]
        %v1745 = vld [vmem:[%s1739 + $0x28] sm:$0xff]
        %v1746 = vld [vmem:[%s1739 + $0x30] sm:$0xff]
        %v1747 = vld [vmem:[%s1739 + $0x38] sm:$0xff]
        %v1748 = vld [vmem:[%s1739 + $0x40] sm:$0xff]
        %v1749 = vld [vmem:[%s1739 + $0x48] sm:$0xff]
        %v1750 = vld [vmem:[%s1739 + $0x50] sm:$0xff]
        %v1751 = vld [vmem:[%s1739 + $0x58] sm:$0xff]
        %v1752 = vld [vmem:[%s1739 + $0x60] sm:$0xff]
        %v1753 = vld [vmem:[%s1739 + $0x68] sm:$0xff]
        %v1754 = vld [vmem:[%s1739 + $0x70] sm:$0xff]
        %v1755 = vld [vmem:[%s1739 + $0x78] sm:$0xff]
        %v1758 = vrot.slane %v1738, 7
        %v1759 = vsel %vm353, %v1758, %v1737
        %v1760 = vsel %vm355, %v1759, 0
        %1762 = vmatprep.subr.mxu0 %v1741
        %1763 = vmatpush1.msra.mxu0 %v1740
        %1764 = vmatprep.subr.mxu0 %v1743
        %1765 = vmatpush1.msra.mxu0 %v1742
        %1766 = vmatprep.subr.mxu0 %v1745
        %1767 = vmatpush1.msra.mxu0 %v1744
        %1768 = vmatprep.subr.mxu0 %v1747
        %1769 = vmatpush1.msra.mxu0 %v1746
        %1770 = vmatprep.subr.mxu0 %v1749
        %1771 = vmatpush1.msra.mxu0 %v1748
        %1772 = vmatprep.subr.mxu0 %v1751
        %1773 = vmatpush1.msra.mxu0 %v1750
        %1774 = vmatprep.subr.mxu0 %v1753
        %1775 = vmatpush1.msra.mxu0 %v1752
        %1776 = vmatprep.subr.mxu0 %v1755
        %1777 = vmatpush1.msra.mxu0 %v1754
        %1778 = vmatprep.subr.mxu0 0.0
        %1779 = vmatpush1.msra.mxu0 0.0
        %1780 = vmatprep.subr.mxu0 0.0
        %1781 = vmatpush1.msra.mxu0 0.0
        %1782 = vmatprep.subr.mxu0 0.0
        %1783 = vmatpush1.msra.mxu0 0.0
        %1784 = vmatprep.subr.mxu0 0.0
        %1785 = vmatpush1.msra.mxu0 0.0
        %1786 = vmatprep.subr.mxu0 0.0
        %1787 = vmatpush1.msra.mxu0 0.0
        %1788 = vmatprep.subr.mxu0 0.0
        %1789 = vmatpush1.msra.mxu0 0.0
        %1790 = vmatprep.subr.mxu0 0.0
        %1791 = vmatpush1.msra.mxu0 0.0
        %1792 = vmatprep.subr.mxu0 0.0
        %1793 = vmatpush1.msra.mxu0 0.0
        %1794 = vmatprep.subr.mxu0 0.0
        %1795 = vmatpush1.msra.mxu0 0.0
        %1796 = vmatprep.subr.mxu0 0.0
        %1797 = vmatpush1.msra.mxu0 0.0
        %1798 = vmatprep.subr.mxu0 0.0
        %1799 = vmatpush1.msra.mxu0 0.0
        %1800 = vmatprep.subr.mxu0 0.0
        %1801 = vmatpush1.msra.mxu0 0.0
        %1802 = vmatprep.subr.mxu0 0.0
        %1803 = vmatpush1.msra.mxu0 0.0
        %1804 = vmatprep.subr.mxu0 0.0
        %1805 = vmatpush1.msra.mxu0 0.0
        %1806 = vmatprep.subr.mxu0 0.0
        %1807 = vmatpush1.msra.mxu0 0.0
        %1808 = vmatprep.subr.mxu0 0.0
        %1809 = vmatpush1.msra.mxu0 0.0
        %1810 = vmatprep.subr.mxu0 0.0
        %1811 = vmatpush1.msra.mxu0 0.0
        %1812 = vmatprep.subr.mxu0 0.0
        %1813 = vmatpush1.msra.mxu0 0.0
        %1814 = vmatprep.subr.mxu0 0.0
        %1815 = vmatpush1.msra.mxu0 0.0
        %1816 = vmatprep.subr.mxu0 0.0
        %1817 = vmatpush1.msra.mxu0 0.0
        %1818 = vmatprep.subr.mxu0 0.0
        %1819 = vmatpush1.msra.mxu0 0.0
        %1820 = vmatprep.subr.mxu0 0.0
        %1821 = vmatpush1.msra.mxu0 0.0
        %1822 = vmatprep.subr.mxu0 0.0
        %1823 = vmatpush1.msra.mxu0 0.0
        %1824 = vmatprep.subr.mxu0 0.0
        %1825 = vmatpush1.msra.mxu0 0.0
        %1826 = vmatprep.mubr.f32.mxu0 0.0
        %1827 = vmatmul.mubr.f32.gmra.mrb[0].mxu0 %v1760
        %v1828 = vpop.f32.mrb[0].mxu0
        %v1829 = vadd.f32 0.0, %v1828
        %v1830 = vpop.f32.mrb[0].mxu0
        %v1831 = vadd.f32 0.0, %v1830
        %1832 = vdwg.mxu0
        %v1835 = vcombine.low %v1829, %v1831
        %v1837 = vunpack.c.l.s4 1983009808
        %v1838 = vunpack.c.0.s8 %v1837
        %v1839 = vlaneseq
        %v1840 = vshrl.u32 %v1839, 7
        %v1841 = vsub.s32 %v1838, %v1840
        %v1842 = vrot.slane %v1835, %v1841
        %v1844 = vadd.f32 %v1736, %v1842
        %v1845 = vld [vmem:[%s282 + $0xe] sm:$0x1]
        %v1846 = vld [vmem:[%s282 + $0x1e] sm:$0x1]
        %s1847 = scalar_lea.vmem %s290, 1792 [#allocation4]
        %v1848 = vld [vmem:[%s1847] sm:$0xff]
        %v1849 = vld [vmem:[%s1847 + $0x8] sm:$0xff]
        %v1850 = vld [vmem:[%s1847 + $0x10] sm:$0xff]
        %v1851 = vld [vmem:[%s1847 + $0x18] sm:$0xff]
        %v1852 = vld [vmem:[%s1847 + $0x20] sm:$0xff]
        %v1853 = vld [vmem:[%s1847 + $0x28] sm:$0xff]
        %v1854 = vld [vmem:[%s1847 + $0x30] sm:$0xff]
        %v1855 = vld [vmem:[%s1847 + $0x38] sm:$0xff]
        %v1856 = vld [vmem:[%s1847 + $0x40] sm:$0xff]
        %v1857 = vld [vmem:[%s1847 + $0x48] sm:$0xff]
        %v1858 = vld [vmem:[%s1847 + $0x50] sm:$0xff]
        %v1859 = vld [vmem:[%s1847 + $0x58] sm:$0xff]
        %v1860 = vld [vmem:[%s1847 + $0x60] sm:$0xff]
        %v1861 = vld [vmem:[%s1847 + $0x68] sm:$0xff]
        %v1862 = vld [vmem:[%s1847 + $0x70] sm:$0xff]
        %v1863 = vld [vmem:[%s1847 + $0x78] sm:$0xff]
        %v1866 = vrot.slane %v1846, 7
        %v1867 = vsel %vm353, %v1866, %v1845
        %v1868 = vsel %vm355, %v1867, 0
        %1870 = vmatprep.subr.mxu0 %v1849
        %1871 = vmatpush1.msra.mxu0 %v1848
        %1872 = vmatprep.subr.mxu0 %v1851
        %1873 = vmatpush1.msra.mxu0 %v1850
        %1874 = vmatprep.subr.mxu0 %v1853
        %1875 = vmatpush1.msra.mxu0 %v1852
        %1876 = vmatprep.subr.mxu0 %v1855
        %1877 = vmatpush1.msra.mxu0 %v1854
        %1878 = vmatprep.subr.mxu0 %v1857
        %1879 = vmatpush1.msra.mxu0 %v1856
        %1880 = vmatprep.subr.mxu0 %v1859
        %1881 = vmatpush1.msra.mxu0 %v1858
        %1882 = vmatprep.subr.mxu0 %v1861
        %1883 = vmatpush1.msra.mxu0 %v1860
        %1884 = vmatprep.subr.mxu0 %v1863
        %1885 = vmatpush1.msra.mxu0 %v1862
        %1886 = vmatprep.subr.mxu0 0.0
        %1887 = vmatpush1.msra.mxu0 0.0
        %1888 = vmatprep.subr.mxu0 0.0
        %1889 = vmatpush1.msra.mxu0 0.0
        %1890 = vmatprep.subr.mxu0 0.0
        %1891 = vmatpush1.msra.mxu0 0.0
        %1892 = vmatprep.subr.mxu0 0.0
        %1893 = vmatpush1.msra.mxu0 0.0
        %1894 = vmatprep.subr.mxu0 0.0
        %1895 = vmatpush1.msra.mxu0 0.0
        %1896 = vmatprep.subr.mxu0 0.0
        %1897 = vmatpush1.msra.mxu0 0.0
        %1898 = vmatprep.subr.mxu0 0.0
        %1899 = vmatpush1.msra.mxu0 0.0
        %1900 = vmatprep.subr.mxu0 0.0
        %1901 = vmatpush1.msra.mxu0 0.0
        %1902 = vmatprep.subr.mxu0 0.0
        %1903 = vmatpush1.msra.mxu0 0.0
        %1904 = vmatprep.subr.mxu0 0.0
        %1905 = vmatpush1.msra.mxu0 0.0
        %1906 = vmatprep.subr.mxu0 0.0
        %1907 = vmatpush1.msra.mxu0 0.0
        %1908 = vmatprep.subr.mxu0 0.0
        %1909 = vmatpush1.msra.mxu0 0.0
        %1910 = vmatprep.subr.mxu0 0.0
        %1911 = vmatpush1.msra.mxu0 0.0
        %1912 = vmatprep.subr.mxu0 0.0
        %1913 = vmatpush1.msra.mxu0 0.0
        %1914 = vmatprep.subr.mxu0 0.0
        %1915 = vmatpush1.msra.mxu0 0.0
        %1916 = vmatprep.subr.mxu0 0.0
        %1917 = vmatpush1.msra.mxu0 0.0
        %1918 = vmatprep.subr.mxu0 0.0
        %1919 = vmatpush1.msra.mxu0 0.0
        %1920 = vmatprep.subr.mxu0 0.0
        %1921 = vmatpush1.msra.mxu0 0.0
        %1922 = vmatprep.subr.mxu0 0.0
        %1923 = vmatpush1.msra.mxu0 0.0
        %1924 = vmatprep.subr.mxu0 0.0
        %1925 = vmatpush1.msra.mxu0 0.0
        %1926 = vmatprep.subr.mxu0 0.0
        %1927 = vmatpush1.msra.mxu0 0.0
        %1928 = vmatprep.subr.mxu0 0.0
        %1929 = vmatpush1.msra.mxu0 0.0
        %1930 = vmatprep.subr.mxu0 0.0
        %1931 = vmatpush1.msra.mxu0 0.0
        %1932 = vmatprep.subr.mxu0 0.0
        %1933 = vmatpush1.msra.mxu0 0.0
        %1934 = vmatprep.mubr.f32.mxu0 0.0
        %1935 = vmatmul.mubr.f32.gmra.mrb[0].mxu0 %v1868
        %v1936 = vpop.f32.mrb[0].mxu0
        %v1937 = vadd.f32 0.0, %v1936
        %v1938 = vpop.f32.mrb[0].mxu0
        %v1939 = vadd.f32 0.0, %v1938
        %1940 = vdwg.mxu0
        %v1943 = vcombine.low %v1937, %v1939
        %v1945 = vunpack.c.l.s4 1983009808
        %v1946 = vunpack.c.0.s8 %v1945
        %v1947 = vlaneseq
        %v1948 = vshrl.u32 %v1947, 7
        %v1949 = vsub.s32 %v1946, %v1948
        %v1950 = vrot.slane %v1943, %v1949
        %v1952 = vadd.f32 %v1844, %v1950
        %v1953 = vld [vmem:[%s282 + $0xf] sm:$0x1]
        %v1954 = vld [vmem:[%s282 + $0x1f] sm:$0x1]
        %s1955 = scalar_lea.vmem %s290, 1920 [#allocation4]
        %v1956 = vld [vmem:[%s1955] sm:$0xff]
        %v1957 = vld [vmem:[%s1955 + $0x8] sm:$0xff]
        %v1958 = vld [vmem:[%s1955 + $0x10] sm:$0xff]
        %v1959 = vld [vmem:[%s1955 + $0x18] sm:$0xff]
        %v1960 = vld [vmem:[%s1955 + $0x20] sm:$0xff]
        %v1961 = vld [vmem:[%s1955 + $0x28] sm:$0xff]
        %v1962 = vld [vmem:[%s1955 + $0x30] sm:$0xff]
        %v1963 = vld [vmem:[%s1955 + $0x38] sm:$0xff]
        %v1964 = vld [vmem:[%s1955 + $0x40] sm:$0xff]
        %v1965 = vld [vmem:[%s1955 + $0x48] sm:$0xff]
        %v1966 = vld [vmem:[%s1955 + $0x50] sm:$0xff]
        %v1967 = vld [vmem:[%s1955 + $0x58] sm:$0xff]
        %v1968 = vld [vmem:[%s1955 + $0x60] sm:$0xff]
        %v1969 = vld [vmem:[%s1955 + $0x68] sm:$0xff]
        %v1970 = vld [vmem:[%s1955 + $0x70] sm:$0xff]
        %v1971 = vld [vmem:[%s1955 + $0x78] sm:$0xff]
        %v1974 = vrot.slane %v1954, 7
        %v1975 = vsel %vm353, %v1974, %v1953
        %v1976 = vsel %vm355, %v1975, 0
        %1978 = vmatprep.subr.mxu0 %v1957
        %1979 = vmatpush1.msra.mxu0 %v1956
        %1980 = vmatprep.subr.mxu0 %v1959
        %1981 = vmatpush1.msra.mxu0 %v1958
        %1982 = vmatprep.subr.mxu0 %v1961
        %1983 = vmatpush1.msra.mxu0 %v1960
        %1984 = vmatprep.subr.mxu0 %v1963
        %1985 = vmatpush1.msra.mxu0 %v1962
        %1986 = vmatprep.subr.mxu0 %v1965
        %1987 = vmatpush1.msra.mxu0 %v1964
        %1988 = vmatprep.subr.mxu0 %v1967
        %1989 = vmatpush1.msra.mxu0 %v1966
        %1990 = vmatprep.subr.mxu0 %v1969
        %1991 = vmatpush1.msra.mxu0 %v1968
        %1992 = vmatprep.subr.mxu0 %v1971
        %1993 = vmatpush1.msra.mxu0 %v1970
        %1994 = vmatprep.subr.mxu0 0.0
        %1995 = vmatpush1.msra.mxu0 0.0
        %1996 = vmatprep.subr.mxu0 0.0
        %1997 = vmatpush1.msra.mxu0 0.0
        %1998 = vmatprep.subr.mxu0 0.0
        %1999 = vmatpush1.msra.mxu0 0.0
        %2000 = vmatprep.subr.mxu0 0.0
        %2001 = vmatpush1.msra.mxu0 0.0
        %2002 = vmatprep.subr.mxu0 0.0
        %2003 = vmatpush1.msra.mxu0 0.0
        %2004 = vmatprep.subr.mxu0 0.0
        %2005 = vmatpush1.msra.mxu0 0.0
        %2006 = vmatprep.subr.mxu0 0.0
        %2007 = vmatpush1.msra.mxu0 0.0
        %2008 = vmatprep.subr.mxu0 0.0
        %2009 = vmatpush1.msra.mxu0 0.0
        %2010 = vmatprep.subr.mxu0 0.0
        %2011 = vmatpush1.msra.mxu0 0.0
        %2012 = vmatprep.subr.mxu0 0.0
        %2013 = vmatpush1.msra.mxu0 0.0
        %2014 = vmatprep.subr.mxu0 0.0
        %2015 = vmatpush1.msra.mxu0 0.0
        %2016 = vmatprep.subr.mxu0 0.0
        %2017 = vmatpush1.msra.mxu0 0.0
        %2018 = vmatprep.subr.mxu0 0.0
        %2019 = vmatpush1.msra.mxu0 0.0
        %2020 = vmatprep.subr.mxu0 0.0
        %2021 = vmatpush1.msra.mxu0 0.0
        %2022 = vmatprep.subr.mxu0 0.0
        %2023 = vmatpush1.msra.mxu0 0.0
        %2024 = vmatprep.subr.mxu0 0.0
        %2025 = vmatpush1.msra.mxu0 0.0
        %2026 = vmatprep.subr.mxu0 0.0
        %2027 = vmatpush1.msra.mxu0 0.0
        %2028 = vmatprep.subr.mxu0 0.0
        %2029 = vmatpush1.msra.mxu0 0.0
        %2030 = vmatprep.subr.mxu0 0.0
        %2031 = vmatpush1.msra.mxu0 0.0
        %2032 = vmatprep.subr.mxu0 0.0
        %2033 = vmatpush1.msra.mxu0 0.0
        %2034 = vmatprep.subr.mxu0 0.0
        %2035 = vmatpush1.msra.mxu0 0.0
        %2036 = vmatprep.subr.mxu0 0.0
        %2037 = vmatpush1.msra.mxu0 0.0
        %2038 = vmatprep.subr.mxu0 0.0
        %2039 = vmatpush1.msra.mxu0 0.0
        %2040 = vmatprep.subr.mxu0 0.0
        %2041 = vmatpush1.msra.mxu0 0.0
        %2042 = vmatprep.mubr.f32.mxu0 0.0
        %2043 = vmatmul.mubr.f32.gmra.mrb[0].mxu0 %v1976
        %v2044 = vpop.f32.mrb[0].mxu0
        %v2045 = vadd.f32 0.0, %v2044
        %v2046 = vpop.f32.mrb[0].mxu0
        %v2047 = vadd.f32 0.0, %v2046
        %2048 = vdwg.mxu0
        %v2051 = vcombine.low %v2045, %v2047
        %v2053 = vunpack.c.l.s4 1983009808
        %v2054 = vunpack.c.0.s8 %v2053
        %v2055 = vlaneseq
        %v2056 = vshrl.u32 %v2055, 7
        %v2057 = vsub.s32 %v2054, %v2056
        %v2058 = vrot.slane %v2051, %v2057
        %v2060 = vadd.f32 %v1952, %v2058
        %2061 = vst [vmem:[#allocation2] sm:$0xf] %v2060
        %p2062 = scmp.eq.s32.totalorder %s21, 3
        // Predicated region
        $region95: #{base_conv_model.3} parent=73 // pred_check
          %p2063 = pneg %p2062
        $region96: #{base_conv_model.3} parent=73 // pred_check_branch
          %2065 = sbr.rel (%p2063) target = $region98
        $region97: #{base_conv_model.3} parent=73 // pred_region
          %v2066 = vld [vmem:[#allocation2] sm:$0xf]
          %v2067 = vld [vmem:[#allocation7] sm:$0x3]
          %v2069 = vlaneseq
          %v2070 = vshrl.u32 %v2069, 7
          %v2071 = vsub.s32 0, %v2070
          %v2072 = vrot.slane %v2067, %v2071
          %v2073 = vlaneseq
          %v2074 = vshrl.u32 %v2073, 7
          %v2075 = vsub.s32 1, %v2074
          %v2076 = vrot.slane %v2067, %v2075
          %v2077 = vcombine.low %v2072, %v2076
          %v2079 = vunpack.c.l.s4 1983009808
          %v2080 = vunpack.c.0.s8 %v2079
          %v2081 = vlaneseq
          %v2082 = vshrl.u32 %v2081, 7
          %v2083 = vsub.s32 %v2080, %v2082
          %v2084 = vrot.slane %v2077, %v2083
          %v2086 = vadd.f32 %v2066, %v2084
          %v2087 = vmul.f32 %v2086, 0.2
          %v2088 = vmax.f32 %v2086, %v2087
          %v2089 = vld [vmem:[%s3] sm:$0xff]
          %v2090 = vld [vmem:[%s3 + $0x8] sm:$0xff]
          %v2091 = vld [vmem:[%s3 + $0x10] sm:$0xff]
          %v2092 = vld [vmem:[%s3 + $0x18] sm:$0xff]
          %v2093 = vld [vmem:[%s3 + $0x20] sm:$0xff]
          %v2094 = vld [vmem:[%s3 + $0x28] sm:$0xff]
          %v2095 = vld [vmem:[%s3 + $0x30] sm:$0xff]
          %v2096 = vld [vmem:[%s3 + $0x38] sm:$0xff]
          %v2097 = vld [vmem:[%s3 + $0x40] sm:$0xff]
          %v2098 = vld [vmem:[%s3 + $0x48] sm:$0xff]
          %v2099 = vld [vmem:[%s3 + $0x50] sm:$0xff]
          %v2100 = vld [vmem:[%s3 + $0x58] sm:$0xff]
          %v2101 = vld [vmem:[%s3 + $0x60] sm:$0xff]
          %v2102 = vld [vmem:[%s3 + $0x68] sm:$0xff]
          %v2103 = vld [vmem:[%s3 + $0x70] sm:$0xff]
          %v2104 = vld [vmem:[%s3 + $0x78] sm:$0xff]
          %v2105 = vld [vmem:[%s3 + $0x80] sm:$0xff]
          %v2106 = vld [vmem:[%s3 + $0x88] sm:$0xff]
          %v2107 = vld [vmem:[%s3 + $0x90] sm:$0xff]
          %v2108 = vld [vmem:[%s3 + $0x98] sm:$0xff]
          %v2109 = vld [vmem:[%s3 + $0xa0] sm:$0xff]
          %v2110 = vld [vmem:[%s3 + $0xa8] sm:$0xff]
          %v2111 = vld [vmem:[%s3 + $0xb0] sm:$0xff]
          %v2112 = vld [vmem:[%s3 + $0xb8] sm:$0xff]
          %v2113 = vld [vmem:[%s3 + $0xc0] sm:$0xff]
          %v2114 = vld [vmem:[%s3 + $0xc8] sm:$0xff]
          %v2115 = vld [vmem:[%s3 + $0xd0] sm:$0xff]
          %v2116 = vld [vmem:[%s3 + $0xd8] sm:$0xff]
          %v2117 = vld [vmem:[%s3 + $0xe0] sm:$0xff]
          %v2118 = vld [vmem:[%s3 + $0xe8] sm:$0xff]
          %v2119 = vld [vmem:[%s3 + $0xf0] sm:$0xff]
          %v2120 = vld [vmem:[%s3 + $0xf8] sm:$0xff]
          %v2121 = vld [vmem:[#allocation9] sm:$0x1]
          %v2123 = vlaneseq
          %v2124 = vshrl.u32 %v2123, 7
          %v2125 = vsub.s32 0, %v2124
          %v2126 = vrot.slane %v2121, %v2125
          %v2130 = vunpack.c.l.s4 1983009808
          %v2131 = vunpack.c.0.s8 %v2130
          %v2132 = vlaneseq
          %v2133 = vshrl.u32 %v2132, 7
          %v2134 = vsub.s32 %v2131, %v2133
          %v2135 = vrot.slane %v2088, %v2134
          %v2136 = vcombine.high %v2135, %v2135
          %2139 = vmatprep.subr.mxu0 0.0
          %2140 = vmatpush1.msra.mxu0 %v2089
          %2141 = vmatprep.subr.mxu0 0.0
          %2142 = vmatpush1.msra.mxu0 %v2090
          %2143 = vmatprep.subr.mxu0 0.0
          %2144 = vmatpush1.msra.mxu0 %v2091
          %2145 = vmatprep.subr.mxu0 0.0
          %2146 = vmatpush1.msra.mxu0 %v2092
          %2147 = vmatprep.subr.mxu0 0.0
          %2148 = vmatpush1.msra.mxu0 %v2093
          %2149 = vmatprep.subr.mxu0 0.0
          %2150 = vmatpush1.msra.mxu0 %v2094
          %2151 = vmatprep.subr.mxu0 0.0
          %2152 = vmatpush1.msra.mxu0 %v2095
          %2153 = vmatprep.subr.mxu0 0.0
          %2154 = vmatpush1.msra.mxu0 %v2096
          %2155 = vmatprep.subr.mxu0 0.0
          %2156 = vmatpush1.msra.mxu0 %v2097
          %2157 = vmatprep.subr.mxu0 0.0
          %2158 = vmatpush1.msra.mxu0 %v2098
          %2159 = vmatprep.subr.mxu0 0.0
          %2160 = vmatpush1.msra.mxu0 %v2099
          %2161 = vmatprep.subr.mxu0 0.0
          %2162 = vmatpush1.msra.mxu0 %v2100
          %2163 = vmatprep.subr.mxu0 0.0
          %2164 = vmatpush1.msra.mxu0 %v2101
          %2165 = vmatprep.subr.mxu0 0.0
          %2166 = vmatpush1.msra.mxu0 %v2102
          %2167 = vmatprep.subr.mxu0 0.0
          %2168 = vmatpush1.msra.mxu0 %v2103
          %2169 = vmatprep.subr.mxu0 0.0
          %2170 = vmatpush1.msra.mxu0 %v2104
          %2171 = vmatprep.subr.mxu0 0.0
          %2172 = vmatpush1.msra.mxu0 %v2105
          %2173 = vmatprep.subr.mxu0 0.0
          %2174 = vmatpush1.msra.mxu0 %v2106
          %2175 = vmatprep.subr.mxu0 0.0
          %2176 = vmatpush1.msra.mxu0 %v2107
          %2177 = vmatprep.subr.mxu0 0.0
          %2178 = vmatpush1.msra.mxu0 %v2108
          %2179 = vmatprep.subr.mxu0 0.0
          %2180 = vmatpush1.msra.mxu0 %v2109
          %2181 = vmatprep.subr.mxu0 0.0
          %2182 = vmatpush1.msra.mxu0 %v2110
          %2183 = vmatprep.subr.mxu0 0.0
          %2184 = vmatpush1.msra.mxu0 %v2111
          %2185 = vmatprep.subr.mxu0 0.0
          %2186 = vmatpush1.msra.mxu0 %v2112
          %2187 = vmatprep.subr.mxu0 0.0
          %2188 = vmatpush1.msra.mxu0 %v2113
          %2189 = vmatprep.subr.mxu0 0.0
          %2190 = vmatpush1.msra.mxu0 %v2114
          %2191 = vmatprep.subr.mxu0 0.0
          %2192 = vmatpush1.msra.mxu0 %v2115
          %2193 = vmatprep.subr.mxu0 0.0
          %2194 = vmatpush1.msra.mxu0 %v2116
          %2195 = vmatprep.subr.mxu0 0.0
          %2196 = vmatpush1.msra.mxu0 %v2117
          %2197 = vmatprep.subr.mxu0 0.0
          %2198 = vmatpush1.msra.mxu0 %v2118
          %2199 = vmatprep.subr.mxu0 0.0
          %2200 = vmatpush1.msra.mxu0 %v2119
          %2201 = vmatprep.subr.mxu0 0.0
          %2202 = vmatpush1.msra.mxu0 %v2120
          %2203 = vmatprep.mubr.f32.mxu0 %v2136
          %2204 = vmatmul.mubr.f32.gmra.mrb[0].mxu0 %v2135
          %v2205 = vpop.f32.mrb[0].mxu0
          %v2206 = vadd.f32 %v2126, %v2205
          %v2207 = vpop.f32.mrb[0].mxu0
          %2208 = vdwg.mxu0
          %vm2209 = vcmask 74752
          %2210 = vst.msk [vmem:[#allocation10] sm:$0x3] %vm2209, %v2206
        $region98: #{base_conv_model.3} parent=73 // pred_fallthru
          _
        // Predicated region
        $region99: #{base_conv_model.3} parent=73 // pred_check
          %p2211 = pneg %p149
        $region100: #{base_conv_model.3} parent=73 // pred_check_branch
          %2213 = sbr.rel (%p2211) target = $region102
        $region101: #{base_conv_model.3} parent=73 // pred_region
          %s2215 = ssub.s32 32, 32
          %2216 = vsyncadd [#allocation6], %s2215
          %s2218 = sshll.u32 [#allocation10], 4
          %s2219 = int_to_ptr.vmem [resolvable:$true] %s2218
          %2221 = dma.vmem_to_hbm [thread:$0]  %s2219, 32, %s5, [#allocation6]
        $region102: #{base_conv_model.3} parent=73 // pred_fallthru
          _
        // Predicated region
        $region103: #{base_conv_model.3} parent=73 // pred_check
          %p2222 = pneg %p149
        $region104: #{base_conv_model.3} parent=73 // pred_check_branch
          %2224 = sbr.rel (%p2222) target = $region106
        $region105: #{base_conv_model.3} parent=73 // pred_region
          %2225 = dma.done [#allocation6], 32
        $region106: #{base_conv_model.3} parent=73 // pred_fallthru
          _
      $region74: #{base_conv_model.3} parent=5 // pred_fallthru
        _
      %p2226 = scmp.le.s32.totalorder 2, %s16
      // Predicated region
      $region107: #{base_conv_model.3} parent=5 // pred_check
        %p2227 = pneg %p2226
      $region108: #{base_conv_model.3} parent=5 // pred_check_branch
        %2229 = sbr.rel (%p2227) target = $region110
      $region109: #{base_conv_model.3} parent=5 // pred_region
        %s2230 = ssub.s32 %s16, 2
      $region110: #{base_conv_model.3} parent=5 // pred_fallthru
        _
    $region6: #{base_conv_model.3} parent=1 // loop_footer
      %s20 = sadd.s32 1, %s16
    $region7: #{base_conv_model.3} parent=1 // loop_footer_branch
      %15 = sbr.rel target = $region3
    $region8: #{base_conv_model.3} parent=1 // loop_exit
      _
    %2231 = vsyncpa [#allocation5], 1
    %s2232 = scalar_lea.sflag [#allocation5], 1
    %2233 = vsyncpa %s2232, 1
    %2234 = vsyncpa [#allocation8], 1
    %2235 = vsyncpa [#allocation6], 1
    %s2236 = scalar_lea.sflag [#allocation6], 1
    %2237 = vsyncpa %s2236, 1

</llo_original>
